<compile_context>
chip_gen: v7x
topology: tpu7x:2x2x1
jax: 0.10.0
libtpu: 0.0.40
codegen_flags: <defaults>
</compile_context>

<pallas_src>
import functools

import jax
import jax.numpy as jnp
from jax.experimental import pallas as pl
from jax.experimental.pallas import tpu as pltpu


# dot_general dimension numbers (splash-attention style)
NT_DIMS = (((1,), (1,)), ((), ()))   # a @ b.T   (contract last dims)
TN_DIMS = (((0,), (0,)), ((), ()))   # a.T @ b   (contract first dims)


# ----------------------------------------------------------------------------
# Kernel 1: softmax-over-classes entropy map  (get_region_index_entropy)
# ----------------------------------------------------------------------------
def entropy_kernel(logits_ref, ent_ref, *, ncls, batch):
    # logits block: (B*NCLS, T)  ->  entropy block: (B, T)
    x = logits_ref[...].astype(jnp.float32)
    for b in range(batch):                                   # static, B small
        lg = x[b * ncls:(b + 1) * ncls, :]                   # (NCLS, T)
        m = jnp.max(lg, axis=0, keepdims=True)
        z = lg - m
        e = jnp.exp(z)
        s = jnp.sum(e, axis=0, keepdims=True)
        num = jnp.sum(e * z, axis=0, keepdims=True)
        # -sum(p*log p) = log(s) - sum(e*z)/s   (no per-class log / divide)
        ent = jnp.log(s) - num * pl.reciprocal(s, approx=True)   # (1, T)
        ent_ref[pl.ds(b, 1), :] = ent


def _pick_hw_tile(hw):
    # Lane-multiple tile, >=2 blocks when possible (v7x dual TC, VMEM bound).
    for t in (8192, 4096, 2048, 1024, 512, 256, 128):
        if hw % t == 0 and hw // t >= 2:
            return t
    return hw


def entropy_map_pallas(logits_2d, batch, ncls):
    """logits_2d: (B*NCLS, HW) -> entropy (B, HW)."""
    BN, HW = logits_2d.shape
    hw_tile = _pick_hw_tile(HW)
    kernel = functools.partial(entropy_kernel, ncls=ncls, batch=batch)
    return pl.pallas_call(
        kernel,
        out_shape=jax.ShapeDtypeStruct((batch, HW), jnp.float32),
        grid=(HW // hw_tile,),
        in_specs=[pl.BlockSpec((BN, hw_tile), lambda t: (0, t))],
        out_specs=pl.BlockSpec((batch, hw_tile), lambda t: (0, t)),
        compiler_params=pltpu.CompilerParams(dimension_semantics=("parallel",)),
    )(logits_2d)


# ----------------------------------------------------------------------------
# Kernel 2: fused gather + CrossAttention + scatter (per batch element)
# ----------------------------------------------------------------------------
def fused_attn_kernel(x_ref, qidx_ref, kidx_ref,
                      wqkv_ref, wo_ref, w1_ref, w2_ref, vec_ref, b1_ref,
                      out_ref, *, num_heads):
    x = x_ref[0].astype(jnp.float32)                  # (C, HW), lane-dense
    C, HW = x.shape
    head_dim = C // num_heads
    scale = 1.0 / float(head_dim) ** 0.5

    q_idx = qidx_ref[0]                               # (Pq, 1) int32
    k_idx = kidx_ref[0]                               # (Pk, 1) int32
    Pq = q_idx.shape[0]
    Pk = k_idx.shape[0]

    # --- point_sample gather (and the permutes) via one-hot MXU matmuls ----
    oh_q = (jax.lax.broadcasted_iota(jnp.int32, (Pq, HW), 1)
            == q_idx).astype(jnp.float32)             # (Pq, HW)
    oh_k = (jax.lax.broadcasted_iota(jnp.int32, (Pk, HW), 1)
            == k_idx).astype(jnp.float32)             # (Pk, HW)
    q = jax.lax.dot_general(oh_q, x, NT_DIMS,
                            preferred_element_type=jnp.float32)   # (Pq, C)
    kv = jax.lax.dot_general(oh_k, x, NT_DIMS,
                             preferred_element_type=jnp.float32)  # (Pk, C)

    # --- packed small vectors: [ln1_g, ln1_b, ln2_g, ln2_b, bo, b2] ---------
    ln1_g = vec_ref[pl.ds(0, 1), :]
    ln1_b = vec_ref[pl.ds(1, 1), :]
    ln2_g = vec_ref[pl.ds(2, 1), :]
    ln2_b = vec_ref[pl.ds(3, 1), :]
    bo = vec_ref[pl.ds(4, 1), :]
    b2 = vec_ref[pl.ds(5, 1), :]

    def layernorm(v, g, b):
        mu = jnp.mean(v, axis=-1, keepdims=True)
        var = jnp.mean((v - mu) ** 2, axis=-1, keepdims=True)
        return (v - mu) * jax.lax.rsqrt(var + 1e-5) * g + b

    # TODO(synk): kv stream fed to Wk/Wv un-normalized (CrossAttention source
    # not provided); verify against the real PyTorch module.
    qn = layernorm(q, ln1_g, ln1_b)

    # --- fused projections: 1 matmul for Q, 1 for K|V (bf16 in, f32 acc) ----
    wqkv = wqkv_ref[...]                                           # bf16 (C, 3C)
    Q = jnp.dot(qn.astype(jnp.bfloat16), wqkv[:, :C],
                preferred_element_type=jnp.float32)                # (Pq, C)
    KV = jnp.dot(kv.astype(jnp.bfloat16), wqkv[:, C:],
                 preferred_element_type=jnp.float32)               # (Pk, 2C)
    K = KV[:, :C]
    V = KV[:, C:]

    # --- per-head scores / context (tiny) -----------------------------------
    ctx_parts = []
    for h in range(num_heads):
        lo = h * head_dim
        Qh = Q[:, lo:lo + head_dim]
        Kh = K[:, lo:lo + head_dim]
        Vh = V[:, lo:lo + head_dim]
        s = jax.lax.dot_general(Qh.astype(jnp.bfloat16), Kh.astype(jnp.bfloat16),
                                NT_DIMS,
                                preferred_element_type=jnp.float32) * scale
        s = s - jnp.max(s, axis=-1, keepdims=True)
        e = jnp.exp(s)
        p = e * pl.reciprocal(jnp.sum(e, axis=-1, keepdims=True), approx=True)
        ctx_parts.append(jnp.dot(p.astype(jnp.bfloat16), Vh.astype(jnp.bfloat16),
                                 preferred_element_type=jnp.float32))
    ctx = jnp.concatenate(ctx_parts, axis=-1)                      # (Pq, C)
    attn = jnp.dot(ctx.astype(jnp.bfloat16), wo_ref[...],
                   preferred_element_type=jnp.float32) + bo

    # --- residual + MLP ------------------------------------------------------
    x1 = q + attn
    xn = layernorm(x1, ln2_g, ln2_b)
    h1 = jnp.dot(xn.astype(jnp.bfloat16), w1_ref[...],
                 preferred_element_type=jnp.float32) + b1_ref[...]
    # TODO(synk): PyTorch nn.GELU default is exact erf; tanh approximation is
    # used here for robust Mosaic lowering.
    h1 = jax.nn.gelu(h1, approximate=True)
    h2 = jnp.dot(h1.astype(jnp.bfloat16), w2_ref[...],
                 preferred_element_type=jnp.float32) + b2
    y = x1 + h2                                                    # (Pq, C)

    # --- scatter attended features back into the (C, HW) map ----------------
    sel = jnp.sum(oh_q, axis=0, keepdims=True)                     # (1, HW)
    scat = jax.lax.dot_general(y, oh_q, TN_DIMS,
                               preferred_element_type=jnp.float32)  # (C, HW)
    out_ref[0] = (x * (1.0 - sel) + scat).astype(out_ref.dtype)


def fused_region_attention_pallas(x_flat, region_index, edge_index, params,
                                  num_heads):
    """x_flat: (B, C, HW); indices: (B, Pq)/(B, Pk) -> scattered map (B, C, HW)."""
    B, C, HW = x_flat.shape
    Pq = region_index.shape[1]
    Pk = edge_index.shape[1]
    q_idx = region_index[..., None].astype(jnp.int32)     # (B, Pq, 1)
    k_idx = edge_index[..., None].astype(jnp.int32)       # (B, Pk, 1)

    weights = [params[n] for n in ("wqkv", "wo", "w1", "w2", "vec", "b1")]

    def full_spec(a):
        nd = a.ndim
        return pl.BlockSpec(a.shape, lambda b, _nd=nd: (0,) * _nd)

    in_specs = ([pl.BlockSpec((1, C, HW), lambda b: (b, 0, 0)),
                 pl.BlockSpec((1, Pq, 1), lambda b: (b, 0, 0)),
                 pl.BlockSpec((1, Pk, 1), lambda b: (b, 0, 0))]
                + [full_spec(w) for w in weights])

    kernel = functools.partial(fused_attn_kernel, num_heads=num_heads)
    return pl.pallas_call(
        kernel,
        out_shape=jax.ShapeDtypeStruct((B, C, HW), x_flat.dtype),
        grid=(B,),
        in_specs=in_specs,
        out_specs=pl.BlockSpec((1, C, HW), lambda b: (b, 0, 0)),
        compiler_params=pltpu.CompilerParams(dimension_semantics=("parallel",)),
    )(x_flat, q_idx, k_idx, *weights)


# ----------------------------------------------------------------------------
# RegionPointProcess forward
# ----------------------------------------------------------------------------
def region_point_process(x, x_logits, edge_prediction, params, *,
                         region_num_points, edge_num_points, num_heads):
    B, C, H, W = x.shape
    HW = H * W
    NCLS = x_logits.shape[1]

    # entropy of softmax(x_logits, dim=1) (Pallas) + top-k selection (glue)
    ent = entropy_map_pallas(x_logits.reshape(B * NCLS, HW), B, NCLS)  # (B, HW)
    region_index = jax.lax.top_k(ent, region_num_points)[1]           # (B, Pq)
    edge_index = jax.lax.top_k(edge_prediction.reshape(B, HW),
                               edge_num_points)[1]                     # (B, Pk)

    # fused: gather (point_sample) + cross attention + scatter (Pallas)
    x_flat = x.reshape(B, C, HW)
    final = fused_region_attention_pallas(x_flat, region_index, edge_index,
                                          params, num_heads)           # (B, C, HW)
    return final.reshape(B, C, H, W)


# ----------------------------------------------------------------------------
# Deterministic parameter init (synthetic; shapes from __init__)
# ----------------------------------------------------------------------------
def init_params(key, dim, num_heads, mlp_ratio):
    del num_heads  # head split happens inside the kernel
    hidden = dim * mlp_ratio
    k = jax.random.split(key, 6)
    s = 0.02
    wq = s * jax.random.normal(k[0], (dim, dim), jnp.float32)
    wk = s * jax.random.normal(k[1], (dim, dim), jnp.float32)
    wv = s * jax.random.normal(k[2], (dim, dim), jnp.float32)
    wo = s * jax.random.normal(k[3], (dim, dim), jnp.float32)
    w1 = s * jax.random.normal(k[4], (dim, hidden), jnp.float32)
    w2 = s * jax.random.normal(k[5], (hidden, dim), jnp.float32)
    # packed small vectors: [ln1_g, ln1_b, ln2_g, ln2_b, bo, b2]
    vec = jnp.stack([jnp.ones((dim,)), jnp.zeros((dim,)),
                     jnp.ones((dim,)), jnp.zeros((dim,)),
                     jnp.zeros((dim,)), jnp.zeros((dim,))]).astype(jnp.float32)
    return dict(
        wqkv=jnp.concatenate([wq, wk, wv], axis=1).astype(jnp.bfloat16),
        wo=wo.astype(jnp.bfloat16),
        w1=w1.astype(jnp.bfloat16),
        w2=w2.astype(jnp.bfloat16),
        vec=vec,                                   # (6, dim) f32
        b1=jnp.zeros((1, hidden), jnp.float32),
    )


if __name__ == "__main__":
    B, C, H, W = 2, 32, 16, 16          # dim = C = 32
    NCLS = 4                            # classes in x_logits (softmax dim)
    REGION_POINTS = 64
    EDGE_POINTS = 32
    NUM_HEADS = 4
    MLP_RATIO = 2

    key = jax.random.PRNGKey(0)
    kx, kl, ke, kp = jax.random.split(key, 4)
    x = jax.random.normal(kx, (B, C, H, W), jnp.float32)
    x_logits = jax.random.normal(kl, (B, NCLS, H, W), jnp.float32)
    edge_prediction = jax.random.normal(ke, (B, 1, H, W), jnp.float32)
    params = init_params(kp, dim=C, num_heads=NUM_HEADS, mlp_ratio=MLP_RATIO)

    fwd = jax.jit(functools.partial(
        region_point_process,
        region_num_points=REGION_POINTS,
        edge_num_points=EDGE_POINTS,
        num_heads=NUM_HEADS))
    out = jax.block_until_ready(fwd(x, x_logits, edge_prediction, params))
    assert out.shape == (B, C, H, W), out.shape
    assert jnp.isfinite(out).all()
    print("KERNEL_OK")
</pallas_src>

<mosaic_0001>
module attributes {stable_mosaic.version = 11 : i64} {
  func.func @entropy_kernel(%arg0: i32, %arg1: memref<8x128xf32, #tpu.memory_space<vmem>>, %arg2: memref<2x128xf32, #tpu.memory_space<vmem>>) attributes {dimension_semantics = [#tpu.dimension_semantics<parallel>], iteration_bounds = array<i64: 2>, scalar_prefetch = 0 : i64, scratch_operands = 0 : i64, tpu.core_type = #tpu.core_type<tc>, window_params = [{transform_indices = @transform_0, window_bounds = array<i64: 8, 128>}, {transform_indices = @transform_1, window_bounds = array<i64: 2, 128>}]} {
    %c0 = arith.constant 0 : index
    %c0_0 = arith.constant 0 : index
    %0 = vector.load %arg1[%c0, %c0_0] : memref<8x128xf32, #tpu.memory_space<vmem>>, vector<8x128xf32>
    %1 = vector.extract_strided_slice %0 {offsets = [0, 0], sizes = [4, 128], strides = [1, 1]} : vector<8x128xf32> to vector<4x128xf32>
    %cst = arith.constant dense<0xFF800000> : vector<128xf32>
    %2 = vector.multi_reduction <maximumf>, %1, %cst [0] : vector<4x128xf32> to vector<128xf32>
    %3 = vector.shape_cast %2 : vector<128xf32> to vector<1x128xf32>
    %4 = vector.broadcast %3 : vector<1x128xf32> to vector<4x128xf32>
    %5 = arith.subf %1, %4 : vector<4x128xf32>
    %6 = math.exp %5 : vector<4x128xf32>
    %cst_1 = arith.constant dense<0.000000e+00> : vector<128xf32>
    %7 = vector.multi_reduction <add>, %6, %cst_1 [0] : vector<4x128xf32> to vector<128xf32>
    %8 = vector.shape_cast %7 : vector<128xf32> to vector<1x128xf32>
    %9 = arith.mulf %6, %5 : vector<4x128xf32>
    %cst_2 = arith.constant dense<0.000000e+00> : vector<128xf32>
    %10 = vector.multi_reduction <add>, %9, %cst_2 [0] : vector<4x128xf32> to vector<128xf32>
    %11 = vector.shape_cast %10 : vector<128xf32> to vector<1x128xf32>
    %12 = math.log %8 : vector<1x128xf32>
    %13 = tpu.reciprocal %8 {approx = true} : vector<1x128xf32> -> vector<1x128xf32>
    %14 = arith.mulf %11, %13 : vector<1x128xf32>
    %15 = arith.subf %12, %14 : vector<1x128xf32>
    %c0_3 = arith.constant 0 : index
    %c0_4 = arith.constant 0 : index
    %16 = vector.load %arg2[%c0_3, %c0_4] : memref<2x128xf32, #tpu.memory_space<vmem>>, vector<1x128xf32>
    tpu.vector_store %arg2[%c0_3, %c0_4], %15 {strides = array<i32>} : memref<2x128xf32, #tpu.memory_space<vmem>>, vector<1x128xf32>,
    %17 = vector.extract_strided_slice %0 {offsets = [4, 0], sizes = [4, 128], strides = [1, 1]} : vector<8x128xf32> to vector<4x128xf32>
    %cst_5 = arith.constant dense<0xFF800000> : vector<128xf32>
    %18 = vector.multi_reduction <maximumf>, %17, %cst_5 [0] : vector<4x128xf32> to vector<128xf32>
    %19 = vector.shape_cast %18 : vector<128xf32> to vector<1x128xf32>
    %20 = vector.broadcast %19 : vector<1x128xf32> to vector<4x128xf32>
    %21 = arith.subf %17, %20 : vector<4x128xf32>
    %22 = math.exp %21 : vector<4x128xf32>
    %cst_6 = arith.constant dense<0.000000e+00> : vector<128xf32>
    %23 = vector.multi_reduction <add>, %22, %cst_6 [0] : vector<4x128xf32> to vector<128xf32>
    %24 = vector.shape_cast %23 : vector<128xf32> to vector<1x128xf32>
    %25 = arith.mulf %22, %21 : vector<4x128xf32>
    %cst_7 = arith.constant dense<0.000000e+00> : vector<128xf32>
    %26 = vector.multi_reduction <add>, %25, %cst_7 [0] : vector<4x128xf32> to vector<128xf32>
    %27 = vector.shape_cast %26 : vector<128xf32> to vector<1x128xf32>
    %28 = math.log %24 : vector<1x128xf32>
    %29 = tpu.reciprocal %24 {approx = true} : vector<1x128xf32> -> vector<1x128xf32>
    %30 = arith.mulf %27, %29 : vector<1x128xf32>
    %31 = arith.subf %28, %30 : vector<1x128xf32>
    %c1 = arith.constant 1 : index
    %c0_8 = arith.constant 0 : index
    %32 = vector.load %arg2[%c1, %c0_8] : memref<2x128xf32, #tpu.memory_space<vmem>>, vector<1x128xf32>
    tpu.vector_store %arg2[%c1, %c0_8], %31 {strides = array<i32>} : memref<2x128xf32, #tpu.memory_space<vmem>>, vector<1x128xf32>,
    return
  }
  func.func @transform_0(%arg0: i32) -> (i32, i32) {
    %c0_i32 = arith.constant 0 : i32
    %c0_i32_0 = arith.constant 0 : i32
    return %c0_i32, %arg0 : i32, i32
  }
  func.func @transform_1(%arg0: i32) -> (i32, i32) {
    %c0_i32 = arith.constant 0 : i32
    %c0_i32_0 = arith.constant 0 : i32
    return %c0_i32, %arg0 : i32, i32
  }
}

module attributes {stable_mosaic.version = 11 : i64} {
  func.func @fused_attn_kernel(%arg0: i32, %arg1: memref<1x32x256xf32, #tpu.memory_space<vmem>>, %arg2: memref<1x64x1xi32, #tpu.memory_space<vmem>>, %arg3: memref<1x32x1xi32, #tpu.memory_space<vmem>>, %arg4: memref<32x96xbf16, #tpu.memory_space<vmem>>, %arg5: memref<32x32xbf16, #tpu.memory_space<vmem>>, %arg6: memref<32x64xbf16, #tpu.memory_space<vmem>>, %arg7: memref<64x32xbf16, #tpu.memory_space<vmem>>, %arg8: memref<6x32xf32, #tpu.memory_space<vmem>>, %arg9: memref<1x64xf32, #tpu.memory_space<vmem>>, %arg10: memref<1x32x256xf32, #tpu.memory_space<vmem>>) attributes {dimension_semantics = [#tpu.dimension_semantics<parallel>], iteration_bounds = array<i64: 2>, scalar_prefetch = 0 : i64, scratch_operands = 0 : i64, tpu.core_type = #tpu.core_type<tc>, window_params = [{transform_indices = @transform_0, window_bounds = array<i64: 1, 32, 256>}, {transform_indices = @transform_1, window_bounds = array<i64: 1, 64, 1>}, {transform_indices = @transform_2, window_bounds = array<i64: 1, 32, 1>}, {pipeline_mode = #tpu.pipeline_mode<synchronous>, transform_indices = @transform_3, window_bounds = array<i64: 32, 96>}, {pipeline_mode = #tpu.pipeline_mode<synchronous>, transform_indices = @transform_4, window_bounds = array<i64: 32, 32>}, {pipeline_mode = #tpu.pipeline_mode<synchronous>, transform_indices = @transform_5, window_bounds = array<i64: 32, 64>}, {pipeline_mode = #tpu.pipeline_mode<synchronous>, transform_indices = @transform_6, window_bounds = array<i64: 64, 32>}, {pipeline_mode = #tpu.pipeline_mode<synchronous>, transform_indices = @transform_7, window_bounds = array<i64: 6, 32>}, {pipeline_mode = #tpu.pipeline_mode<synchronous>, transform_indices = @transform_8, window_bounds = array<i64: 1, 64>}, {transform_indices = @transform_9, window_bounds = array<i64: 1, 32, 256>}]} {
    %c0 = arith.constant 0 : index
    %c0_0 = arith.constant 0 : index
    %c0_1 = arith.constant 0 : index
    %0 = vector.load %arg1[%c0, %c0_0, %c0_1] : memref<1x32x256xf32, #tpu.memory_space<vmem>>, vector<1x32x256xf32>
    %1 = vector.shape_cast %0 : vector<1x32x256xf32> to vector<32x256xf32>
    %c0_2 = arith.constant 0 : index
    %c0_3 = arith.constant 0 : index
    %c0_4 = arith.constant 0 : index
    %2 = vector.load %arg2[%c0_2, %c0_3, %c0_4] : memref<1x64x1xi32, #tpu.memory_space<vmem>>, vector<1x64x1xi32>
    %3 = vector.shape_cast %2 : vector<1x64x1xi32> to vector<64x1xi32>
    %c0_5 = arith.constant 0 : index
    %c0_6 = arith.constant 0 : index
    %c0_7 = arith.constant 0 : index
    %4 = vector.load %arg3[%c0_5, %c0_6, %c0_7] : memref<1x32x1xi32, #tpu.memory_space<vmem>>, vector<1x32x1xi32>
    %5 = vector.shape_cast %4 : vector<1x32x1xi32> to vector<32x1xi32>
    %6 = tpu.iota {dimensions = array<i32: 1>} : vector<64x256xi32>
    %7 = vector.broadcast %3 : vector<64x1xi32> to vector<64x256xi32>
    %8 = arith.cmpi eq, %6, %7 : vector<64x256xi32>
    %9 = arith.extui %8 : vector<64x256xi1> to vector<64x256xi32>
    %10 = arith.sitofp %9 : vector<64x256xi32> to vector<64x256xf32>
    %11 = tpu.iota {dimensions = array<i32: 1>} : vector<32x256xi32>
    %12 = vector.broadcast %5 : vector<32x1xi32> to vector<32x256xi32>
    %13 = arith.cmpi eq, %11, %12 : vector<32x256xi32>
    %14 = arith.extui %13 : vector<32x256xi1> to vector<32x256xi32>
    %15 = arith.sitofp %14 : vector<32x256xi32> to vector<32x256xf32>
    %cst = arith.constant dense<0.000000e+00> : vector<64x32xf32>
    %16 = tpu.matmul %10, %1, %cst {dimension_numbers = #tpu.dot_dimension_numbers<[1], [1], [0], [0], [0, 0, 1, 0], [], []>} : vector<64x256xf32>, vector<32x256xf32>, vector<64x32xf32> -> vector<64x32xf32>
    %cst_8 = arith.constant dense<0.000000e+00> : vector<32x32xf32>
    %17 = tpu.matmul %15, %1, %cst_8 {dimension_numbers = #tpu.dot_dimension_numbers<[1], [1], [0], [0], [0, 0, 1, 0], [], []>} : vector<32x256xf32>, vector<32x256xf32>, vector<32x32xf32> -> vector<32x32xf32>
    %c0_9 = arith.constant 0 : index
    %c0_10 = arith.constant 0 : index
    %18 = vector.load %arg8[%c0_9, %c0_10] : memref<6x32xf32, #tpu.memory_space<vmem>>, vector<1x32xf32>
    %c1 = arith.constant 1 : index
    %c0_11 = arith.constant 0 : index
    %19 = vector.load %arg8[%c1, %c0_11] : memref<6x32xf32, #tpu.memory_space<vmem>>, vector<1x32xf32>
    %c2 = arith.constant 2 : index
    %c0_12 = arith.constant 0 : index
    %20 = vector.load %arg8[%c2, %c0_12] : memref<6x32xf32, #tpu.memory_space<vmem>>, vector<1x32xf32>
    %c3 = arith.constant 3 : index
    %c0_13 = arith.constant 0 : index
    %21 = vector.load %arg8[%c3, %c0_13] : memref<6x32xf32, #tpu.memory_space<vmem>>, vector<1x32xf32>
    %c4 = arith.constant 4 : index
    %c0_14 = arith.constant 0 : index
    %22 = vector.load %arg8[%c4, %c0_14] : memref<6x32xf32, #tpu.memory_space<vmem>>, vector<1x32xf32>
    %c5 = arith.constant 5 : index
    %c0_15 = arith.constant 0 : index
    %23 = vector.load %arg8[%c5, %c0_15] : memref<6x32xf32, #tpu.memory_space<vmem>>, vector<1x32xf32>
    %cst_16 = arith.constant dense<0.000000e+00> : vector<64xf32>
    %24 = vector.multi_reduction <add>, %16, %cst_16 [1] : vector<64x32xf32> to vector<64xf32>
    %25 = vector.shape_cast %24 : vector<64xf32> to vector<64x1xf32>
    %cst_17 = arith.constant 3.200000e+01 : f32
    %26 = vector.broadcast %cst_17 : f32 to vector<64x1xf32>
    %27 = arith.divf %25, %26 : vector<64x1xf32>
    %28 = vector.broadcast %27 : vector<64x1xf32> to vector<64x32xf32>
    %29 = arith.subf %16, %28 : vector<64x32xf32>
    %30 = arith.mulf %29, %29 : vector<64x32xf32>
    %cst_18 = arith.constant dense<0.000000e+00> : vector<64xf32>
    %31 = vector.multi_reduction <add>, %30, %cst_18 [1] : vector<64x32xf32> to vector<64xf32>
    %32 = vector.shape_cast %31 : vector<64xf32> to vector<64x1xf32>
    %cst_19 = arith.constant 3.200000e+01 : f32
    %33 = vector.broadcast %cst_19 : f32 to vector<64x1xf32>
    %34 = arith.divf %32, %33 : vector<64x1xf32>
    %35 = vector.broadcast %27 : vector<64x1xf32> to vector<64x32xf32>
    %36 = arith.subf %16, %35 : vector<64x32xf32>
    %cst_20 = arith.constant 9.99999974E-6 : f32
    %37 = vector.broadcast %cst_20 : f32 to vector<64x1xf32>
    %38 = arith.addf %34, %37 : vector<64x1xf32>
    %39 = math.rsqrt %38 : vector<64x1xf32>
    %40 = vector.broadcast %39 : vector<64x1xf32> to vector<64x32xf32>
    %41 = arith.mulf %36, %40 : vector<64x32xf32>
    %42 = vector.broadcast %18 : vector<1x32xf32> to vector<64x32xf32>
    %43 = arith.mulf %41, %42 : vector<64x32xf32>
    %44 = vector.broadcast %19 : vector<1x32xf32> to vector<64x32xf32>
    %45 = arith.addf %43, %44 : vector<64x32xf32>
    %c0_21 = arith.constant 0 : index
    %c0_22 = arith.constant 0 : index
    %46 = vector.load %arg4[%c0_21, %c0_22] : memref<32x96xbf16, #tpu.memory_space<vmem>>, vector<32x96xbf16>
    %47 = arith.truncf %45 : vector<64x32xf32> to vector<64x32xbf16>
    %48 = vector.extract_strided_slice %46 {offsets = [0, 0], sizes = [32, 32], strides = [1, 1]} : vector<32x96xbf16> to vector<32x32xbf16>
    %cst_23 = arith.constant dense<0.000000e+00> : vector<64x32xf32>
    %49 = tpu.matmul %47, %48, %cst_23 {dimension_numbers = #tpu.dot_dimension_numbers<[1], [0], [0], [1], [0, 0, 1, 1], [], []>} : vector<64x32xbf16>, vector<32x32xbf16>, vector<64x32xf32> -> vector<64x32xf32>
    %50 = arith.truncf %17 : vector<32x32xf32> to vector<32x32xbf16>
    %51 = vector.extract_strided_slice %46 {offsets = [0, 32], sizes = [32, 64], strides = [1, 1]} : vector<32x96xbf16> to vector<32x64xbf16>
    %cst_24 = arith.constant dense<0.000000e+00> : vector<32x64xf32>
    %52 = tpu.matmul %50, %51, %cst_24 {dimension_numbers = #tpu.dot_dimension_numbers<[1], [0], [0], [1], [0, 0, 1, 1], [], []>} : vector<32x32xbf16>, vector<32x64xbf16>, vector<32x64xf32> -> vector<32x64xf32>
    %53 = vector.extract_strided_slice %52 {offsets = [0, 0], sizes = [32, 32], strides = [1, 1]} : vector<32x64xf32> to vector<32x32xf32>
    %54 = vector.extract_strided_slice %52 {offsets = [0, 32], sizes = [32, 32], strides = [1, 1]} : vector<32x64xf32> to vector<32x32xf32>
    %55 = vector.extract_strided_slice %49 {offsets = [0, 0], sizes = [64, 8], strides = [1, 1]} : vector<64x32xf32> to vector<64x8xf32>
    %56 = vector.extract_strided_slice %53 {offsets = [0, 0], sizes = [32, 8], strides = [1, 1]} : vector<32x32xf32> to vector<32x8xf32>
    %57 = vector.extract_strided_slice %54 {offsets = [0, 0], sizes = [32, 8], strides = [1, 1]} : vector<32x32xf32> to vector<32x8xf32>
    %58 = arith.truncf %55 : vector<64x8xf32> to vector<64x8xbf16>
    %59 = arith.truncf %56 : vector<32x8xf32> to vector<32x8xbf16>
    %cst_25 = arith.constant dense<0.000000e+00> : vector<64x32xf32>
    %60 = tpu.matmul %58, %59, %cst_25 {dimension_numbers = #tpu.dot_dimension_numbers<[1], [1], [0], [0], [0, 0, 1, 0], [], []>} : vector<64x8xbf16>, vector<32x8xbf16>, vector<64x32xf32> -> vector<64x32xf32>
    %cst_26 = arith.constant 0.353553385 : f32
    %61 = vector.broadcast %cst_26 : f32 to vector<64x32xf32>
    %62 = arith.mulf %60, %61 : vector<64x32xf32>
    %cst_27 = arith.constant dense<0xFF800000> : vector<64xf32>
    %63 = vector.multi_reduction <maximumf>, %62, %cst_27 [1] : vector<64x32xf32> to vector<64xf32>
    %64 = vector.shape_cast %63 : vector<64xf32> to vector<64x1xf32>
    %65 = vector.broadcast %64 : vector<64x1xf32> to vector<64x32xf32>
    %66 = arith.subf %62, %65 : vector<64x32xf32>
    %67 = math.exp %66 : vector<64x32xf32>
    %cst_28 = arith.constant dense<0.000000e+00> : vector<64xf32>
    %68 = vector.multi_reduction <add>, %67, %cst_28 [1] : vector<64x32xf32> to vector<64xf32>
    %69 = vector.shape_cast %68 : vector<64xf32> to vector<64x1xf32>
    %70 = tpu.reciprocal %69 {approx = true} : vector<64x1xf32> -> vector<64x1xf32>
    %71 = vector.broadcast %70 : vector<64x1xf32> to vector<64x32xf32>
    %72 = arith.mulf %67, %71 : vector<64x32xf32>
    %73 = arith.truncf %72 : vector<64x32xf32> to vector<64x32xbf16>
    %74 = arith.truncf %57 : vector<32x8xf32> to vector<32x8xbf16>
    %cst_29 = arith.constant dense<0.000000e+00> : vector<64x8xf32>
    %75 = tpu.matmul %73, %74, %cst_29 {dimension_numbers = #tpu.dot_dimension_numbers<[1], [0], [0], [1], [0, 0, 1, 1], [], []>} : vector<64x32xbf16>, vector<32x8xbf16>, vector<64x8xf32> -> vector<64x8xf32>
    %76 = vector.extract_strided_slice %49 {offsets = [0, 8], sizes = [64, 8], strides = [1, 1]} : vector<64x32xf32> to vector<64x8xf32>
    %77 = vector.extract_strided_slice %53 {offsets = [0, 8], sizes = [32, 8], strides = [1, 1]} : vector<32x32xf32> to vector<32x8xf32>
    %78 = vector.extract_strided_slice %54 {offsets = [0, 8], sizes = [32, 8], strides = [1, 1]} : vector<32x32xf32> to vector<32x8xf32>
    %79 = arith.truncf %76 : vector<64x8xf32> to vector<64x8xbf16>
    %80 = arith.truncf %77 : vector<32x8xf32> to vector<32x8xbf16>
    %cst_30 = arith.constant dense<0.000000e+00> : vector<64x32xf32>
    %81 = tpu.matmul %79, %80, %cst_30 {dimension_numbers = #tpu.dot_dimension_numbers<[1], [1], [0], [0], [0, 0, 1, 0], [], []>} : vector<64x8xbf16>, vector<32x8xbf16>, vector<64x32xf32> -> vector<64x32xf32>
    %cst_31 = arith.constant 0.353553385 : f32
    %82 = vector.broadcast %cst_31 : f32 to vector<64x32xf32>
    %83 = arith.mulf %81, %82 : vector<64x32xf32>
    %cst_32 = arith.constant dense<0xFF800000> : vector<64xf32>
    %84 = vector.multi_reduction <maximumf>, %83, %cst_32 [1] : vector<64x32xf32> to vector<64xf32>
    %85 = vector.shape_cast %84 : vector<64xf32> to vector<64x1xf32>
    %86 = vector.broadcast %85 : vector<64x1xf32> to vector<64x32xf32>
    %87 = arith.subf %83, %86 : vector<64x32xf32>
    %88 = math.exp %87 : vector<64x32xf32>
    %cst_33 = arith.constant dense<0.000000e+00> : vector<64xf32>
    %89 = vector.multi_reduction <add>, %88, %cst_33 [1] : vector<64x32xf32> to vector<64xf32>
    %90 = vector.shape_cast %89 : vector<64xf32> to vector<64x1xf32>
    %91 = tpu.reciprocal %90 {approx = true} : vector<64x1xf32> -> vector<64x1xf32>
    %92 = vector.broadcast %91 : vector<64x1xf32> to vector<64x32xf32>
    %93 = arith.mulf %88, %92 : vector<64x32xf32>
    %94 = arith.truncf %93 : vector<64x32xf32> to vector<64x32xbf16>
    %95 = arith.truncf %78 : vector<32x8xf32> to vector<32x8xbf16>
    %cst_34 = arith.constant dense<0.000000e+00> : vector<64x8xf32>
    %96 = tpu.matmul %94, %95, %cst_34 {dimension_numbers = #tpu.dot_dimension_numbers<[1], [0], [0], [1], [0, 0, 1, 1], [], []>} : vector<64x32xbf16>, vector<32x8xbf16>, vector<64x8xf32> -> vector<64x8xf32>
    %97 = vector.extract_strided_slice %49 {offsets = [0, 16], sizes = [64, 8], strides = [1, 1]} : vector<64x32xf32> to vector<64x8xf32>
    %98 = vector.extract_strided_slice %53 {offsets = [0, 16], sizes = [32, 8], strides = [1, 1]} : vector<32x32xf32> to vector<32x8xf32>
    %99 = vector.extract_strided_slice %54 {offsets = [0, 16], sizes = [32, 8], strides = [1, 1]} : vector<32x32xf32> to vector<32x8xf32>
    %100 = arith.truncf %97 : vector<64x8xf32> to vector<64x8xbf16>
    %101 = arith.truncf %98 : vector<32x8xf32> to vector<32x8xbf16>
    %cst_35 = arith.constant dense<0.000000e+00> : vector<64x32xf32>
    %102 = tpu.matmul %100, %101, %cst_35 {dimension_numbers = #tpu.dot_dimension_numbers<[1], [1], [0], [0], [0, 0, 1, 0], [], []>} : vector<64x8xbf16>, vector<32x8xbf16>, vector<64x32xf32> -> vector<64x32xf32>
    %cst_36 = arith.constant 0.353553385 : f32
    %103 = vector.broadcast %cst_36 : f32 to vector<64x32xf32>
    %104 = arith.mulf %102, %103 : vector<64x32xf32>
    %cst_37 = arith.constant dense<0xFF800000> : vector<64xf32>
    %105 = vector.multi_reduction <maximumf>, %104, %cst_37 [1] : vector<64x32xf32> to vector<64xf32>
    %106 = vector.shape_cast %105 : vector<64xf32> to vector<64x1xf32>
    %107 = vector.broadcast %106 : vector<64x1xf32> to vector<64x32xf32>
    %108 = arith.subf %104, %107 : vector<64x32xf32>
    %109 = math.exp %108 : vector<64x32xf32>
    %cst_38 = arith.constant dense<0.000000e+00> : vector<64xf32>
    %110 = vector.multi_reduction <add>, %109, %cst_38 [1] : vector<64x32xf32> to vector<64xf32>
    %111 = vector.shape_cast %110 : vector<64xf32> to vector<64x1xf32>
    %112 = tpu.reciprocal %111 {approx = true} : vector<64x1xf32> -> vector<64x1xf32>
    %113 = vector.broadcast %112 : vector<64x1xf32> to vector<64x32xf32>
    %114 = arith.mulf %109, %113 : vector<64x32xf32>
    %115 = arith.truncf %114 : vector<64x32xf32> to vector<64x32xbf16>
    %116 = arith.truncf %99 : vector<32x8xf32> to vector<32x8xbf16>
    %cst_39 = arith.constant dense<0.000000e+00> : vector<64x8xf32>
    %117 = tpu.matmul %115, %116, %cst_39 {dimension_numbers = #tpu.dot_dimension_numbers<[1], [0], [0], [1], [0, 0, 1, 1], [], []>} : vector<64x32xbf16>, vector<32x8xbf16>, vector<64x8xf32> -> vector<64x8xf32>
    %118 = vector.extract_strided_slice %49 {offsets = [0, 24], sizes = [64, 8], strides = [1, 1]} : vector<64x32xf32> to vector<64x8xf32>
    %119 = vector.extract_strided_slice %53 {offsets = [0, 24], sizes = [32, 8], strides = [1, 1]} : vector<32x32xf32> to vector<32x8xf32>
    %120 = vector.extract_strided_slice %54 {offsets = [0, 24], sizes = [32, 8], strides = [1, 1]} : vector<32x32xf32> to vector<32x8xf32>
    %121 = arith.truncf %118 : vector<64x8xf32> to vector<64x8xbf16>
    %122 = arith.truncf %119 : vector<32x8xf32> to vector<32x8xbf16>
    %cst_40 = arith.constant dense<0.000000e+00> : vector<64x32xf32>
    %123 = tpu.matmul %121, %122, %cst_40 {dimension_numbers = #tpu.dot_dimension_numbers<[1], [1], [0], [0], [0, 0, 1, 0], [], []>} : vector<64x8xbf16>, vector<32x8xbf16>, vector<64x32xf32> -> vector<64x32xf32>
    %cst_41 = arith.constant 0.353553385 : f32
    %124 = vector.broadcast %cst_41 : f32 to vector<64x32xf32>
    %125 = arith.mulf %123, %124 : vector<64x32xf32>
    %cst_42 = arith.constant dense<0xFF800000> : vector<64xf32>
    %126 = vector.multi_reduction <maximumf>, %125, %cst_42 [1] : vector<64x32xf32> to vector<64xf32>
    %127 = vector.shape_cast %126 : vector<64xf32> to vector<64x1xf32>
    %128 = vector.broadcast %127 : vector<64x1xf32> to vector<64x32xf32>
    %129 = arith.subf %125, %128 : vector<64x32xf32>
    %130 = math.exp %129 : vector<64x32xf32>
    %cst_43 = arith.constant dense<0.000000e+00> : vector<64xf32>
    %131 = vector.multi_reduction <add>, %130, %cst_43 [1] : vector<64x32xf32> to vector<64xf32>
    %132 = vector.shape_cast %131 : vector<64xf32> to vector<64x1xf32>
    %133 = tpu.reciprocal %132 {approx = true} : vector<64x1xf32> -> vector<64x1xf32>
    %134 = vector.broadcast %133 : vector<64x1xf32> to vector<64x32xf32>
    %135 = arith.mulf %130, %134 : vector<64x32xf32>
    %136 = arith.truncf %135 : vector<64x32xf32> to vector<64x32xbf16>
    %137 = arith.truncf %120 : vector<32x8xf32> to vector<32x8xbf16>
    %cst_44 = arith.constant dense<0.000000e+00> : vector<64x8xf32>
    %138 = tpu.matmul %136, %137, %cst_44 {dimension_numbers = #tpu.dot_dimension_numbers<[1], [0], [0], [1], [0, 0, 1, 1], [], []>} : vector<64x32xbf16>, vector<32x8xbf16>, vector<64x8xf32> -> vector<64x8xf32>
    %139 = tpu.concatenate %75, %96, %117, %138 in 1 : vector<64x8xf32>, vector<64x8xf32>, vector<64x8xf32>, vector<64x8xf32> -> vector<64x32xf32>
    %140 = arith.truncf %139 : vector<64x32xf32> to vector<64x32xbf16>
    %c0_45 = arith.constant 0 : index
    %c0_46 = arith.constant 0 : index
    %141 = vector.load %arg5[%c0_45, %c0_46] : memref<32x32xbf16, #tpu.memory_space<vmem>>, vector<32x32xbf16>
    %cst_47 = arith.constant dense<0.000000e+00> : vector<64x32xf32>
    %142 = tpu.matmul %140, %141, %cst_47 {dimension_numbers = #tpu.dot_dimension_numbers<[1], [0], [0], [1], [0, 0, 1, 1], [], []>} : vector<64x32xbf16>, vector<32x32xbf16>, vector<64x32xf32> -> vector<64x32xf32>
    %143 = vector.broadcast %22 : vector<1x32xf32> to vector<64x32xf32>
    %144 = arith.addf %142, %143 : vector<64x32xf32>
    %145 = arith.addf %16, %144 : vector<64x32xf32>
    %cst_48 = arith.constant dense<0.000000e+00> : vector<64xf32>
    %146 = vector.multi_reduction <add>, %145, %cst_48 [1] : vector<64x32xf32> to vector<64xf32>
    %147 = vector.shape_cast %146 : vector<64xf32> to vector<64x1xf32>
    %cst_49 = arith.constant 3.200000e+01 : f32
    %148 = vector.broadcast %cst_49 : f32 to vector<64x1xf32>
    %149 = arith.divf %147, %148 : vector<64x1xf32>
    %150 = vector.broadcast %149 : vector<64x1xf32> to vector<64x32xf32>
    %151 = arith.subf %145, %150 : vector<64x32xf32>
    %152 = arith.mulf %151, %151 : vector<64x32xf32>
    %cst_50 = arith.constant dense<0.000000e+00> : vector<64xf32>
    %153 = vector.multi_reduction <add>, %152, %cst_50 [1] : vector<64x32xf32> to vector<64xf32>
    %154 = vector.shape_cast %153 : vector<64xf32> to vector<64x1xf32>
    %cst_51 = arith.constant 3.200000e+01 : f32
    %155 = vector.broadcast %cst_51 : f32 to vector<64x1xf32>
    %156 = arith.divf %154, %155 : vector<64x1xf32>
    %157 = vector.broadcast %149 : vector<64x1xf32> to vector<64x32xf32>
    %158 = arith.subf %145, %157 : vector<64x32xf32>
    %cst_52 = arith.constant 9.99999974E-6 : f32
    %159 = vector.broadcast %cst_52 : f32 to vector<64x1xf32>
    %160 = arith.addf %156, %159 : vector<64x1xf32>
    %161 = math.rsqrt %160 : vector<64x1xf32>
    %162 = vector.broadcast %161 : vector<64x1xf32> to vector<64x32xf32>
    %163 = arith.mulf %158, %162 : vector<64x32xf32>
    %164 = vector.broadcast %20 : vector<1x32xf32> to vector<64x32xf32>
    %165 = arith.mulf %163, %164 : vector<64x32xf32>
    %166 = vector.broadcast %21 : vector<1x32xf32> to vector<64x32xf32>
    %167 = arith.addf %165, %166 : vector<64x32xf32>
    %168 = arith.truncf %167 : vector<64x32xf32> to vector<64x32xbf16>
    %c0_53 = arith.constant 0 : index
    %c0_54 = arith.constant 0 : index
    %169 = vector.load %arg6[%c0_53, %c0_54] : memref<32x64xbf16, #tpu.memory_space<vmem>>, vector<32x64xbf16>
    %cst_55 = arith.constant dense<0.000000e+00> : vector<64x64xf32>
    %170 = tpu.matmul %168, %169, %cst_55 {dimension_numbers = #tpu.dot_dimension_numbers<[1], [0], [0], [1], [0, 0, 1, 1], [], []>} : vector<64x32xbf16>, vector<32x64xbf16>, vector<64x64xf32> -> vector<64x64xf32>
    %c0_56 = arith.constant 0 : index
    %c0_57 = arith.constant 0 : index
    %171 = vector.load %arg9[%c0_56, %c0_57] : memref<1x64xf32, #tpu.memory_space<vmem>>, vector<1x64xf32>
    %172 = vector.broadcast %171 : vector<1x64xf32> to vector<64x64xf32>
    %173 = arith.addf %170, %172 : vector<64x64xf32>
    %174 = arith.mulf %173, %173 : vector<64x64xf32>
    %175 = arith.mulf %173, %174 : vector<64x64xf32>
    %cst_58 = arith.constant 4.471500e-02 : f32
    %176 = vector.broadcast %cst_58 : f32 to vector<64x64xf32>
    %177 = arith.mulf %176, %175 : vector<64x64xf32>
    %178 = arith.addf %173, %177 : vector<64x64xf32>
    %cst_59 = arith.constant 0.797884583 : f32
    %179 = vector.broadcast %cst_59 : f32 to vector<64x64xf32>
    %180 = arith.mulf %179, %178 : vector<64x64xf32>
    %181 = math.tanh %180 : vector<64x64xf32>
    %cst_60 = arith.constant 1.000000e+00 : f32
    %182 = vector.broadcast %cst_60 : f32 to vector<64x64xf32>
    %183 = arith.addf %182, %181 : vector<64x64xf32>
    %cst_61 = arith.constant 5.000000e-01 : f32
    %184 = vector.broadcast %cst_61 : f32 to vector<64x64xf32>
    %185 = arith.mulf %184, %183 : vector<64x64xf32>
    %186 = arith.mulf %173, %185 : vector<64x64xf32>
    %187 = arith.truncf %186 : vector<64x64xf32> to vector<64x64xbf16>
    %c0_62 = arith.constant 0 : index
    %c0_63 = arith.constant 0 : index
    %188 = vector.load %arg7[%c0_62, %c0_63] : memref<64x32xbf16, #tpu.memory_space<vmem>>, vector<64x32xbf16>
    %cst_64 = arith.constant dense<0.000000e+00> : vector<64x32xf32>
    %189 = tpu.matmul %187, %188, %cst_64 {dimension_numbers = #tpu.dot_dimension_numbers<[1], [0], [0], [1], [0, 0, 1, 1], [], []>} : vector<64x64xbf16>, vector<64x32xbf16>, vector<64x32xf32> -> vector<64x32xf32>
    %190 = vector.broadcast %23 : vector<1x32xf32> to vector<64x32xf32>
    %191 = arith.addf %189, %190 : vector<64x32xf32>
    %192 = arith.addf %145, %191 : vector<64x32xf32>
    %cst_65 = arith.constant dense<0.000000e+00> : vector<256xf32>
    %193 = vector.multi_reduction <add>, %10, %cst_65 [0] : vector<64x256xf32> to vector<256xf32>
    %194 = vector.shape_cast %193 : vector<256xf32> to vector<1x256xf32>
    %cst_66 = arith.constant dense<0.000000e+00> : vector<32x256xf32>
    %195 = tpu.matmul %192, %10, %cst_66 {dimension_numbers = #tpu.dot_dimension_numbers<[0], [0], [1], [1], [0, 1, 1, 1], [], []>} : vector<64x32xf32>, vector<64x256xf32>, vector<32x256xf32> -> vector<32x256xf32>
    %cst_67 = arith.constant 1.000000e+00 : f32
    %196 = vector.broadcast %cst_67 : f32 to vector<1x256xf32>
    %197 = arith.subf %196, %194 : vector<1x256xf32>
    %198 = vector.broadcast %197 : vector<1x256xf32> to vector<32x256xf32>
    %199 = arith.mulf %1, %198 : vector<32x256xf32>
    %200 = arith.addf %199, %195 : vector<32x256xf32>
    %c0_68 = arith.constant 0 : index
    %c0_69 = arith.constant 0 : index
    %c0_70 = arith.constant 0 : index
    %201 = vector.load %arg10[%c0_68, %c0_69, %c0_70] : memref<1x32x256xf32, #tpu.memory_space<vmem>>, vector<1x32x256xf32>
    %202 = vector.shape_cast %201 : vector<1x32x256xf32> to vector<32x256xf32>
    %203 = vector.shape_cast %200 : vector<32x256xf32> to vector<1x32x256xf32>
    tpu.vector_store %arg10[%c0_68, %c0_69, %c0_70], %203 {strides = array<i32>} : memref<1x32x256xf32, #tpu.memory_space<vmem>>, vector<1x32x256xf32>,
    return
  }
  func.func @transform_0(%arg0: i32) -> (i32, i32, i32) {
    %c0_i32 = arith.constant 0 : i32
    %c0_i32_0 = arith.constant 0 : i32
    %c0_i32_1 = arith.constant 0 : i32
    return %arg0, %c0_i32, %c0_i32_0 : i32, i32, i32
  }
  func.func @transform_1(%arg0: i32) -> (i32, i32, i32) {
    %c0_i32 = arith.constant 0 : i32
    %c0_i32_0 = arith.constant 0 : i32
    %c0_i32_1 = arith.constant 0 : i32
    return %arg0, %c0_i32, %c0_i32_0 : i32, i32, i32
  }
  func.func @transform_2(%arg0: i32) -> (i32, i32, i32) {
    %c0_i32 = arith.constant 0 : i32
    %c0_i32_0 = arith.constant 0 : i32
    %c0_i32_1 = arith.constant 0 : i32
    return %arg0, %c0_i32, %c0_i32_0 : i32, i32, i32
  }
  func.func @transform_3(%arg0: i32) -> (i32, i32) {
    %c0_i32 = arith.constant 0 : i32
    %c0_i32_0 = arith.constant 0 : i32
    %c0_i32_1 = arith.constant 0 : i32
    return %c0_i32, %c0_i32_0 : i32, i32
  }
  func.func @transform_4(%arg0: i32) -> (i32, i32) {
    %c0_i32 = arith.constant 0 : i32
    %c0_i32_0 = arith.constant 0 : i32
    %c0_i32_1 = arith.constant 0 : i32
    return %c0_i32, %c0_i32_0 : i32, i32
  }
  func.func @transform_5(%arg0: i32) -> (i32, i32) {
    %c0_i32 = arith.constant 0 : i32
    %c0_i32_0 = arith.constant 0 : i32
    %c0_i32_1 = arith.constant 0 : i32
    return %c0_i32, %c0_i32_0 : i32, i32
  }
  func.func @transform_6(%arg0: i32) -> (i32, i32) {
    %c0_i32 = arith.constant 0 : i32
    %c0_i32_0 = arith.constant 0 : i32
    %c0_i32_1 = arith.constant 0 : i32
    return %c0_i32, %c0_i32_0 : i32, i32
  }
  func.func @transform_7(%arg0: i32) -> (i32, i32) {
    %c0_i32 = arith.constant 0 : i32
    %c0_i32_0 = arith.constant 0 : i32
    %c0_i32_1 = arith.constant 0 : i32
    return %c0_i32, %c0_i32_0 : i32, i32
  }
  func.func @transform_8(%arg0: i32) -> (i32, i32) {
    %c0_i32 = arith.constant 0 : i32
    %c0_i32_0 = arith.constant 0 : i32
    %c0_i32_1 = arith.constant 0 : i32
    return %c0_i32, %c0_i32_0 : i32, i32
  }
  func.func @transform_9(%arg0: i32) -> (i32, i32, i32) {
    %c0_i32 = arith.constant 0 : i32
    %c0_i32_0 = arith.constant 0 : i32
    %c0_i32_1 = arith.constant 0 : i32
    return %arg0, %c0_i32, %c0_i32_0 : i32, i32, i32
  }
}

</mosaic_0001>

<llo_original>
// kernel: region_point_process.2
$region0: #{region_point_process.2}
  #allocation0 [shape = 'u32[]', space=smem, size = 0x4, offset = 0x4, fixed_abs, tag = 'smem constant byte address 0x4 - core index']
  #allocation1 [shape = 'u32[144,128]{1,0:T(1,128)}', space=vmem, size = 0x12000, scoped, tag = 'internal scratch']
  %s0 = inlined_call_operand.vmem [shape: f32[8,256], index: 0, kind: input, shape index: {}]
  %s1 = inlined_call_operand.vmem [shape: f32[2,256], index: 1, kind: output, shape index: {}]
  %s2 = sld [smem:[#allocation0]]
  $region37: #{region_point_process.2} parent=0
    _
  %s4 = ssub.s32 1, %s2
  %s5 = scalar_select 0, %s4, %s2
  loop: start=0, step=1, limit=4
  $region2: #{region_point_process.2} parent=0 // loop_pre_header
    _
  $region3: #{region_point_process.2} parent=0 // loop_header
    %s7 = sphi 0, %s11
    %p8 = scmp.ge.s32.totalorder %s7, 4
    %s17 = sphi 0, %s19
    %s20 = sphi 0, %s17
    %s21 = sphi 0, %s20
    %s37 = sphi 0, %s21
    %s43 = sphi 0, %s45
    %s46 = sphi 0, %s43
    %s47 = sphi 0, %s46
    %s63 = sphi 0, %s47
  $region4: #{region_point_process.2} parent=0 // loop_header_branch
    %10 = sbr.rel (%p8) target = $region8
  $region5: #{region_point_process.2} parent=0 // loop_body
    %s12 = ssub.s32 %s7, 1
    %s13 = ssub.s32 %s7, 2
    %s14 = sadd.s32 %s7, 1
    %s15 = ssub.s32 %s7, %s14
    %p16 = scmp.eq.s32.totalorder %s15, 0
    %s18 = sadd.s32 %s17, 1
    %s19 = scalar_select %p16, %s17, %s18
    %p22 = pneg %p16
    %p23 = scmp.eq.s32.totalorder %s7, 1
    %p24 = por %p22, %p23
    %p25 = scmp.ne.s32.totalorder %s17, %s20
    %p26 = scmp.eq.s32.totalorder %s7, 0
    %p27 = por %p25, %p26
    %p28 = scmp.ne.s32.totalorder %s17, %s20
    %p29 = scmp.eq.s32.totalorder %s12, 1
    %p30 = por %p28, %p29
    %p31 = scmp.ne.s32.totalorder %s20, %s21
    %p32 = scmp.eq.s32.totalorder %s12, 0
    %p33 = por %p31, %p32
    %p34 = scmp.ne.s32.totalorder %s20, %s21
    %p35 = scmp.eq.s32.totalorder %s13, 1
    %p36 = por %p34, %p35
    %p38 = scmp.ne.s32.totalorder %s21, %s37
    %p39 = scmp.eq.s32.totalorder %s13, 0
    %p40 = por %p38, %p39
    %s41 = ssub.s32 %s7, %s14
    %p42 = scmp.eq.s32.totalorder %s41, 0
    %s44 = sadd.s32 %s43, 1
    %s45 = scalar_select %p42, %s43, %s44
    %p48 = pneg %p42
    %p49 = scmp.eq.s32.totalorder %s7, 1
    %p50 = por %p48, %p49
    %p51 = scmp.ne.s32.totalorder %s43, %s46
    %p52 = scmp.eq.s32.totalorder %s7, 0
    %p53 = por %p51, %p52
    %p54 = scmp.ne.s32.totalorder %s43, %s46
    %p55 = scmp.eq.s32.totalorder %s12, 1
    %p56 = por %p54, %p55
    %p57 = scmp.ne.s32.totalorder %s46, %s47
    %p58 = scmp.eq.s32.totalorder %s12, 0
    %p59 = por %p57, %p58
    %p60 = scmp.ne.s32.totalorder %s46, %s47
    %p61 = scmp.eq.s32.totalorder %s13, 1
    %p62 = por %p60, %p61
    %p64 = scmp.ne.s32.totalorder %s47, %s63
    %p65 = scmp.eq.s32.totalorder %s13, 0
    %p66 = por %p64, %p65
    %p67 = scmp.le.s32.totalorder 1, %s7
    %p68 = scmp.lt.s32.totalorder %s7, 3
    %p69 = pnand %p67, %p68
    %p70 = pneg %p69
    // Predicated region
    $region9: #{region_point_process.2} parent=5 // pred_check
      _
    $region10: #{region_point_process.2} parent=5 // pred_check_branch
      %72 = sbr.rel (%p69) target = $region12
    $region11: #{region_point_process.2} parent=5 // pred_region
      %s73 = ssub.s32 %s7, 1
    $region12: #{region_point_process.2} parent=5 // pred_fallthru
      _
    %p74 = scmp.lt.s32.totalorder %s7, 2
    // Predicated region
    $region13: #{region_point_process.2} parent=5 // pred_check
      %p75 = pneg %p74
    $region14: #{region_point_process.2} parent=5 // pred_check_branch
      %77 = sbr.rel (%p75) target = $region16
    $region15: #{region_point_process.2} parent=5 // pred_region
      // Predicated region
      $region17: #{region_point_process.2} parent=15 // pred_check
        %p78 = pneg %p27
      $region18: #{region_point_process.2} parent=15 // pred_check_branch
        %80 = sbr.rel (%p78) target = $region20
      $region19: #{region_point_process.2} parent=15 // pred_region
        %p81 = scmp.lt.s32.totalorder %s7, 1
        %s82 = scalar_select %p81, %s7, 1
        %s83 = smul.addr %s82, 8
        %s84 = scalar_lea.vmem %s0, %s83
      $region20: #{region_point_process.2} parent=15 // pred_fallthru
        _
    $region16: #{region_point_process.2} parent=5 // pred_fallthru
      _
    %p85 = scmp.le.s32.totalorder 1, %s7
    %p86 = scmp.lt.s32.totalorder %s7, 3
    %p87 = pnand %p85, %p86
    %p88 = pneg %p87
    // Predicated region
    $region21: #{region_point_process.2} parent=5 // pred_check
      _
    $region22: #{region_point_process.2} parent=5 // pred_check_branch
      %90 = sbr.rel (%p87) target = $region24
    $region23: #{region_point_process.2} parent=5 // pred_region
      %s91 = ssub.s32 %s7, 1
      %p92 = scmp.lt.s32.totalorder %s12, 1
      %s93 = scalar_select %p92, %s12, 1
      %s94 = smul.addr %s93, 8
      %s95 = scalar_lea.vmem %s0, %s94
      %p96 = pneg %p33
      %p97 = pneg %p30
      %p98 = pneg %p59
      %p99 = pneg %p56
      %p100 = scmp.lt.s32.totalorder %s12, 1
      %s101 = scalar_select %p100, %s12, 1
      %s102 = smul.addr %s101, 2
      %s103 = scalar_lea.vmem %s1, %s102
      %p104 = scmp.lt.s32.totalorder %s12, 1
      %s105 = scalar_select %p104, %s12, 1
      %s106 = smul.addr %s105, 8
      %s107 = scalar_lea.vmem %s0, %s106
      %p108 = scmp.lt.s32.totalorder %s12, 1
      %s109 = scalar_select %p108, %s12, 1
      %s110 = smul.addr %s109, 2
      %s111 = scalar_lea.vmem %s1, %s110
      %v112 = vld [vmem:[%s107] sm:$0xff]
      %vm113 = vcmask 1043456
      %v114 = vsel %vm113, %v112, -inf
      %v115 = vrot.slane %v114, 4
      %v116 = vmax.f32 %v114, %v115
      %v117 = vrot.slane %v116, 2
      %v118 = vmax.f32 %v116, %v117
      %v119 = vrot.slane %v118, 1
      %v120 = vmax.f32 %v118, %v119
      %v121 = vsub.f32 %v112, %v120
      %v122 = vmul.f32 %v121, 1.442695
      %v123 = vpow.pop %v122
      %v124 = vsel %vm113, %v123, 0.0
      %v125 = vrot.slane %v124, 4
      %v126 = vadd.f32 %v124, %v125
      %v127 = vrot.slane %v126, 2
      %v128 = vadd.f32 %v126, %v127
      %v129 = vrot.slane %v128, 1
      %v130 = vadd.f32 %v128, %v129
      %v131 = vmul.f32 %v123, %v121
      %v132 = vsel %vm113, %v131, 0.0
      %v133 = vrot.slane %v132, 4
      %v134 = vadd.f32 %v132, %v133
      %v135 = vrot.slane %v134, 2
      %v136 = vadd.f32 %v134, %v135
      %v137 = vrot.slane %v136, 1
      %v138 = vadd.f32 %v136, %v137
      %v139 = vlog2.pop %v130
      %v140 = vmul.f32 %v139, 0.6931472
      %v141 = vrcp.pop %v130
      %v142 = vmul.f32 %v138, %v141
      %v143 = vsub.f32 %v140, %v142
      %144 = vst [vmem:[%s111] sm:$0x1] %v143
      %vm145 = vcmask 1047556
      %v146 = vsel %vm145, %v112, -inf
      %v147 = vrot.slane %v146, 4
      %v148 = vmax.f32 %v146, %v147
      %v149 = vrot.slane %v148, 2
      %v150 = vmax.f32 %v148, %v149
      %v151 = vrot.slane %v150, 1
      %v152 = vmax.f32 %v150, %v151
      %v153 = vsub.f32 %v112, %v152
      %v154 = vmul.f32 %v153, 1.442695
      %v155 = vpow.pop %v154
      %v157 = vrot.slane %v155, 4
      %v159 = vsel %vm113, %v157, 0.0
      %v160 = vrot.slane %v159, 4
      %v161 = vadd.f32 %v159, %v160
      %v162 = vrot.slane %v161, 2
      %v163 = vadd.f32 %v161, %v162
      %v164 = vrot.slane %v163, 1
      %v165 = vadd.f32 %v163, %v164
      %v166 = vmul.f32 %v155, %v153
      %v168 = vrot.slane %v166, 4
      %v170 = vsel %vm113, %v168, 0.0
      %v171 = vrot.slane %v170, 4
      %v172 = vadd.f32 %v170, %v171
      %v173 = vrot.slane %v172, 2
      %v174 = vadd.f32 %v172, %v173
      %v175 = vrot.slane %v174, 1
      %v176 = vadd.f32 %v174, %v175
      %v177 = vlog2.pop %v165
      %v178 = vmul.f32 %v177, 0.6931472
      %v179 = vrcp.pop %v165
      %v180 = vmul.f32 %v176, %v179
      %v181 = vsub.f32 %v178, %v180
      %182 = vst [vmem:[%s111 + $0x1] sm:$0x1] %v181
      %p183 = scmp.lt.s32.totalorder %s12, 1
      %s184 = scalar_select %p183, %s12, 1
      %s185 = smul.addr %s184, 2
      %s186 = scalar_lea.vmem %s1, %s185
      // Predicated region
      $region25: #{region_point_process.2} parent=23 // pred_check
        %p187 = pneg %p56
      $region26: #{region_point_process.2} parent=23 // pred_check_branch
        %189 = sbr.rel (%p187) target = $region28
      $region27: #{region_point_process.2} parent=23 // pred_region
        _
      $region28: #{region_point_process.2} parent=23 // pred_fallthru
        _
    $region24: #{region_point_process.2} parent=5 // pred_fallthru
      _
    %p190 = scmp.le.s32.totalorder 2, %s7
    // Predicated region
    $region29: #{region_point_process.2} parent=5 // pred_check
      %p191 = pneg %p190
    $region30: #{region_point_process.2} parent=5 // pred_check_branch
      %193 = sbr.rel (%p191) target = $region32
    $region31: #{region_point_process.2} parent=5 // pred_region
      %s194 = ssub.s32 %s7, 2
      // Predicated region
      $region33: #{region_point_process.2} parent=31 // pred_check
        %p195 = pneg %p62
      $region34: #{region_point_process.2} parent=31 // pred_check_branch
        %197 = sbr.rel (%p195) target = $region36
      $region35: #{region_point_process.2} parent=31 // pred_region
        %p198 = scmp.lt.s32.totalorder %s13, 1
        %s199 = scalar_select %p198, %s13, 1
        %s200 = smul.addr %s199, 2
        %s201 = scalar_lea.vmem %s1, %s200
      $region36: #{region_point_process.2} parent=31 // pred_fallthru
        _
    $region32: #{region_point_process.2} parent=5 // pred_fallthru
      _
  $region6: #{region_point_process.2} parent=0 // loop_footer
    %s11 = sadd.s32 1, %s7
  $region7: #{region_point_process.2} parent=0 // loop_footer_branch
    %6 = sbr.rel target = $region3
  $region8: #{region_point_process.2} parent=0 // loop_exit
    _

// kernel: region_point_process.3
$region0: #{region_point_process.3}
  #allocation0 [shape = 'u32[]', space=smem, size = 0x4, offset = 0x4, fixed_abs, tag = 'smem constant byte address 0x4 - core index']
  #allocation1 [shape = 'u32[144,128]{1,0:T(1,128)}', space=vmem, size = 0x12000, scoped, tag = 'internal scratch']
  %s0 = inlined_call_operand.vmem [shape: f32[2,32,256], index: 0, kind: input, shape index: {}]
  %s1 = inlined_call_operand.vmem [shape: s32[2,64,1], index: 1, kind: input, shape index: {}]
  %s2 = inlined_call_operand.vmem [shape: s32[2,32,1], index: 2, kind: input, shape index: {}]
  %s3 = inlined_call_operand.vmem [shape: bf16[32,96], index: 3, kind: input, shape index: {}]
  %s4 = inlined_call_operand.vmem [shape: bf16[32,32], index: 4, kind: input, shape index: {}]
  %s5 = inlined_call_operand.vmem [shape: bf16[32,64], index: 5, kind: input, shape index: {}]
  %s6 = inlined_call_operand.vmem [shape: bf16[64,32], index: 6, kind: input, shape index: {}]
  %s7 = inlined_call_operand.vmem [shape: f32[6,32], index: 7, kind: input, shape index: {}]
  %s8 = inlined_call_operand.vmem [shape: f32[1,64], index: 8, kind: input, shape index: {}]
  %s9 = inlined_call_operand.vmem [shape: f32[2,32,256], index: 9, kind: output, shape index: {}]
  %s10 = sld [smem:[#allocation0]]
  $region69: #{region_point_process.3} parent=0
    _
  %s12 = ssub.s32 1, %s10
  %s13 = scalar_select 0, %s12, %s10
  loop: start=0, step=1, limit=4
  $region2: #{region_point_process.3} parent=0 // loop_pre_header
    _
  $region3: #{region_point_process.3} parent=0 // loop_header
    %s15 = sphi 0, %s19
    %p16 = scmp.ge.s32.totalorder %s15, 4
    %s25 = sphi 0, %s27
    %s28 = sphi 0, %s25
    %s29 = sphi 0, %s28
    %s45 = sphi 0, %s29
    %s51 = sphi 0, %s53
    %s54 = sphi 0, %s51
    %s55 = sphi 0, %s54
    %s71 = sphi 0, %s55
    %s77 = sphi 0, %s79
    %s80 = sphi 0, %s77
    %s81 = sphi 0, %s80
    %s97 = sphi 0, %s81
    %s101 = sphi 0, %s101
    %s103 = sphi 0, %s101
    %s104 = sphi 0, %s103
    %s118 = sphi 0, %s104
    %s122 = sphi 0, %s122
    %s124 = sphi 0, %s122
    %s125 = sphi 0, %s124
    %s139 = sphi 0, %s125
    %s143 = sphi 0, %s143
    %s145 = sphi 0, %s143
    %s146 = sphi 0, %s145
    %s160 = sphi 0, %s146
    %s164 = sphi 0, %s164
    %s166 = sphi 0, %s164
    %s167 = sphi 0, %s166
    %s181 = sphi 0, %s167
    %s185 = sphi 0, %s185
    %s187 = sphi 0, %s185
    %s188 = sphi 0, %s187
    %s202 = sphi 0, %s188
    %s206 = sphi 0, %s206
    %s208 = sphi 0, %s206
    %s209 = sphi 0, %s208
    %s223 = sphi 0, %s209
    %s229 = sphi 0, %s231
    %s232 = sphi 0, %s229
    %s233 = sphi 0, %s232
    %s249 = sphi 0, %s233
  $region4: #{region_point_process.3} parent=0 // loop_header_branch
    %18 = sbr.rel (%p16) target = $region8
  $region5: #{region_point_process.3} parent=0 // loop_body
    %s20 = ssub.s32 %s15, 1
    %s21 = ssub.s32 %s15, 2
    %s22 = sadd.s32 %s15, 1
    %s23 = ssub.s32 %s15, %s22
    %p24 = scmp.eq.s32.totalorder %s23, 0
    %s26 = sadd.s32 %s25, 1
    %s27 = scalar_select %p24, %s25, %s26
    %p30 = pneg %p24
    %p31 = scmp.eq.s32.totalorder %s15, 1
    %p32 = por %p30, %p31
    %p33 = scmp.ne.s32.totalorder %s25, %s28
    %p34 = scmp.eq.s32.totalorder %s15, 0
    %p35 = por %p33, %p34
    %p36 = scmp.ne.s32.totalorder %s25, %s28
    %p37 = scmp.eq.s32.totalorder %s20, 1
    %p38 = por %p36, %p37
    %p39 = scmp.ne.s32.totalorder %s28, %s29
    %p40 = scmp.eq.s32.totalorder %s20, 0
    %p41 = por %p39, %p40
    %p42 = scmp.ne.s32.totalorder %s28, %s29
    %p43 = scmp.eq.s32.totalorder %s21, 1
    %p44 = por %p42, %p43
    %p46 = scmp.ne.s32.totalorder %s29, %s45
    %p47 = scmp.eq.s32.totalorder %s21, 0
    %p48 = por %p46, %p47
    %s49 = ssub.s32 %s15, %s22
    %p50 = scmp.eq.s32.totalorder %s49, 0
    %s52 = sadd.s32 %s51, 1
    %s53 = scalar_select %p50, %s51, %s52
    %p56 = pneg %p50
    %p57 = scmp.eq.s32.totalorder %s15, 1
    %p58 = por %p56, %p57
    %p59 = scmp.ne.s32.totalorder %s51, %s54
    %p60 = scmp.eq.s32.totalorder %s15, 0
    %p61 = por %p59, %p60
    %p62 = scmp.ne.s32.totalorder %s51, %s54
    %p63 = scmp.eq.s32.totalorder %s20, 1
    %p64 = por %p62, %p63
    %p65 = scmp.ne.s32.totalorder %s54, %s55
    %p66 = scmp.eq.s32.totalorder %s20, 0
    %p67 = por %p65, %p66
    %p68 = scmp.ne.s32.totalorder %s54, %s55
    %p69 = scmp.eq.s32.totalorder %s21, 1
    %p70 = por %p68, %p69
    %p72 = scmp.ne.s32.totalorder %s55, %s71
    %p73 = scmp.eq.s32.totalorder %s21, 0
    %p74 = por %p72, %p73
    %s75 = ssub.s32 %s15, %s22
    %p76 = scmp.eq.s32.totalorder %s75, 0
    %s78 = sadd.s32 %s77, 1
    %s79 = scalar_select %p76, %s77, %s78
    %p82 = pneg %p76
    %p83 = scmp.eq.s32.totalorder %s15, 1
    %p84 = por %p82, %p83
    %p85 = scmp.ne.s32.totalorder %s77, %s80
    %p86 = scmp.eq.s32.totalorder %s15, 0
    %p87 = por %p85, %p86
    %p88 = scmp.ne.s32.totalorder %s77, %s80
    %p89 = scmp.eq.s32.totalorder %s20, 1
    %p90 = por %p88, %p89
    %p91 = scmp.ne.s32.totalorder %s80, %s81
    %p92 = scmp.eq.s32.totalorder %s20, 0
    %p93 = por %p91, %p92
    %p94 = scmp.ne.s32.totalorder %s80, %s81
    %p95 = scmp.eq.s32.totalorder %s21, 1
    %p96 = por %p94, %p95
    %p98 = scmp.ne.s32.totalorder %s81, %s97
    %p99 = scmp.eq.s32.totalorder %s21, 0
    %p100 = por %p98, %p99
    %s102 = sadd.s32 %s101, 1
    %p105 = scmp.eq.s32.totalorder %s15, 1
    %p106 = scmp.ne.s32.totalorder %s101, %s103
    %p107 = scmp.eq.s32.totalorder %s15, 0
    %p108 = por %p106, %p107
    %p109 = scmp.ne.s32.totalorder %s101, %s103
    %p110 = scmp.eq.s32.totalorder %s20, 1
    %p111 = por %p109, %p110
    %p112 = scmp.ne.s32.totalorder %s103, %s104
    %p113 = scmp.eq.s32.totalorder %s20, 0
    %p114 = por %p112, %p113
    %p115 = scmp.ne.s32.totalorder %s103, %s104
    %p116 = scmp.eq.s32.totalorder %s21, 1
    %p117 = por %p115, %p116
    %p119 = scmp.ne.s32.totalorder %s104, %s118
    %p120 = scmp.eq.s32.totalorder %s21, 0
    %p121 = por %p119, %p120
    %s123 = sadd.s32 %s122, 1
    %p126 = scmp.eq.s32.totalorder %s15, 1
    %p127 = scmp.ne.s32.totalorder %s122, %s124
    %p128 = scmp.eq.s32.totalorder %s15, 0
    %p129 = por %p127, %p128
    %p130 = scmp.ne.s32.totalorder %s122, %s124
    %p131 = scmp.eq.s32.totalorder %s20, 1
    %p132 = por %p130, %p131
    %p133 = scmp.ne.s32.totalorder %s124, %s125
    %p134 = scmp.eq.s32.totalorder %s20, 0
    %p135 = por %p133, %p134
    %p136 = scmp.ne.s32.totalorder %s124, %s125
    %p137 = scmp.eq.s32.totalorder %s21, 1
    %p138 = por %p136, %p137
    %p140 = scmp.ne.s32.totalorder %s125, %s139
    %p141 = scmp.eq.s32.totalorder %s21, 0
    %p142 = por %p140, %p141
    %s144 = sadd.s32 %s143, 1
    %p147 = scmp.eq.s32.totalorder %s15, 1
    %p148 = scmp.ne.s32.totalorder %s143, %s145
    %p149 = scmp.eq.s32.totalorder %s15, 0
    %p150 = por %p148, %p149
    %p151 = scmp.ne.s32.totalorder %s143, %s145
    %p152 = scmp.eq.s32.totalorder %s20, 1
    %p153 = por %p151, %p152
    %p154 = scmp.ne.s32.totalorder %s145, %s146
    %p155 = scmp.eq.s32.totalorder %s20, 0
    %p156 = por %p154, %p155
    %p157 = scmp.ne.s32.totalorder %s145, %s146
    %p158 = scmp.eq.s32.totalorder %s21, 1
    %p159 = por %p157, %p158
    %p161 = scmp.ne.s32.totalorder %s146, %s160
    %p162 = scmp.eq.s32.totalorder %s21, 0
    %p163 = por %p161, %p162
    %s165 = sadd.s32 %s164, 1
    %p168 = scmp.eq.s32.totalorder %s15, 1
    %p169 = scmp.ne.s32.totalorder %s164, %s166
    %p170 = scmp.eq.s32.totalorder %s15, 0
    %p171 = por %p169, %p170
    %p172 = scmp.ne.s32.totalorder %s164, %s166
    %p173 = scmp.eq.s32.totalorder %s20, 1
    %p174 = por %p172, %p173
    %p175 = scmp.ne.s32.totalorder %s166, %s167
    %p176 = scmp.eq.s32.totalorder %s20, 0
    %p177 = por %p175, %p176
    %p178 = scmp.ne.s32.totalorder %s166, %s167
    %p179 = scmp.eq.s32.totalorder %s21, 1
    %p180 = por %p178, %p179
    %p182 = scmp.ne.s32.totalorder %s167, %s181
    %p183 = scmp.eq.s32.totalorder %s21, 0
    %p184 = por %p182, %p183
    %s186 = sadd.s32 %s185, 1
    %p189 = scmp.eq.s32.totalorder %s15, 1
    %p190 = scmp.ne.s32.totalorder %s185, %s187
    %p191 = scmp.eq.s32.totalorder %s15, 0
    %p192 = por %p190, %p191
    %p193 = scmp.ne.s32.totalorder %s185, %s187
    %p194 = scmp.eq.s32.totalorder %s20, 1
    %p195 = por %p193, %p194
    %p196 = scmp.ne.s32.totalorder %s187, %s188
    %p197 = scmp.eq.s32.totalorder %s20, 0
    %p198 = por %p196, %p197
    %p199 = scmp.ne.s32.totalorder %s187, %s188
    %p200 = scmp.eq.s32.totalorder %s21, 1
    %p201 = por %p199, %p200
    %p203 = scmp.ne.s32.totalorder %s188, %s202
    %p204 = scmp.eq.s32.totalorder %s21, 0
    %p205 = por %p203, %p204
    %s207 = sadd.s32 %s206, 1
    %p210 = scmp.eq.s32.totalorder %s15, 1
    %p211 = scmp.ne.s32.totalorder %s206, %s208
    %p212 = scmp.eq.s32.totalorder %s15, 0
    %p213 = por %p211, %p212
    %p214 = scmp.ne.s32.totalorder %s206, %s208
    %p215 = scmp.eq.s32.totalorder %s20, 1
    %p216 = por %p214, %p215
    %p217 = scmp.ne.s32.totalorder %s208, %s209
    %p218 = scmp.eq.s32.totalorder %s20, 0
    %p219 = por %p217, %p218
    %p220 = scmp.ne.s32.totalorder %s208, %s209
    %p221 = scmp.eq.s32.totalorder %s21, 1
    %p222 = por %p220, %p221
    %p224 = scmp.ne.s32.totalorder %s209, %s223
    %p225 = scmp.eq.s32.totalorder %s21, 0
    %p226 = por %p224, %p225
    %s227 = ssub.s32 %s15, %s22
    %p228 = scmp.eq.s32.totalorder %s227, 0
    %s230 = sadd.s32 %s229, 1
    %s231 = scalar_select %p228, %s229, %s230
    %p234 = pneg %p228
    %p235 = scmp.eq.s32.totalorder %s15, 1
    %p236 = por %p234, %p235
    %p237 = scmp.ne.s32.totalorder %s229, %s232
    %p238 = scmp.eq.s32.totalorder %s15, 0
    %p239 = por %p237, %p238
    %p240 = scmp.ne.s32.totalorder %s229, %s232
    %p241 = scmp.eq.s32.totalorder %s20, 1
    %p242 = por %p240, %p241
    %p243 = scmp.ne.s32.totalorder %s232, %s233
    %p244 = scmp.eq.s32.totalorder %s20, 0
    %p245 = por %p243, %p244
    %p246 = scmp.ne.s32.totalorder %s232, %s233
    %p247 = scmp.eq.s32.totalorder %s21, 1
    %p248 = por %p246, %p247
    %p250 = scmp.ne.s32.totalorder %s233, %s249
    %p251 = scmp.eq.s32.totalorder %s21, 0
    %p252 = por %p250, %p251
    %p253 = scmp.le.s32.totalorder 1, %s15
    %p254 = scmp.lt.s32.totalorder %s15, 3
    %p255 = pnand %p253, %p254
    %p256 = pneg %p255
    // Predicated region
    $region9: #{region_point_process.3} parent=5 // pred_check
      _
    $region10: #{region_point_process.3} parent=5 // pred_check_branch
      %258 = sbr.rel (%p255) target = $region12
    $region11: #{region_point_process.3} parent=5 // pred_region
      %s259 = ssub.s32 %s15, 1
      // Predicated region
      $region13: #{region_point_process.3} parent=11 // pred_check
        %p260 = pneg %p114
      $region14: #{region_point_process.3} parent=11 // pred_check_branch
        %262 = sbr.rel (%p260) target = $region16
      $region15: #{region_point_process.3} parent=11 // pred_region
        _
      $region16: #{region_point_process.3} parent=11 // pred_fallthru
        _
      // Predicated region
      $region17: #{region_point_process.3} parent=11 // pred_check
        %p263 = pneg %p135
      $region18: #{region_point_process.3} parent=11 // pred_check_branch
        %265 = sbr.rel (%p263) target = $region20
      $region19: #{region_point_process.3} parent=11 // pred_region
        _
      $region20: #{region_point_process.3} parent=11 // pred_fallthru
        _
      // Predicated region
      $region21: #{region_point_process.3} parent=11 // pred_check
        %p266 = pneg %p156
      $region22: #{region_point_process.3} parent=11 // pred_check_branch
        %268 = sbr.rel (%p266) target = $region24
      $region23: #{region_point_process.3} parent=11 // pred_region
        _
      $region24: #{region_point_process.3} parent=11 // pred_fallthru
        _
      // Predicated region
      $region25: #{region_point_process.3} parent=11 // pred_check
        %p269 = pneg %p177
      $region26: #{region_point_process.3} parent=11 // pred_check_branch
        %271 = sbr.rel (%p269) target = $region28
      $region27: #{region_point_process.3} parent=11 // pred_region
        _
      $region28: #{region_point_process.3} parent=11 // pred_fallthru
        _
      // Predicated region
      $region29: #{region_point_process.3} parent=11 // pred_check
        %p272 = pneg %p198
      $region30: #{region_point_process.3} parent=11 // pred_check_branch
        %274 = sbr.rel (%p272) target = $region32
      $region31: #{region_point_process.3} parent=11 // pred_region
        _
      $region32: #{region_point_process.3} parent=11 // pred_fallthru
        _
      // Predicated region
      $region33: #{region_point_process.3} parent=11 // pred_check
        %p275 = pneg %p219
      $region34: #{region_point_process.3} parent=11 // pred_check_branch
        %277 = sbr.rel (%p275) target = $region36
      $region35: #{region_point_process.3} parent=11 // pred_region
        _
      $region36: #{region_point_process.3} parent=11 // pred_fallthru
        _
    $region12: #{region_point_process.3} parent=5 // pred_fallthru
      _
    %p278 = scmp.lt.s32.totalorder %s15, 2
    // Predicated region
    $region37: #{region_point_process.3} parent=5 // pred_check
      %p279 = pneg %p278
    $region38: #{region_point_process.3} parent=5 // pred_check_branch
      %281 = sbr.rel (%p279) target = $region40
    $region39: #{region_point_process.3} parent=5 // pred_region
      // Predicated region
      $region41: #{region_point_process.3} parent=39 // pred_check
        %p282 = pneg %p35
      $region42: #{region_point_process.3} parent=39 // pred_check_branch
        %284 = sbr.rel (%p282) target = $region44
      $region43: #{region_point_process.3} parent=39 // pred_region
        %p285 = scmp.lt.s32.totalorder %s15, 1
        %s286 = scalar_select %p285, %s15, 1
        %s287 = smul.addr %s286, 8
        %s288 = smul.addr %s287, 8
        %s289 = scalar_lea.vmem %s0, %s288
      $region44: #{region_point_process.3} parent=39 // pred_fallthru
        _
      // Predicated region
      $region45: #{region_point_process.3} parent=39 // pred_check
        %p290 = pneg %p61
      $region46: #{region_point_process.3} parent=39 // pred_check_branch
        %292 = sbr.rel (%p290) target = $region48
      $region47: #{region_point_process.3} parent=39 // pred_region
        %p293 = scmp.lt.s32.totalorder %s15, 1
        %s294 = scalar_select %p293, %s15, 1
        %s295 = smul.addr %s294, 8
        %s296 = smul.addr %s295, 8
        %s297 = scalar_lea.vmem %s1, %s296
      $region48: #{region_point_process.3} parent=39 // pred_fallthru
        _
      // Predicated region
      $region49: #{region_point_process.3} parent=39 // pred_check
        %p298 = pneg %p87
      $region50: #{region_point_process.3} parent=39 // pred_check_branch
        %300 = sbr.rel (%p298) target = $region52
      $region51: #{region_point_process.3} parent=39 // pred_region
        %p301 = scmp.lt.s32.totalorder %s15, 1
        %s302 = scalar_select %p301, %s15, 1
        %s303 = smul.addr %s302, 4
        %s304 = smul.addr %s303, 8
        %s305 = scalar_lea.vmem %s2, %s304
      $region52: #{region_point_process.3} parent=39 // pred_fallthru
        _
    $region40: #{region_point_process.3} parent=5 // pred_fallthru
      _
    %p306 = scmp.le.s32.totalorder 1, %s15
    %p307 = scmp.lt.s32.totalorder %s15, 3
    %p308 = pnand %p306, %p307
    %p309 = pneg %p308
    // Predicated region
    $region53: #{region_point_process.3} parent=5 // pred_check
      _
    $region54: #{region_point_process.3} parent=5 // pred_check_branch
      %311 = sbr.rel (%p308) target = $region56
    $region55: #{region_point_process.3} parent=5 // pred_region
      %s312 = ssub.s32 %s15, 1
      %p313 = scmp.lt.s32.totalorder %s20, 1
      %s314 = scalar_select %p313, %s20, 1
      %s315 = smul.addr %s314, 8
      %s316 = smul.addr %s315, 8
      %s317 = scalar_lea.vmem %s0, %s316
      %p318 = pneg %p41
      %p319 = pneg %p38
      %p320 = scmp.lt.s32.totalorder %s20, 1
      %s321 = scalar_select %p320, %s20, 1
      %s322 = smul.addr %s321, 8
      %s323 = smul.addr %s322, 8
      %s324 = scalar_lea.vmem %s1, %s323
      %p325 = pneg %p67
      %p326 = pneg %p64
      %p327 = scmp.lt.s32.totalorder %s20, 1
      %s328 = scalar_select %p327, %s20, 1
      %s329 = smul.addr %s328, 4
      %s330 = smul.addr %s329, 8
      %s331 = scalar_lea.vmem %s2, %s330
      %p332 = pneg %p93
      %p333 = pneg %p90
      %p334 = pneg %p114
      %p335 = pneg %p111
      %p336 = pneg %p135
      %p337 = pneg %p132
      %p338 = pneg %p156
      %p339 = pneg %p153
      %p340 = pneg %p177
      %p341 = pneg %p174
      %p342 = pneg %p198
      %p343 = pneg %p195
      %p344 = pneg %p219
      %p345 = pneg %p216
      %p346 = pneg %p245
      %p347 = pneg %p242
      %p348 = scmp.lt.s32.totalorder %s20, 1
      %s349 = scalar_select %p348, %s20, 1
      %s350 = smul.addr %s349, 8
      %s351 = smul.addr %s350, 8
      %s352 = scalar_lea.vmem %s9, %s351
      %p353 = scmp.lt.s32.totalorder %s20, 1
      %s354 = scalar_select %p353, %s20, 1
      %s355 = smul.addr %s354, 8
      %s356 = smul.addr %s355, 8
      %s357 = scalar_lea.vmem %s0, %s356
      %p358 = scmp.lt.s32.totalorder %s20, 1
      %s359 = scalar_select %p358, %s20, 1
      %s360 = smul.addr %s359, 8
      %s361 = smul.addr %s360, 8
      %s362 = scalar_lea.vmem %s1, %s361
      %p363 = scmp.lt.s32.totalorder %s20, 1
      %s364 = scalar_select %p363, %s20, 1
      %s365 = smul.addr %s364, 4
      %s366 = smul.addr %s365, 8
      %s367 = scalar_lea.vmem %s2, %s366
      %p368 = scmp.lt.s32.totalorder %s20, 1
      %s369 = scalar_select %p368, %s20, 1
      %s370 = smul.addr %s369, 8
      %s371 = smul.addr %s370, 8
      %s372 = scalar_lea.vmem %s9, %s371
      %v374 = vld [vmem:[%s357] sm:$0xff]
      %v375 = vld [vmem:[%s357 + $0x8] sm:$0xff]
      %v376 = vld [vmem:[%s357 + $0x10] sm:$0xff]
      %v377 = vld [vmem:[%s357 + $0x18] sm:$0xff]
      %v378 = vld [vmem:[%s357 + $0x20] sm:$0xff]
      %v379 = vld [vmem:[%s357 + $0x28] sm:$0xff]
      %v380 = vld [vmem:[%s357 + $0x30] sm:$0xff]
      %v381 = vld [vmem:[%s357 + $0x38] sm:$0xff]
      %v382 = vld [vmem:[%s362] sm:$0xff]
      %v383 = vld [vmem:[%s362 + $0x8] sm:$0xff]
      %v384 = vld [vmem:[%s362 + $0x10] sm:$0xff]
      %v385 = vld [vmem:[%s362 + $0x18] sm:$0xff]
      %v386 = vld [vmem:[%s362 + $0x20] sm:$0xff]
      %v387 = vld [vmem:[%s362 + $0x28] sm:$0xff]
      %v388 = vld [vmem:[%s362 + $0x30] sm:$0xff]
      %v389 = vld [vmem:[%s362 + $0x38] sm:$0xff]
      %v390 = vld [vmem:[%s367] sm:$0xff]
      %v391 = vld [vmem:[%s367 + $0x8] sm:$0xff]
      %v392 = vld [vmem:[%s367 + $0x10] sm:$0xff]
      %v393 = vld [vmem:[%s367 + $0x18] sm:$0xff]
      %v394 = vlaneseq
      %v395 = vand.u32 %v394, 127
      %v396 = vadd.s32 %v395, 128
      %397 = vset.pattern.permute.xlu0 0
      %398 = vperm.xlu0 %397, %v382
      %v399 = vpop.permute.xlu0 %398
      %400 = vset.pattern.permute.xlu0 0
      %401 = vperm.xlu0 %400, %v383
      %v402 = vpop.permute.xlu0 %401
      %403 = vset.pattern.permute.xlu0 0
      %404 = vperm.xlu0 %403, %v384
      %v405 = vpop.permute.xlu0 %404
      %406 = vset.pattern.permute.xlu0 0
      %407 = vperm.xlu0 %406, %v385
      %v408 = vpop.permute.xlu0 %407
      %409 = vset.pattern.permute.xlu0 0
      %410 = vperm.xlu0 %409, %v386
      %v411 = vpop.permute.xlu0 %410
      %412 = vset.pattern.permute.xlu0 0
      %413 = vperm.xlu0 %412, %v387
      %v414 = vpop.permute.xlu0 %413
      %415 = vset.pattern.permute.xlu0 0
      %416 = vperm.xlu0 %415, %v388
      %v417 = vpop.permute.xlu0 %416
      %418 = vset.pattern.permute.xlu0 0
      %419 = vperm.xlu0 %418, %v389
      %v420 = vpop.permute.xlu0 %419
      %vm421 = vcmp.eq.s32.totalorder %v395, %v399
      %vm422 = vcmp.eq.s32.totalorder %v396, %v399
      %vm423 = vcmp.eq.s32.totalorder %v395, %v402
      %vm424 = vcmp.eq.s32.totalorder %v396, %v402
      %vm425 = vcmp.eq.s32.totalorder %v395, %v405
      %vm426 = vcmp.eq.s32.totalorder %v396, %v405
      %vm427 = vcmp.eq.s32.totalorder %v395, %v408
      %vm428 = vcmp.eq.s32.totalorder %v396, %v408
      %vm429 = vcmp.eq.s32.totalorder %v395, %v411
      %vm430 = vcmp.eq.s32.totalorder %v396, %v411
      %vm431 = vcmp.eq.s32.totalorder %v395, %v414
      %vm432 = vcmp.eq.s32.totalorder %v396, %v414
      %vm433 = vcmp.eq.s32.totalorder %v395, %v417
      %vm434 = vcmp.eq.s32.totalorder %v396, %v417
      %vm435 = vcmp.eq.s32.totalorder %v395, %v420
      %vm436 = vcmp.eq.s32.totalorder %v396, %v420
      %v437 = vsel %vm421, 1, 0
      %v438 = vsel %vm422, 1, 0
      %v439 = vsel %vm423, 1, 0
      %v440 = vsel %vm424, 1, 0
      %v441 = vsel %vm425, 1, 0
      %v442 = vsel %vm426, 1, 0
      %v443 = vsel %vm427, 1, 0
      %v444 = vsel %vm428, 1, 0
      %v445 = vsel %vm429, 1, 0
      %v446 = vsel %vm430, 1, 0
      %v447 = vsel %vm431, 1, 0
      %v448 = vsel %vm432, 1, 0
      %v449 = vsel %vm433, 1, 0
      %v450 = vsel %vm434, 1, 0
      %v451 = vsel %vm435, 1, 0
      %v452 = vsel %vm436, 1, 0
      %v453 = vcvt.s32.f32 %v437
      %v454 = vcvt.s32.f32 %v438
      %v455 = vcvt.s32.f32 %v439
      %v456 = vcvt.s32.f32 %v440
      %v457 = vcvt.s32.f32 %v441
      %v458 = vcvt.s32.f32 %v442
      %v459 = vcvt.s32.f32 %v443
      %v460 = vcvt.s32.f32 %v444
      %v461 = vcvt.s32.f32 %v445
      %v462 = vcvt.s32.f32 %v446
      %v463 = vcvt.s32.f32 %v447
      %v464 = vcvt.s32.f32 %v448
      %v465 = vcvt.s32.f32 %v449
      %v466 = vcvt.s32.f32 %v450
      %v467 = vcvt.s32.f32 %v451
      %v468 = vcvt.s32.f32 %v452
      %469 = vset.pattern.permute.xlu0 0
      %470 = vperm.xlu0 %469, %v390
      %v471 = vpop.permute.xlu0 %470
      %472 = vset.pattern.permute.xlu0 0
      %473 = vperm.xlu0 %472, %v391
      %v474 = vpop.permute.xlu0 %473
      %475 = vset.pattern.permute.xlu0 0
      %476 = vperm.xlu0 %475, %v392
      %v477 = vpop.permute.xlu0 %476
      %478 = vset.pattern.permute.xlu0 0
      %479 = vperm.xlu0 %478, %v393
      %v480 = vpop.permute.xlu0 %479
      %vm481 = vcmp.eq.s32.totalorder %v395, %v471
      %vm482 = vcmp.eq.s32.totalorder %v396, %v471
      %vm483 = vcmp.eq.s32.totalorder %v395, %v474
      %vm484 = vcmp.eq.s32.totalorder %v396, %v474
      %vm485 = vcmp.eq.s32.totalorder %v395, %v477
      %vm486 = vcmp.eq.s32.totalorder %v396, %v477
      %vm487 = vcmp.eq.s32.totalorder %v395, %v480
      %vm488 = vcmp.eq.s32.totalorder %v396, %v480
      %v489 = vsel %vm481, 1, 0
      %v490 = vsel %vm482, 1, 0
      %v491 = vsel %vm483, 1, 0
      %v492 = vsel %vm484, 1, 0
      %v493 = vsel %vm485, 1, 0
      %v494 = vsel %vm486, 1, 0
      %v495 = vsel %vm487, 1, 0
      %v496 = vsel %vm488, 1, 0
      %v497 = vcvt.s32.f32 %v489
      %v498 = vcvt.s32.f32 %v490
      %v499 = vcvt.s32.f32 %v491
      %v500 = vcvt.s32.f32 %v492
      %v501 = vcvt.s32.f32 %v493
      %v502 = vcvt.s32.f32 %v494
      %v503 = vcvt.s32.f32 %v495
      %v504 = vcvt.s32.f32 %v496
      %505 = vmatprep.subr.mxu0 %v375
      %506 = vmatpush1.xpose.msra.mxu0 %v374
      %507 = vmatprep.subr.mxu0 %v377
      %508 = vmatpush1.xpose.msra.mxu0 %v376
      %509 = vmatprep.subr.mxu0 %v379
      %510 = vmatpush1.xpose.msra.mxu0 %v378
      %511 = vmatprep.subr.mxu0 %v381
      %512 = vmatpush1.xpose.msra.mxu0 %v380
      %513 = vmatprep.subr.mxu0 0.0
      %514 = vmatpush1.xpose.msra.mxu0 0.0
      %515 = vmatprep.subr.mxu0 0.0
      %516 = vmatpush1.xpose.msra.mxu0 0.0
      %517 = vmatprep.subr.mxu0 0.0
      %518 = vmatpush1.xpose.msra.mxu0 0.0
      %519 = vmatprep.subr.mxu0 0.0
      %520 = vmatpush1.xpose.msra.mxu0 0.0
      %521 = vmatprep.subr.mxu0 0.0
      %522 = vmatpush1.xpose.msra.mxu0 0.0
      %523 = vmatprep.subr.mxu0 0.0
      %524 = vmatpush1.xpose.msra.mxu0 0.0
      %525 = vmatprep.subr.mxu0 0.0
      %526 = vmatpush1.xpose.msra.mxu0 0.0
      %527 = vmatprep.subr.mxu0 0.0
      %528 = vmatpush1.xpose.msra.mxu0 0.0
      %529 = vmatprep.subr.mxu0 0.0
      %530 = vmatpush1.xpose.msra.mxu0 0.0
      %531 = vmatprep.subr.mxu0 0.0
      %532 = vmatpush1.xpose.msra.mxu0 0.0
      %533 = vmatprep.subr.mxu0 0.0
      %534 = vmatpush1.xpose.msra.mxu0 0.0
      %535 = vmatprep.subr.mxu0 0.0
      %536 = vmatpush1.xpose.msra.mxu0 0.0
      %537 = vmatprep.subr.mxu0 0.0
      %538 = vmatpush1.xpose.msra.mxu0 0.0
      %539 = vmatprep.subr.mxu0 0.0
      %540 = vmatpush1.xpose.msra.mxu0 0.0
      %541 = vmatprep.subr.mxu0 0.0
      %542 = vmatpush1.xpose.msra.mxu0 0.0
      %543 = vmatprep.subr.mxu0 0.0
      %544 = vmatpush1.xpose.msra.mxu0 0.0
      %545 = vmatprep.subr.mxu0 0.0
      %546 = vmatpush1.xpose.msra.mxu0 0.0
      %547 = vmatprep.subr.mxu0 0.0
      %548 = vmatpush1.xpose.msra.mxu0 0.0
      %549 = vmatprep.subr.mxu0 0.0
      %550 = vmatpush1.xpose.msra.mxu0 0.0
      %551 = vmatprep.subr.mxu0 0.0
      %552 = vmatpush1.xpose.msra.mxu0 0.0
      %553 = vmatprep.subr.mxu0 0.0
      %554 = vmatpush1.xpose.msra.mxu0 0.0
      %555 = vmatprep.subr.mxu0 0.0
      %556 = vmatpush1.xpose.msra.mxu0 0.0
      %557 = vmatprep.subr.mxu0 0.0
      %558 = vmatpush1.xpose.msra.mxu0 0.0
      %559 = vmatprep.subr.mxu0 0.0
      %560 = vmatpush1.xpose.msra.mxu0 0.0
      %561 = vmatprep.subr.mxu0 0.0
      %562 = vmatpush1.xpose.msra.mxu0 0.0
      %563 = vmatprep.subr.mxu0 0.0
      %564 = vmatpush1.xpose.msra.mxu0 0.0
      %565 = vmatprep.subr.mxu0 0.0
      %566 = vmatpush1.xpose.msra.mxu0 0.0
      %567 = vmatprep.subr.mxu0 0.0
      %568 = vmatpush1.xpose.msra.mxu0 0.0
      %569 = vmatprep.mubr.f32.mxu0 %v454
      %570 = vmatmul.mubr.f32.gmra.mrb[0].mxu0 %v453
      %v571 = vpop.f32.mrb[0].mxu0
      %v572 = vadd.f32 0.0, %v571
      %v573 = vpop.f32.mrb[0].mxu0
      %574 = vmatprep.mubr.f32.mxu0 %v456
      %575 = vmatmul.mubr.f32.gmra.mrb[0].mxu0 %v455
      %v576 = vpop.f32.mrb[0].mxu0
      %v577 = vadd.f32 0.0, %v576
      %v578 = vpop.f32.mrb[0].mxu0
      %579 = vmatprep.mubr.f32.mxu0 %v458
      %580 = vmatmul.mubr.f32.gmra.mrb[0].mxu0 %v457
      %v581 = vpop.f32.mrb[0].mxu0
      %v582 = vadd.f32 0.0, %v581
      %v583 = vpop.f32.mrb[0].mxu0
      %584 = vmatprep.mubr.f32.mxu0 %v460
      %585 = vmatmul.mubr.f32.gmra.mrb[0].mxu0 %v459
      %v586 = vpop.f32.mrb[0].mxu0
      %v587 = vadd.f32 0.0, %v586
      %v588 = vpop.f32.mrb[0].mxu0
      %589 = vmatprep.mubr.f32.mxu0 %v462
      %590 = vmatmul.mubr.f32.gmra.mrb[0].mxu0 %v461
      %v591 = vpop.f32.mrb[0].mxu0
      %v592 = vadd.f32 0.0, %v591
      %v593 = vpop.f32.mrb[0].mxu0
      %594 = vmatprep.mubr.f32.mxu0 %v464
      %595 = vmatmul.mubr.f32.gmra.mrb[0].mxu0 %v463
      %v596 = vpop.f32.mrb[0].mxu0
      %v597 = vadd.f32 0.0, %v596
      %v598 = vpop.f32.mrb[0].mxu0
      %599 = vmatprep.mubr.f32.mxu0 %v466
      %600 = vmatmul.mubr.f32.gmra.mrb[0].mxu0 %v465
      %v601 = vpop.f32.mrb[0].mxu0
      %v602 = vadd.f32 0.0, %v601
      %v603 = vpop.f32.mrb[0].mxu0
      %604 = vmatprep.mubr.f32.mxu0 %v468
      %605 = vmatmul.mubr.f32.gmra.mrb[0].mxu0 %v467
      %v606 = vpop.f32.mrb[0].mxu0
      %v607 = vadd.f32 0.0, %v606
      %v608 = vpop.f32.mrb[0].mxu0
      %609 = vdwg.mxu0
      %610 = vmatprep.subr.mxu0 %v375
      %611 = vmatpush1.xpose.msra.mxu0 %v374
      %612 = vmatprep.subr.mxu0 %v377
      %613 = vmatpush1.xpose.msra.mxu0 %v376
      %614 = vmatprep.subr.mxu0 %v379
      %615 = vmatpush1.xpose.msra.mxu0 %v378
      %616 = vmatprep.subr.mxu0 %v381
      %617 = vmatpush1.xpose.msra.mxu0 %v380
      %618 = vmatprep.subr.mxu0 0.0
      %619 = vmatpush1.xpose.msra.mxu0 0.0
      %620 = vmatprep.subr.mxu0 0.0
      %621 = vmatpush1.xpose.msra.mxu0 0.0
      %622 = vmatprep.subr.mxu0 0.0
      %623 = vmatpush1.xpose.msra.mxu0 0.0
      %624 = vmatprep.subr.mxu0 0.0
      %625 = vmatpush1.xpose.msra.mxu0 0.0
      %626 = vmatprep.subr.mxu0 0.0
      %627 = vmatpush1.xpose.msra.mxu0 0.0
      %628 = vmatprep.subr.mxu0 0.0
      %629 = vmatpush1.xpose.msra.mxu0 0.0
      %630 = vmatprep.subr.mxu0 0.0
      %631 = vmatpush1.xpose.msra.mxu0 0.0
      %632 = vmatprep.subr.mxu0 0.0
      %633 = vmatpush1.xpose.msra.mxu0 0.0
      %634 = vmatprep.subr.mxu0 0.0
      %635 = vmatpush1.xpose.msra.mxu0 0.0
      %636 = vmatprep.subr.mxu0 0.0
      %637 = vmatpush1.xpose.msra.mxu0 0.0
      %638 = vmatprep.subr.mxu0 0.0
      %639 = vmatpush1.xpose.msra.mxu0 0.0
      %640 = vmatprep.subr.mxu0 0.0
      %641 = vmatpush1.xpose.msra.mxu0 0.0
      %642 = vmatprep.subr.mxu0 0.0
      %643 = vmatpush1.xpose.msra.mxu0 0.0
      %644 = vmatprep.subr.mxu0 0.0
      %645 = vmatpush1.xpose.msra.mxu0 0.0
      %646 = vmatprep.subr.mxu0 0.0
      %647 = vmatpush1.xpose.msra.mxu0 0.0
      %648 = vmatprep.subr.mxu0 0.0
      %649 = vmatpush1.xpose.msra.mxu0 0.0
      %650 = vmatprep.subr.mxu0 0.0
      %651 = vmatpush1.xpose.msra.mxu0 0.0
      %652 = vmatprep.subr.mxu0 0.0
      %653 = vmatpush1.xpose.msra.mxu0 0.0
      %654 = vmatprep.subr.mxu0 0.0
      %655 = vmatpush1.xpose.msra.mxu0 0.0
      %656 = vmatprep.subr.mxu0 0.0
      %657 = vmatpush1.xpose.msra.mxu0 0.0
      %658 = vmatprep.subr.mxu0 0.0
      %659 = vmatpush1.xpose.msra.mxu0 0.0
      %660 = vmatprep.subr.mxu0 0.0
      %661 = vmatpush1.xpose.msra.mxu0 0.0
      %662 = vmatprep.subr.mxu0 0.0
      %663 = vmatpush1.xpose.msra.mxu0 0.0
      %664 = vmatprep.subr.mxu0 0.0
      %665 = vmatpush1.xpose.msra.mxu0 0.0
      %666 = vmatprep.subr.mxu0 0.0
      %667 = vmatpush1.xpose.msra.mxu0 0.0
      %668 = vmatprep.subr.mxu0 0.0
      %669 = vmatpush1.xpose.msra.mxu0 0.0
      %670 = vmatprep.subr.mxu0 0.0
      %671 = vmatpush1.xpose.msra.mxu0 0.0
      %672 = vmatprep.subr.mxu0 0.0
      %673 = vmatpush1.xpose.msra.mxu0 0.0
      %674 = vmatprep.mubr.f32.mxu0 %v498
      %675 = vmatmul.mubr.f32.gmra.mrb[0].mxu0 %v497
      %v676 = vpop.f32.mrb[0].mxu0
      %v677 = vadd.f32 0.0, %v676
      %v678 = vpop.f32.mrb[0].mxu0
      %679 = vmatprep.mubr.f32.mxu0 %v500
      %680 = vmatmul.mubr.f32.gmra.mrb[0].mxu0 %v499
      %v681 = vpop.f32.mrb[0].mxu0
      %v682 = vadd.f32 0.0, %v681
      %v683 = vpop.f32.mrb[0].mxu0
      %684 = vmatprep.mubr.f32.mxu0 %v502
      %685 = vmatmul.mubr.f32.gmra.mrb[0].mxu0 %v501
      %v686 = vpop.f32.mrb[0].mxu0
      %v687 = vadd.f32 0.0, %v686
      %v688 = vpop.f32.mrb[0].mxu0
      %689 = vmatprep.mubr.f32.mxu0 %v504
      %690 = vmatmul.mubr.f32.gmra.mrb[0].mxu0 %v503
      %v691 = vpop.f32.mrb[0].mxu0
      %v692 = vadd.f32 0.0, %v691
      %v693 = vpop.f32.mrb[0].mxu0
      %694 = vdwg.mxu0
      %v695 = vld [vmem:[%s7] sm:$0x1]
      %v696 = vld [vmem:[%s7 + $0x1] sm:$0x1]
      %v697 = vld [vmem:[%s7 + $0x2] sm:$0x1]
      %v698 = vld [vmem:[%s7 + $0x3] sm:$0x1]
      %v699 = vld [vmem:[%s7 + $0x4] sm:$0x1]
      %v700 = vld [vmem:[%s7 + $0x5] sm:$0x1]
      %vm701 = vcmask 261120
      %v702 = vsel %vm701, %v572, 0.0
      %703 = vadd.xlane.f32.xlu0 %v702
      %v704 = vpop.xlane.xlu0 %703
      %v705 = vsel %vm701, %v577, 0.0
      %706 = vadd.xlane.f32.xlu0 %v705
      %v707 = vpop.xlane.xlu0 %706
      %v708 = vsel %vm701, %v582, 0.0
      %709 = vadd.xlane.f32.xlu0 %v708
      %v710 = vpop.xlane.xlu0 %709
      %v711 = vsel %vm701, %v587, 0.0
      %712 = vadd.xlane.f32.xlu0 %v711
      %v713 = vpop.xlane.xlu0 %712
      %v714 = vsel %vm701, %v592, 0.0
      %715 = vadd.xlane.f32.xlu0 %v714
      %v716 = vpop.xlane.xlu0 %715
      %v717 = vsel %vm701, %v597, 0.0
      %718 = vadd.xlane.f32.xlu0 %v717
      %v719 = vpop.xlane.xlu0 %718
      %v720 = vsel %vm701, %v602, 0.0
      %721 = vadd.xlane.f32.xlu0 %v720
      %v722 = vpop.xlane.xlu0 %721
      %v723 = vsel %vm701, %v607, 0.0
      %724 = vadd.xlane.f32.xlu0 %v723
      %v725 = vpop.xlane.xlu0 %724
      %v726 = vrcp.pop 32.0
      %v727 = vmul.f32 %v704, %v726
      %v728 = vmul.f32 %v707, %v726
      %v729 = vmul.f32 %v710, %v726
      %v730 = vmul.f32 %v713, %v726
      %v731 = vmul.f32 %v716, %v726
      %v732 = vmul.f32 %v719, %v726
      %v733 = vmul.f32 %v722, %v726
      %v734 = vmul.f32 %v725, %v726
      %v735 = vsub.f32 %v572, %v727
      %v736 = vsub.f32 %v577, %v728
      %v737 = vsub.f32 %v582, %v729
      %v738 = vsub.f32 %v587, %v730
      %v739 = vsub.f32 %v592, %v731
      %v740 = vsub.f32 %v597, %v732
      %v741 = vsub.f32 %v602, %v733
      %v742 = vsub.f32 %v607, %v734
      %v743 = vmul.f32 %v735, %v735
      %v744 = vmul.f32 %v736, %v736
      %v745 = vmul.f32 %v737, %v737
      %v746 = vmul.f32 %v738, %v738
      %v747 = vmul.f32 %v739, %v739
      %v748 = vmul.f32 %v740, %v740
      %v749 = vmul.f32 %v741, %v741
      %v750 = vmul.f32 %v742, %v742
      %v751 = vsel %vm701, %v743, 0.0
      %752 = vadd.xlane.f32.xlu0 %v751
      %v753 = vpop.xlane.xlu0 %752
      %v754 = vsel %vm701, %v744, 0.0
      %755 = vadd.xlane.f32.xlu0 %v754
      %v756 = vpop.xlane.xlu0 %755
      %v757 = vsel %vm701, %v745, 0.0
      %758 = vadd.xlane.f32.xlu0 %v757
      %v759 = vpop.xlane.xlu0 %758
      %v760 = vsel %vm701, %v746, 0.0
      %761 = vadd.xlane.f32.xlu0 %v760
      %v762 = vpop.xlane.xlu0 %761
      %v763 = vsel %vm701, %v747, 0.0
      %764 = vadd.xlane.f32.xlu0 %v763
      %v765 = vpop.xlane.xlu0 %764
      %v766 = vsel %vm701, %v748, 0.0
      %767 = vadd.xlane.f32.xlu0 %v766
      %v768 = vpop.xlane.xlu0 %767
      %v769 = vsel %vm701, %v749, 0.0
      %770 = vadd.xlane.f32.xlu0 %v769
      %v771 = vpop.xlane.xlu0 %770
      %v772 = vsel %vm701, %v750, 0.0
      %773 = vadd.xlane.f32.xlu0 %v772
      %v774 = vpop.xlane.xlu0 %773
      %v775 = vmul.f32 %v753, %v726
      %v776 = vmul.f32 %v756, %v726
      %v777 = vmul.f32 %v759, %v726
      %v778 = vmul.f32 %v762, %v726
      %v779 = vmul.f32 %v765, %v726
      %v780 = vmul.f32 %v768, %v726
      %v781 = vmul.f32 %v771, %v726
      %v782 = vmul.f32 %v774, %v726
      %v783 = vadd.f32 %v775, 1e-05
      %v784 = vadd.f32 %v776, 1e-05
      %v785 = vadd.f32 %v777, 1e-05
      %v786 = vadd.f32 %v778, 1e-05
      %v787 = vadd.f32 %v779, 1e-05
      %v788 = vadd.f32 %v780, 1e-05
      %v789 = vadd.f32 %v781, 1e-05
      %v790 = vadd.f32 %v782, 1e-05
      %v791 = vrsqrt.pop %v783
      %v792 = vrsqrt.pop %v784
      %v793 = vrsqrt.pop %v785
      %v794 = vrsqrt.pop %v786
      %v795 = vrsqrt.pop %v787
      %v796 = vrsqrt.pop %v788
      %v797 = vrsqrt.pop %v789
      %v798 = vrsqrt.pop %v790
      %v799 = vmul.f32 %v735, %v791
      %v800 = vmul.f32 %v736, %v792
      %v801 = vmul.f32 %v737, %v793
      %v802 = vmul.f32 %v738, %v794
      %v803 = vmul.f32 %v739, %v795
      %v804 = vmul.f32 %v740, %v796
      %v805 = vmul.f32 %v741, %v797
      %v806 = vmul.f32 %v742, %v798
      %v807 = vlaneseq
      %v808 = vshrl.u32 %v807, 7
      %v809 = vsub.s32 0, %v808
      %v810 = vrot.slane %v695, %v809
      %v811 = vmul.f32 %v799, %v810
      %v812 = vmul.f32 %v800, %v810
      %v813 = vmul.f32 %v801, %v810
      %v814 = vmul.f32 %v802, %v810
      %v815 = vmul.f32 %v803, %v810
      %v816 = vmul.f32 %v804, %v810
      %v817 = vmul.f32 %v805, %v810
      %v818 = vmul.f32 %v806, %v810
      %v819 = vlaneseq
      %v820 = vshrl.u32 %v819, 7
      %v821 = vsub.s32 0, %v820
      %v822 = vrot.slane %v696, %v821
      %v823 = vadd.f32 %v811, %v822
      %v824 = vadd.f32 %v812, %v822
      %v825 = vadd.f32 %v813, %v822
      %v826 = vadd.f32 %v814, %v822
      %v827 = vadd.f32 %v815, %v822
      %v828 = vadd.f32 %v816, %v822
      %v829 = vadd.f32 %v817, %v822
      %v830 = vadd.f32 %v818, %v822
      %v831 = vld [vmem:[%s3] sm:$0xf]
      %v832 = vld [vmem:[%s3 + $0x4] sm:$0xf]
      %v833 = vld [vmem:[%s3 + $0x8] sm:$0xf]
      %v834 = vld [vmem:[%s3 + $0xc] sm:$0xf]
      %v835 = vpack.c.bf16 %v824, %v823
      %v836 = vpack.c.bf16 %v826, %v825
      %v837 = vpack.c.bf16 %v828, %v827
      %v838 = vpack.c.bf16 %v830, %v829
      %v843 = vunpack.c.l.b16 %v831
      %v844 = vunpack.c.l.b16 %v832
      %v845 = vunpack.c.l.b16 %v833
      %v846 = vunpack.c.l.b16 %v834
      %v847 = vpack.c.b16 %v844, %v843
      %v848 = vpack.c.b16 %v846, %v845
      %v852 = vsel %vm701, %v835, 0
      %v855 = vsel %vm701, %v836, 0
      %v858 = vsel %vm701, %v837, 0
      %v861 = vsel %vm701, %v838, 0
      %863 = vmatprep.subr.bf16.mxu0 0
      %864 = vmatpush1.bf16.msra.mxu0 %v847
      %865 = vmatprep.subr.bf16.mxu0 0
      %866 = vmatpush1.bf16.msra.mxu0 %v848
      %867 = vmatprep.subr.bf16.mxu0 0
      %868 = vmatpush1.bf16.msra.mxu0 0
      %869 = vmatprep.subr.bf16.mxu0 0
      %870 = vmatpush1.bf16.msra.mxu0 0
      %871 = vmatprep.subr.bf16.mxu0 0
      %872 = vmatpush1.bf16.msra.mxu0 0
      %873 = vmatprep.subr.bf16.mxu0 0
      %874 = vmatpush1.bf16.msra.mxu0 0
      %875 = vmatprep.subr.bf16.mxu0 0
      %876 = vmatpush1.bf16.msra.mxu0 0
      %877 = vmatprep.subr.bf16.mxu0 0
      %878 = vmatpush1.bf16.msra.mxu0 0
      %879 = vmatprep.subr.bf16.mxu0 0
      %880 = vmatpush1.bf16.msra.mxu0 0
      %881 = vmatprep.subr.bf16.mxu0 0
      %882 = vmatpush1.bf16.msra.mxu0 0
      %883 = vmatprep.subr.bf16.mxu0 0
      %884 = vmatpush1.bf16.msra.mxu0 0
      %885 = vmatprep.subr.bf16.mxu0 0
      %886 = vmatpush1.bf16.msra.mxu0 0
      %887 = vmatprep.subr.bf16.mxu0 0
      %888 = vmatpush1.bf16.msra.mxu0 0
      %889 = vmatprep.subr.bf16.mxu0 0
      %890 = vmatpush1.bf16.msra.mxu0 0
      %891 = vmatprep.subr.bf16.mxu0 0
      %892 = vmatpush1.bf16.msra.mxu0 0
      %893 = vmatprep.subr.bf16.mxu0 0
      %894 = vmatpush1.bf16.msra.mxu0 0
      %895 = vmatprep.mubr.bf16.mxu0 0
      %896 = vmatmul.mubr.bf16.gmra.mrb[0].mxu0 %v852
      %v897 = vpop.f32.mrb[0].mxu0
      %v898 = vadd.f32 0.0, %v897
      %v899 = vpop.f32.mrb[0].mxu0
      %v900 = vpop.f32.mrb[0].mxu0
      %v901 = vadd.f32 0.0, %v900
      %v902 = vpop.f32.mrb[0].mxu0
      %903 = vmatprep.mubr.bf16.mxu0 0
      %904 = vmatmul.mubr.bf16.gmra.mrb[0].mxu0 %v855
      %v905 = vpop.f32.mrb[0].mxu0
      %v906 = vadd.f32 0.0, %v905
      %v907 = vpop.f32.mrb[0].mxu0
      %v908 = vpop.f32.mrb[0].mxu0
      %v909 = vadd.f32 0.0, %v908
      %v910 = vpop.f32.mrb[0].mxu0
      %911 = vmatprep.mubr.bf16.mxu0 0
      %912 = vmatmul.mubr.bf16.gmra.mrb[0].mxu0 %v858
      %v913 = vpop.f32.mrb[0].mxu0
      %v914 = vadd.f32 0.0, %v913
      %v915 = vpop.f32.mrb[0].mxu0
      %v916 = vpop.f32.mrb[0].mxu0
      %v917 = vadd.f32 0.0, %v916
      %v918 = vpop.f32.mrb[0].mxu0
      %919 = vmatprep.mubr.bf16.mxu0 0
      %920 = vmatmul.mubr.bf16.gmra.mrb[0].mxu0 %v861
      %v921 = vpop.f32.mrb[0].mxu0
      %v922 = vadd.f32 0.0, %v921
      %v923 = vpop.f32.mrb[0].mxu0
      %v924 = vpop.f32.mrb[0].mxu0
      %v925 = vadd.f32 0.0, %v924
      %v926 = vpop.f32.mrb[0].mxu0
      %927 = vdwg.mxu0
      %v928 = vpack.c.bf16 %v682, %v677
      %v929 = vpack.c.bf16 %v692, %v687
      %930 = vrot.lane.b32.xlu0 %v847, 96
      %v931 = vpop.permute.xlu0 %930
      %932 = vrot.lane.b32.xlu0 %v848, 96
      %v933 = vpop.permute.xlu0 %932
      %v937 = vsel %vm701, %v928, 0
      %v940 = vsel %vm701, %v929, 0
      %942 = vmatprep.subr.bf16.mxu0 0
      %943 = vmatpush1.bf16.msra.mxu0 %v931
      %944 = vmatprep.subr.bf16.mxu0 0
      %945 = vmatpush1.bf16.msra.mxu0 %v933
      %946 = vmatprep.subr.bf16.mxu0 0
      %947 = vmatpush1.bf16.msra.mxu0 0
      %948 = vmatprep.subr.bf16.mxu0 0
      %949 = vmatpush1.bf16.msra.mxu0 0
      %950 = vmatprep.subr.bf16.mxu0 0
      %951 = vmatpush1.bf16.msra.mxu0 0
      %952 = vmatprep.subr.bf16.mxu0 0
      %953 = vmatpush1.bf16.msra.mxu0 0
      %954 = vmatprep.subr.bf16.mxu0 0
      %955 = vmatpush1.bf16.msra.mxu0 0
      %956 = vmatprep.subr.bf16.mxu0 0
      %957 = vmatpush1.bf16.msra.mxu0 0
      %958 = vmatprep.subr.bf16.mxu0 0
      %959 = vmatpush1.bf16.msra.mxu0 0
      %960 = vmatprep.subr.bf16.mxu0 0
      %961 = vmatpush1.bf16.msra.mxu0 0
      %962 = vmatprep.subr.bf16.mxu0 0
      %963 = vmatpush1.bf16.msra.mxu0 0
      %964 = vmatprep.subr.bf16.mxu0 0
      %965 = vmatpush1.bf16.msra.mxu0 0
      %966 = vmatprep.subr.bf16.mxu0 0
      %967 = vmatpush1.bf16.msra.mxu0 0
      %968 = vmatprep.subr.bf16.mxu0 0
      %969 = vmatpush1.bf16.msra.mxu0 0
      %970 = vmatprep.subr.bf16.mxu0 0
      %971 = vmatpush1.bf16.msra.mxu0 0
      %972 = vmatprep.subr.bf16.mxu0 0
      %973 = vmatpush1.bf16.msra.mxu0 0
      %974 = vmatprep.mubr.bf16.mxu0 0
      %975 = vmatmul.mubr.bf16.gmra.mrb[0].mxu0 %v937
      %v976 = vpop.f32.mrb[0].mxu0
      %v977 = vadd.f32 0.0, %v976
      %v978 = vpop.f32.mrb[0].mxu0
      %v979 = vpop.f32.mrb[0].mxu0
      %v980 = vadd.f32 0.0, %v979
      %v981 = vpop.f32.mrb[0].mxu0
      %982 = vmatprep.mubr.bf16.mxu0 0
      %983 = vmatmul.mubr.bf16.gmra.mrb[0].mxu0 %v940
      %v984 = vpop.f32.mrb[0].mxu0
      %v985 = vadd.f32 0.0, %v984
      %v986 = vpop.f32.mrb[0].mxu0
      %v987 = vpop.f32.mrb[0].mxu0
      %v988 = vadd.f32 0.0, %v987
      %v989 = vpop.f32.mrb[0].mxu0
      %990 = vdwg.mxu0
      %v991 = vpack.c.bf16 %v901, %v898
      %v992 = vpack.c.bf16 %v909, %v906
      %v993 = vpack.c.bf16 %v917, %v914
      %v994 = vpack.c.bf16 %v925, %v922
      %v995 = vpack.c.bf16 %v980, %v977
      %v996 = vpack.c.bf16 %v988, %v985
      %vm997 = vcmask 64512
      %v999 = vsel %vm997, %v991, 0
      %v1002 = vsel %vm997, %v992, 0
      %v1005 = vsel %vm997, %v993, 0
      %v1008 = vsel %vm997, %v994, 0
      %v1011 = vsel %vm997, %v995, 0
      %v1014 = vsel %vm997, %v996, 0
      %1016 = vmatprep.subr.bf16.mxu0 0
      %1017 = vmatpush1.bf16.xpose.msra.mxu0 %v1011
      %1018 = vmatprep.subr.bf16.mxu0 0
      %1019 = vmatpush1.bf16.xpose.msra.mxu0 %v1014
      %1020 = vmatprep.subr.bf16.mxu0 0
      %1021 = vmatpush1.bf16.xpose.msra.mxu0 0
      %1022 = vmatprep.subr.bf16.mxu0 0
      %1023 = vmatpush1.bf16.xpose.msra.mxu0 0
      %1024 = vmatprep.subr.bf16.mxu0 0
      %1025 = vmatpush1.bf16.xpose.msra.mxu0 0
      %1026 = vmatprep.subr.bf16.mxu0 0
      %1027 = vmatpush1.bf16.xpose.msra.mxu0 0
      %1028 = vmatprep.subr.bf16.mxu0 0
      %1029 = vmatpush1.bf16.xpose.msra.mxu0 0
      %1030 = vmatprep.subr.bf16.mxu0 0
      %1031 = vmatpush1.bf16.xpose.msra.mxu0 0
      %1032 = vmatprep.subr.bf16.mxu0 0
      %1033 = vmatpush1.bf16.xpose.msra.mxu0 0
      %1034 = vmatprep.subr.bf16.mxu0 0
      %1035 = vmatpush1.bf16.xpose.msra.mxu0 0
      %1036 = vmatprep.subr.bf16.mxu0 0
      %1037 = vmatpush1.bf16.xpose.msra.mxu0 0
      %1038 = vmatprep.subr.bf16.mxu0 0
      %1039 = vmatpush1.bf16.xpose.msra.mxu0 0
      %1040 = vmatprep.subr.bf16.mxu0 0
      %1041 = vmatpush1.bf16.xpose.msra.mxu0 0
      %1042 = vmatprep.subr.bf16.mxu0 0
      %1043 = vmatpush1.bf16.xpose.msra.mxu0 0
      %1044 = vmatprep.subr.bf16.mxu0 0
      %1045 = vmatpush1.bf16.xpose.msra.mxu0 0
      %1046 = vmatprep.subr.bf16.mxu0 0
      %1047 = vmatpush1.bf16.xpose.msra.mxu0 0
      %1048 = vmatprep.mubr.bf16.mxu0 0
      %1049 = vmatmul.mubr.bf16.gmra.mrb[0].mxu0 %v999
      %v1050 = vpop.f32.mrb[0].mxu0
      %v1051 = vadd.f32 0.0, %v1050
      %v1052 = vpop.f32.mrb[0].mxu0
      %v1053 = vpop.f32.mrb[0].mxu0
      %v1054 = vadd.f32 0.0, %v1053
      %v1055 = vpop.f32.mrb[0].mxu0
      %1056 = vmatprep.mubr.bf16.mxu0 0
      %1057 = vmatmul.mubr.bf16.gmra.mrb[0].mxu0 %v1002
      %v1058 = vpop.f32.mrb[0].mxu0
      %v1059 = vadd.f32 0.0, %v1058
      %v1060 = vpop.f32.mrb[0].mxu0
      %v1061 = vpop.f32.mrb[0].mxu0
      %v1062 = vadd.f32 0.0, %v1061
      %v1063 = vpop.f32.mrb[0].mxu0
      %1064 = vmatprep.mubr.bf16.mxu0 0
      %1065 = vmatmul.mubr.bf16.gmra.mrb[0].mxu0 %v1005
      %v1066 = vpop.f32.mrb[0].mxu0
      %v1067 = vadd.f32 0.0, %v1066
      %v1068 = vpop.f32.mrb[0].mxu0
      %v1069 = vpop.f32.mrb[0].mxu0
      %v1070 = vadd.f32 0.0, %v1069
      %v1071 = vpop.f32.mrb[0].mxu0
      %1072 = vmatprep.mubr.bf16.mxu0 0
      %1073 = vmatmul.mubr.bf16.gmra.mrb[0].mxu0 %v1008
      %v1074 = vpop.f32.mrb[0].mxu0
      %v1075 = vadd.f32 0.0, %v1074
      %v1076 = vpop.f32.mrb[0].mxu0
      %v1077 = vpop.f32.mrb[0].mxu0
      %v1078 = vadd.f32 0.0, %v1077
      %v1079 = vpop.f32.mrb[0].mxu0
      %1080 = vdwg.mxu0
      %v1081 = vmul.f32 %v1051, 0.35355338
      %v1082 = vmul.f32 %v1054, 0.35355338
      %v1083 = vmul.f32 %v1059, 0.35355338
      %v1084 = vmul.f32 %v1062, 0.35355338
      %v1085 = vmul.f32 %v1067, 0.35355338
      %v1086 = vmul.f32 %v1070, 0.35355338
      %v1087 = vmul.f32 %v1075, 0.35355338
      %v1088 = vmul.f32 %v1078, 0.35355338
      %v1089 = vsel %vm701, %v1081, -inf
      %1090 = vmax.xlane.f32.xlu0 %v1089
      %v1091 = vpop.xlane.xlu0 %1090
      %v1092 = vsel %vm701, %v1082, -inf
      %1093 = vmax.xlane.f32.xlu0 %v1092
      %v1094 = vpop.xlane.xlu0 %1093
      %v1095 = vsel %vm701, %v1083, -inf
      %1096 = vmax.xlane.f32.xlu0 %v1095
      %v1097 = vpop.xlane.xlu0 %1096
      %v1098 = vsel %vm701, %v1084, -inf
      %1099 = vmax.xlane.f32.xlu0 %v1098
      %v1100 = vpop.xlane.xlu0 %1099
      %v1101 = vsel %vm701, %v1085, -inf
      %1102 = vmax.xlane.f32.xlu0 %v1101
      %v1103 = vpop.xlane.xlu0 %1102
      %v1104 = vsel %vm701, %v1086, -inf
      %1105 = vmax.xlane.f32.xlu0 %v1104
      %v1106 = vpop.xlane.xlu0 %1105
      %v1107 = vsel %vm701, %v1087, -inf
      %1108 = vmax.xlane.f32.xlu0 %v1107
      %v1109 = vpop.xlane.xlu0 %1108
      %v1110 = vsel %vm701, %v1088, -inf
      %1111 = vmax.xlane.f32.xlu0 %v1110
      %v1112 = vpop.xlane.xlu0 %1111
      %v1113 = vsub.f32 %v1081, %v1091
      %v1114 = vsub.f32 %v1082, %v1094
      %v1115 = vsub.f32 %v1083, %v1097
      %v1116 = vsub.f32 %v1084, %v1100
      %v1117 = vsub.f32 %v1085, %v1103
      %v1118 = vsub.f32 %v1086, %v1106
      %v1119 = vsub.f32 %v1087, %v1109
      %v1120 = vsub.f32 %v1088, %v1112
      %v1121 = vmul.f32 %v1113, 1.442695
      %v1122 = vpow.pop %v1121
      %v1123 = vmul.f32 %v1114, 1.442695
      %v1124 = vpow.pop %v1123
      %v1125 = vmul.f32 %v1115, 1.442695
      %v1126 = vpow.pop %v1125
      %v1127 = vmul.f32 %v1116, 1.442695
      %v1128 = vpow.pop %v1127
      %v1129 = vmul.f32 %v1117, 1.442695
      %v1130 = vpow.pop %v1129
      %v1131 = vmul.f32 %v1118, 1.442695
      %v1132 = vpow.pop %v1131
      %v1133 = vmul.f32 %v1119, 1.442695
      %v1134 = vpow.pop %v1133
      %v1135 = vmul.f32 %v1120, 1.442695
      %v1136 = vpow.pop %v1135
      %v1137 = vsel %vm701, %v1122, 0.0
      %1138 = vadd.xlane.f32.xlu0 %v1137
      %v1139 = vpop.xlane.xlu0 %1138
      %v1140 = vsel %vm701, %v1124, 0.0
      %1141 = vadd.xlane.f32.xlu0 %v1140
      %v1142 = vpop.xlane.xlu0 %1141
      %v1143 = vsel %vm701, %v1126, 0.0
      %1144 = vadd.xlane.f32.xlu0 %v1143
      %v1145 = vpop.xlane.xlu0 %1144
      %v1146 = vsel %vm701, %v1128, 0.0
      %1147 = vadd.xlane.f32.xlu0 %v1146
      %v1148 = vpop.xlane.xlu0 %1147
      %v1149 = vsel %vm701, %v1130, 0.0
      %1150 = vadd.xlane.f32.xlu0 %v1149
      %v1151 = vpop.xlane.xlu0 %1150
      %v1152 = vsel %vm701, %v1132, 0.0
      %1153 = vadd.xlane.f32.xlu0 %v1152
      %v1154 = vpop.xlane.xlu0 %1153
      %v1155 = vsel %vm701, %v1134, 0.0
      %1156 = vadd.xlane.f32.xlu0 %v1155
      %v1157 = vpop.xlane.xlu0 %1156
      %v1158 = vsel %vm701, %v1136, 0.0
      %1159 = vadd.xlane.f32.xlu0 %v1158
      %v1160 = vpop.xlane.xlu0 %1159
      %v1161 = vrcp.pop %v1139
      %v1162 = vrcp.pop %v1142
      %v1163 = vrcp.pop %v1145
      %v1164 = vrcp.pop %v1148
      %v1165 = vrcp.pop %v1151
      %v1166 = vrcp.pop %v1154
      %v1167 = vrcp.pop %v1157
      %v1168 = vrcp.pop %v1160
      %v1169 = vmul.f32 %v1122, %v1161
      %v1170 = vmul.f32 %v1124, %v1162
      %v1171 = vmul.f32 %v1126, %v1163
      %v1172 = vmul.f32 %v1128, %v1164
      %v1173 = vmul.f32 %v1130, %v1165
      %v1174 = vmul.f32 %v1132, %v1166
      %v1175 = vmul.f32 %v1134, %v1167
      %v1176 = vmul.f32 %v1136, %v1168
      %v1177 = vpack.c.bf16 %v1170, %v1169
      %v1178 = vpack.c.bf16 %v1172, %v1171
      %v1179 = vpack.c.bf16 %v1174, %v1173
      %v1180 = vpack.c.bf16 %v1176, %v1175
      %1183 = vrot.lane.b32.xlu0 %v995, 96
      %v1184 = vpop.permute.xlu0 %1183
      %1185 = vrot.lane.b32.xlu0 %v996, 96
      %v1186 = vpop.permute.xlu0 %1185
      %v1190 = vsel %vm701, %v1177, 0
      %v1193 = vsel %vm701, %v1178, 0
      %v1196 = vsel %vm701, %v1179, 0
      %v1199 = vsel %vm701, %v1180, 0
      %1201 = vmatprep.subr.bf16.mxu0 0
      %1202 = vmatpush1.bf16.msra.mxu0 %v1184
      %1203 = vmatprep.subr.bf16.mxu0 0
      %1204 = vmatpush1.bf16.msra.mxu0 %v1186
      %1205 = vmatprep.subr.bf16.mxu0 0
      %1206 = vmatpush1.bf16.msra.mxu0 0
      %1207 = vmatprep.subr.bf16.mxu0 0
      %1208 = vmatpush1.bf16.msra.mxu0 0
      %1209 = vmatprep.subr.bf16.mxu0 0
      %1210 = vmatpush1.bf16.msra.mxu0 0
      %1211 = vmatprep.subr.bf16.mxu0 0
      %1212 = vmatpush1.bf16.msra.mxu0 0
      %1213 = vmatprep.subr.bf16.mxu0 0
      %1214 = vmatpush1.bf16.msra.mxu0 0
      %1215 = vmatprep.subr.bf16.mxu0 0
      %1216 = vmatpush1.bf16.msra.mxu0 0
      %1217 = vmatprep.subr.bf16.mxu0 0
      %1218 = vmatpush1.bf16.msra.mxu0 0
      %1219 = vmatprep.subr.bf16.mxu0 0
      %1220 = vmatpush1.bf16.msra.mxu0 0
      %1221 = vmatprep.subr.bf16.mxu0 0
      %1222 = vmatpush1.bf16.msra.mxu0 0
      %1223 = vmatprep.subr.bf16.mxu0 0
      %1224 = vmatpush1.bf16.msra.mxu0 0
      %1225 = vmatprep.subr.bf16.mxu0 0
      %1226 = vmatpush1.bf16.msra.mxu0 0
      %1227 = vmatprep.subr.bf16.mxu0 0
      %1228 = vmatpush1.bf16.msra.mxu0 0
      %1229 = vmatprep.subr.bf16.mxu0 0
      %1230 = vmatpush1.bf16.msra.mxu0 0
      %1231 = vmatprep.subr.bf16.mxu0 0
      %1232 = vmatpush1.bf16.msra.mxu0 0
      %1233 = vmatprep.mubr.bf16.mxu0 0
      %1234 = vmatmul.mubr.bf16.gmra.mrb[0].mxu0 %v1190
      %v1235 = vpop.f32.mrb[0].mxu0
      %v1236 = vadd.f32 0.0, %v1235
      %v1237 = vpop.f32.mrb[0].mxu0
      %v1238 = vpop.f32.mrb[0].mxu0
      %v1239 = vadd.f32 0.0, %v1238
      %v1240 = vpop.f32.mrb[0].mxu0
      %1241 = vmatprep.mubr.bf16.mxu0 0
      %1242 = vmatmul.mubr.bf16.gmra.mrb[0].mxu0 %v1193
      %v1243 = vpop.f32.mrb[0].mxu0
      %v1244 = vadd.f32 0.0, %v1243
      %v1245 = vpop.f32.mrb[0].mxu0
      %v1246 = vpop.f32.mrb[0].mxu0
      %v1247 = vadd.f32 0.0, %v1246
      %v1248 = vpop.f32.mrb[0].mxu0
      %1249 = vmatprep.mubr.bf16.mxu0 0
      %1250 = vmatmul.mubr.bf16.gmra.mrb[0].mxu0 %v1196
      %v1251 = vpop.f32.mrb[0].mxu0
      %v1252 = vadd.f32 0.0, %v1251
      %v1253 = vpop.f32.mrb[0].mxu0
      %v1254 = vpop.f32.mrb[0].mxu0
      %v1255 = vadd.f32 0.0, %v1254
      %v1256 = vpop.f32.mrb[0].mxu0
      %1257 = vmatprep.mubr.bf16.mxu0 0
      %1258 = vmatmul.mubr.bf16.gmra.mrb[0].mxu0 %v1199
      %v1259 = vpop.f32.mrb[0].mxu0
      %v1260 = vadd.f32 0.0, %v1259
      %v1261 = vpop.f32.mrb[0].mxu0
      %v1262 = vpop.f32.mrb[0].mxu0
      %v1263 = vadd.f32 0.0, %v1262
      %v1264 = vpop.f32.mrb[0].mxu0
      %1265 = vdwg.mxu0
      %1270 = vrot.lane.b32.xlu0 %v991, 120
      %v1271 = vpop.permute.xlu0 %1270
      %1272 = vrot.lane.b32.xlu0 %v992, 120
      %v1273 = vpop.permute.xlu0 %1272
      %1274 = vrot.lane.b32.xlu0 %v993, 120
      %v1275 = vpop.permute.xlu0 %1274
      %1276 = vrot.lane.b32.xlu0 %v994, 120
      %v1277 = vpop.permute.xlu0 %1276
      %1278 = vrot.lane.b32.xlu0 %v995, 120
      %v1279 = vpop.permute.xlu0 %1278
      %1280 = vrot.lane.b32.xlu0 %v996, 120
      %v1281 = vpop.permute.xlu0 %1280
      %v1283 = vsel %vm997, %v1271, 0
      %v1286 = vsel %vm997, %v1273, 0
      %v1289 = vsel %vm997, %v1275, 0
      %v1292 = vsel %vm997, %v1277, 0
      %v1295 = vsel %vm997, %v1279, 0
      %v1298 = vsel %vm997, %v1281, 0
      %1300 = vmatprep.subr.bf16.mxu0 0
      %1301 = vmatpush1.bf16.xpose.msra.mxu0 %v1295
      %1302 = vmatprep.subr.bf16.mxu0 0
      %1303 = vmatpush1.bf16.xpose.msra.mxu0 %v1298
      %1304 = vmatprep.subr.bf16.mxu0 0
      %1305 = vmatpush1.bf16.xpose.msra.mxu0 0
      %1306 = vmatprep.subr.bf16.mxu0 0
      %1307 = vmatpush1.bf16.xpose.msra.mxu0 0
      %1308 = vmatprep.subr.bf16.mxu0 0
      %1309 = vmatpush1.bf16.xpose.msra.mxu0 0
      %1310 = vmatprep.subr.bf16.mxu0 0
      %1311 = vmatpush1.bf16.xpose.msra.mxu0 0
      %1312 = vmatprep.subr.bf16.mxu0 0
      %1313 = vmatpush1.bf16.xpose.msra.mxu0 0
      %1314 = vmatprep.subr.bf16.mxu0 0
      %1315 = vmatpush1.bf16.xpose.msra.mxu0 0
      %1316 = vmatprep.subr.bf16.mxu0 0
      %1317 = vmatpush1.bf16.xpose.msra.mxu0 0
      %1318 = vmatprep.subr.bf16.mxu0 0
      %1319 = vmatpush1.bf16.xpose.msra.mxu0 0
      %1320 = vmatprep.subr.bf16.mxu0 0
      %1321 = vmatpush1.bf16.xpose.msra.mxu0 0
      %1322 = vmatprep.subr.bf16.mxu0 0
      %1323 = vmatpush1.bf16.xpose.msra.mxu0 0
      %1324 = vmatprep.subr.bf16.mxu0 0
      %1325 = vmatpush1.bf16.xpose.msra.mxu0 0
      %1326 = vmatprep.subr.bf16.mxu0 0
      %1327 = vmatpush1.bf16.xpose.msra.mxu0 0
      %1328 = vmatprep.subr.bf16.mxu0 0
      %1329 = vmatpush1.bf16.xpose.msra.mxu0 0
      %1330 = vmatprep.subr.bf16.mxu0 0
      %1331 = vmatpush1.bf16.xpose.msra.mxu0 0
      %1332 = vmatprep.mubr.bf16.mxu0 0
      %1333 = vmatmul.mubr.bf16.gmra.mrb[0].mxu0 %v1283
      %v1334 = vpop.f32.mrb[0].mxu0
      %v1335 = vadd.f32 0.0, %v1334
      %v1336 = vpop.f32.mrb[0].mxu0
      %v1337 = vpop.f32.mrb[0].mxu0
      %v1338 = vadd.f32 0.0, %v1337
      %v1339 = vpop.f32.mrb[0].mxu0
      %1340 = vmatprep.mubr.bf16.mxu0 0
      %1341 = vmatmul.mubr.bf16.gmra.mrb[0].mxu0 %v1286
      %v1342 = vpop.f32.mrb[0].mxu0
      %v1343 = vadd.f32 0.0, %v1342
      %v1344 = vpop.f32.mrb[0].mxu0
      %v1345 = vpop.f32.mrb[0].mxu0
      %v1346 = vadd.f32 0.0, %v1345
      %v1347 = vpop.f32.mrb[0].mxu0
      %1348 = vmatprep.mubr.bf16.mxu0 0
      %1349 = vmatmul.mubr.bf16.gmra.mrb[0].mxu0 %v1289
      %v1350 = vpop.f32.mrb[0].mxu0
      %v1351 = vadd.f32 0.0, %v1350
      %v1352 = vpop.f32.mrb[0].mxu0
      %v1353 = vpop.f32.mrb[0].mxu0
      %v1354 = vadd.f32 0.0, %v1353
      %v1355 = vpop.f32.mrb[0].mxu0
      %1356 = vmatprep.mubr.bf16.mxu0 0
      %1357 = vmatmul.mubr.bf16.gmra.mrb[0].mxu0 %v1292
      %v1358 = vpop.f32.mrb[0].mxu0
      %v1359 = vadd.f32 0.0, %v1358
      %v1360 = vpop.f32.mrb[0].mxu0
      %v1361 = vpop.f32.mrb[0].mxu0
      %v1362 = vadd.f32 0.0, %v1361
      %v1363 = vpop.f32.mrb[0].mxu0
      %1364 = vdwg.mxu0
      %v1365 = vmul.f32 %v1335, 0.35355338
      %v1366 = vmul.f32 %v1338, 0.35355338
      %v1367 = vmul.f32 %v1343, 0.35355338
      %v1368 = vmul.f32 %v1346, 0.35355338
      %v1369 = vmul.f32 %v1351, 0.35355338
      %v1370 = vmul.f32 %v1354, 0.35355338
      %v1371 = vmul.f32 %v1359, 0.35355338
      %v1372 = vmul.f32 %v1362, 0.35355338
      %v1373 = vsel %vm701, %v1365, -inf
      %1374 = vmax.xlane.f32.xlu0 %v1373
      %v1375 = vpop.xlane.xlu0 %1374
      %v1376 = vsel %vm701, %v1366, -inf
      %1377 = vmax.xlane.f32.xlu0 %v1376
      %v1378 = vpop.xlane.xlu0 %1377
      %v1379 = vsel %vm701, %v1367, -inf
      %1380 = vmax.xlane.f32.xlu0 %v1379
      %v1381 = vpop.xlane.xlu0 %1380
      %v1382 = vsel %vm701, %v1368, -inf
      %1383 = vmax.xlane.f32.xlu0 %v1382
      %v1384 = vpop.xlane.xlu0 %1383
      %v1385 = vsel %vm701, %v1369, -inf
      %1386 = vmax.xlane.f32.xlu0 %v1385
      %v1387 = vpop.xlane.xlu0 %1386
      %v1388 = vsel %vm701, %v1370, -inf
      %1389 = vmax.xlane.f32.xlu0 %v1388
      %v1390 = vpop.xlane.xlu0 %1389
      %v1391 = vsel %vm701, %v1371, -inf
      %1392 = vmax.xlane.f32.xlu0 %v1391
      %v1393 = vpop.xlane.xlu0 %1392
      %v1394 = vsel %vm701, %v1372, -inf
      %1395 = vmax.xlane.f32.xlu0 %v1394
      %v1396 = vpop.xlane.xlu0 %1395
      %v1397 = vsub.f32 %v1365, %v1375
      %v1398 = vsub.f32 %v1366, %v1378
      %v1399 = vsub.f32 %v1367, %v1381
      %v1400 = vsub.f32 %v1368, %v1384
      %v1401 = vsub.f32 %v1369, %v1387
      %v1402 = vsub.f32 %v1370, %v1390
      %v1403 = vsub.f32 %v1371, %v1393
      %v1404 = vsub.f32 %v1372, %v1396
      %v1405 = vmul.f32 %v1397, 1.442695
      %v1406 = vpow.pop %v1405
      %v1407 = vmul.f32 %v1398, 1.442695
      %v1408 = vpow.pop %v1407
      %v1409 = vmul.f32 %v1399, 1.442695
      %v1410 = vpow.pop %v1409
      %v1411 = vmul.f32 %v1400, 1.442695
      %v1412 = vpow.pop %v1411
      %v1413 = vmul.f32 %v1401, 1.442695
      %v1414 = vpow.pop %v1413
      %v1415 = vmul.f32 %v1402, 1.442695
      %v1416 = vpow.pop %v1415
      %v1417 = vmul.f32 %v1403, 1.442695
      %v1418 = vpow.pop %v1417
      %v1419 = vmul.f32 %v1404, 1.442695
      %v1420 = vpow.pop %v1419
      %v1421 = vsel %vm701, %v1406, 0.0
      %1422 = vadd.xlane.f32.xlu0 %v1421
      %v1423 = vpop.xlane.xlu0 %1422
      %v1424 = vsel %vm701, %v1408, 0.0
      %1425 = vadd.xlane.f32.xlu0 %v1424
      %v1426 = vpop.xlane.xlu0 %1425
      %v1427 = vsel %vm701, %v1410, 0.0
      %1428 = vadd.xlane.f32.xlu0 %v1427
      %v1429 = vpop.xlane.xlu0 %1428
      %v1430 = vsel %vm701, %v1412, 0.0
      %1431 = vadd.xlane.f32.xlu0 %v1430
      %v1432 = vpop.xlane.xlu0 %1431
      %v1433 = vsel %vm701, %v1414, 0.0
      %1434 = vadd.xlane.f32.xlu0 %v1433
      %v1435 = vpop.xlane.xlu0 %1434
      %v1436 = vsel %vm701, %v1416, 0.0
      %1437 = vadd.xlane.f32.xlu0 %v1436
      %v1438 = vpop.xlane.xlu0 %1437
      %v1439 = vsel %vm701, %v1418, 0.0
      %1440 = vadd.xlane.f32.xlu0 %v1439
      %v1441 = vpop.xlane.xlu0 %1440
      %v1442 = vsel %vm701, %v1420, 0.0
      %1443 = vadd.xlane.f32.xlu0 %v1442
      %v1444 = vpop.xlane.xlu0 %1443
      %v1445 = vrcp.pop %v1423
      %v1446 = vrcp.pop %v1426
      %v1447 = vrcp.pop %v1429
      %v1448 = vrcp.pop %v1432
      %v1449 = vrcp.pop %v1435
      %v1450 = vrcp.pop %v1438
      %v1451 = vrcp.pop %v1441
      %v1452 = vrcp.pop %v1444
      %v1453 = vmul.f32 %v1406, %v1445
      %v1454 = vmul.f32 %v1408, %v1446
      %v1455 = vmul.f32 %v1410, %v1447
      %v1456 = vmul.f32 %v1412, %v1448
      %v1457 = vmul.f32 %v1414, %v1449
      %v1458 = vmul.f32 %v1416, %v1450
      %v1459 = vmul.f32 %v1418, %v1451
      %v1460 = vmul.f32 %v1420, %v1452
      %v1461 = vpack.c.bf16 %v1454, %v1453
      %v1462 = vpack.c.bf16 %v1456, %v1455
      %v1463 = vpack.c.bf16 %v1458, %v1457
      %v1464 = vpack.c.bf16 %v1460, %v1459
      %1465 = vrot.lane.b32.xlu0 %v995, 88
      %v1466 = vpop.permute.xlu0 %1465
      %1467 = vrot.lane.b32.xlu0 %v996, 88
      %v1468 = vpop.permute.xlu0 %1467
      %v1472 = vsel %vm701, %v1461, 0
      %v1475 = vsel %vm701, %v1462, 0
      %v1478 = vsel %vm701, %v1463, 0
      %v1481 = vsel %vm701, %v1464, 0
      %1483 = vmatprep.subr.bf16.mxu0 0
      %1484 = vmatpush1.bf16.msra.mxu0 %v1466
      %1485 = vmatprep.subr.bf16.mxu0 0
      %1486 = vmatpush1.bf16.msra.mxu0 %v1468
      %1487 = vmatprep.subr.bf16.mxu0 0
      %1488 = vmatpush1.bf16.msra.mxu0 0
      %1489 = vmatprep.subr.bf16.mxu0 0
      %1490 = vmatpush1.bf16.msra.mxu0 0
      %1491 = vmatprep.subr.bf16.mxu0 0
      %1492 = vmatpush1.bf16.msra.mxu0 0
      %1493 = vmatprep.subr.bf16.mxu0 0
      %1494 = vmatpush1.bf16.msra.mxu0 0
      %1495 = vmatprep.subr.bf16.mxu0 0
      %1496 = vmatpush1.bf16.msra.mxu0 0
      %1497 = vmatprep.subr.bf16.mxu0 0
      %1498 = vmatpush1.bf16.msra.mxu0 0
      %1499 = vmatprep.subr.bf16.mxu0 0
      %1500 = vmatpush1.bf16.msra.mxu0 0
      %1501 = vmatprep.subr.bf16.mxu0 0
      %1502 = vmatpush1.bf16.msra.mxu0 0
      %1503 = vmatprep.subr.bf16.mxu0 0
      %1504 = vmatpush1.bf16.msra.mxu0 0
      %1505 = vmatprep.subr.bf16.mxu0 0
      %1506 = vmatpush1.bf16.msra.mxu0 0
      %1507 = vmatprep.subr.bf16.mxu0 0
      %1508 = vmatpush1.bf16.msra.mxu0 0
      %1509 = vmatprep.subr.bf16.mxu0 0
      %1510 = vmatpush1.bf16.msra.mxu0 0
      %1511 = vmatprep.subr.bf16.mxu0 0
      %1512 = vmatpush1.bf16.msra.mxu0 0
      %1513 = vmatprep.subr.bf16.mxu0 0
      %1514 = vmatpush1.bf16.msra.mxu0 0
      %1515 = vmatprep.mubr.bf16.mxu0 0
      %1516 = vmatmul.mubr.bf16.gmra.mrb[0].mxu0 %v1472
      %v1517 = vpop.f32.mrb[0].mxu0
      %v1518 = vadd.f32 0.0, %v1517
      %v1519 = vpop.f32.mrb[0].mxu0
      %v1520 = vpop.f32.mrb[0].mxu0
      %v1521 = vadd.f32 0.0, %v1520
      %v1522 = vpop.f32.mrb[0].mxu0
      %1523 = vmatprep.mubr.bf16.mxu0 0
      %1524 = vmatmul.mubr.bf16.gmra.mrb[0].mxu0 %v1475
      %v1525 = vpop.f32.mrb[0].mxu0
      %v1526 = vadd.f32 0.0, %v1525
      %v1527 = vpop.f32.mrb[0].mxu0
      %v1528 = vpop.f32.mrb[0].mxu0
      %v1529 = vadd.f32 0.0, %v1528
      %v1530 = vpop.f32.mrb[0].mxu0
      %1531 = vmatprep.mubr.bf16.mxu0 0
      %1532 = vmatmul.mubr.bf16.gmra.mrb[0].mxu0 %v1478
      %v1533 = vpop.f32.mrb[0].mxu0
      %v1534 = vadd.f32 0.0, %v1533
      %v1535 = vpop.f32.mrb[0].mxu0
      %v1536 = vpop.f32.mrb[0].mxu0
      %v1537 = vadd.f32 0.0, %v1536
      %v1538 = vpop.f32.mrb[0].mxu0
      %1539 = vmatprep.mubr.bf16.mxu0 0
      %1540 = vmatmul.mubr.bf16.gmra.mrb[0].mxu0 %v1481
      %v1541 = vpop.f32.mrb[0].mxu0
      %v1542 = vadd.f32 0.0, %v1541
      %v1543 = vpop.f32.mrb[0].mxu0
      %v1544 = vpop.f32.mrb[0].mxu0
      %v1545 = vadd.f32 0.0, %v1544
      %v1546 = vpop.f32.mrb[0].mxu0
      %1547 = vdwg.mxu0
      %1548 = vrot.lane.b32.xlu0 %v991, 112
      %v1549 = vpop.permute.xlu0 %1548
      %1550 = vrot.lane.b32.xlu0 %v992, 112
      %v1551 = vpop.permute.xlu0 %1550
      %1552 = vrot.lane.b32.xlu0 %v993, 112
      %v1553 = vpop.permute.xlu0 %1552
      %1554 = vrot.lane.b32.xlu0 %v994, 112
      %v1555 = vpop.permute.xlu0 %1554
      %1556 = vrot.lane.b32.xlu0 %v995, 112
      %v1557 = vpop.permute.xlu0 %1556
      %1558 = vrot.lane.b32.xlu0 %v996, 112
      %v1559 = vpop.permute.xlu0 %1558
      %v1561 = vsel %vm997, %v1549, 0
      %v1564 = vsel %vm997, %v1551, 0
      %v1567 = vsel %vm997, %v1553, 0
      %v1570 = vsel %vm997, %v1555, 0
      %v1573 = vsel %vm997, %v1557, 0
      %v1576 = vsel %vm997, %v1559, 0
      %1578 = vmatprep.subr.bf16.mxu0 0
      %1579 = vmatpush1.bf16.xpose.msra.mxu0 %v1573
      %1580 = vmatprep.subr.bf16.mxu0 0
      %1581 = vmatpush1.bf16.xpose.msra.mxu0 %v1576
      %1582 = vmatprep.subr.bf16.mxu0 0
      %1583 = vmatpush1.bf16.xpose.msra.mxu0 0
      %1584 = vmatprep.subr.bf16.mxu0 0
      %1585 = vmatpush1.bf16.xpose.msra.mxu0 0
      %1586 = vmatprep.subr.bf16.mxu0 0
      %1587 = vmatpush1.bf16.xpose.msra.mxu0 0
      %1588 = vmatprep.subr.bf16.mxu0 0
      %1589 = vmatpush1.bf16.xpose.msra.mxu0 0
      %1590 = vmatprep.subr.bf16.mxu0 0
      %1591 = vmatpush1.bf16.xpose.msra.mxu0 0
      %1592 = vmatprep.subr.bf16.mxu0 0
      %1593 = vmatpush1.bf16.xpose.msra.mxu0 0
      %1594 = vmatprep.subr.bf16.mxu0 0
      %1595 = vmatpush1.bf16.xpose.msra.mxu0 0
      %1596 = vmatprep.subr.bf16.mxu0 0
      %1597 = vmatpush1.bf16.xpose.msra.mxu0 0
      %1598 = vmatprep.subr.bf16.mxu0 0
      %1599 = vmatpush1.bf16.xpose.msra.mxu0 0
      %1600 = vmatprep.subr.bf16.mxu0 0
      %1601 = vmatpush1.bf16.xpose.msra.mxu0 0
      %1602 = vmatprep.subr.bf16.mxu0 0
      %1603 = vmatpush1.bf16.xpose.msra.mxu0 0
      %1604 = vmatprep.subr.bf16.mxu0 0
      %1605 = vmatpush1.bf16.xpose.msra.mxu0 0
      %1606 = vmatprep.subr.bf16.mxu0 0
      %1607 = vmatpush1.bf16.xpose.msra.mxu0 0
      %1608 = vmatprep.subr.bf16.mxu0 0
      %1609 = vmatpush1.bf16.xpose.msra.mxu0 0
      %1610 = vmatprep.mubr.bf16.mxu0 0
      %1611 = vmatmul.mubr.bf16.gmra.mrb[0].mxu0 %v1561
      %v1612 = vpop.f32.mrb[0].mxu0
      %v1613 = vadd.f32 0.0, %v1612
      %v1614 = vpop.f32.mrb[0].mxu0
      %v1615 = vpop.f32.mrb[0].mxu0
      %v1616 = vadd.f32 0.0, %v1615
      %v1617 = vpop.f32.mrb[0].mxu0
      %1618 = vmatprep.mubr.bf16.mxu0 0
      %1619 = vmatmul.mubr.bf16.gmra.mrb[0].mxu0 %v1564
      %v1620 = vpop.f32.mrb[0].mxu0
      %v1621 = vadd.f32 0.0, %v1620
      %v1622 = vpop.f32.mrb[0].mxu0
      %v1623 = vpop.f32.mrb[0].mxu0
      %v1624 = vadd.f32 0.0, %v1623
      %v1625 = vpop.f32.mrb[0].mxu0
      %1626 = vmatprep.mubr.bf16.mxu0 0
      %1627 = vmatmul.mubr.bf16.gmra.mrb[0].mxu0 %v1567
      %v1628 = vpop.f32.mrb[0].mxu0
      %v1629 = vadd.f32 0.0, %v1628
      %v1630 = vpop.f32.mrb[0].mxu0
      %v1631 = vpop.f32.mrb[0].mxu0
      %v1632 = vadd.f32 0.0, %v1631
      %v1633 = vpop.f32.mrb[0].mxu0
      %1634 = vmatprep.mubr.bf16.mxu0 0
      %1635 = vmatmul.mubr.bf16.gmra.mrb[0].mxu0 %v1570
      %v1636 = vpop.f32.mrb[0].mxu0
      %v1637 = vadd.f32 0.0, %v1636
      %v1638 = vpop.f32.mrb[0].mxu0
      %v1639 = vpop.f32.mrb[0].mxu0
      %v1640 = vadd.f32 0.0, %v1639
      %v1641 = vpop.f32.mrb[0].mxu0
      %1642 = vdwg.mxu0
      %v1643 = vmul.f32 %v1613, 0.35355338
      %v1644 = vmul.f32 %v1616, 0.35355338
      %v1645 = vmul.f32 %v1621, 0.35355338
      %v1646 = vmul.f32 %v1624, 0.35355338
      %v1647 = vmul.f32 %v1629, 0.35355338
      %v1648 = vmul.f32 %v1632, 0.35355338
      %v1649 = vmul.f32 %v1637, 0.35355338
      %v1650 = vmul.f32 %v1640, 0.35355338
      %v1651 = vsel %vm701, %v1643, -inf
      %1652 = vmax.xlane.f32.xlu0 %v1651
      %v1653 = vpop.xlane.xlu0 %1652
      %v1654 = vsel %vm701, %v1644, -inf
      %1655 = vmax.xlane.f32.xlu0 %v1654
      %v1656 = vpop.xlane.xlu0 %1655
      %v1657 = vsel %vm701, %v1645, -inf
      %1658 = vmax.xlane.f32.xlu0 %v1657
      %v1659 = vpop.xlane.xlu0 %1658
      %v1660 = vsel %vm701, %v1646, -inf
      %1661 = vmax.xlane.f32.xlu0 %v1660
      %v1662 = vpop.xlane.xlu0 %1661
      %v1663 = vsel %vm701, %v1647, -inf
      %1664 = vmax.xlane.f32.xlu0 %v1663
      %v1665 = vpop.xlane.xlu0 %1664
      %v1666 = vsel %vm701, %v1648, -inf
      %1667 = vmax.xlane.f32.xlu0 %v1666
      %v1668 = vpop.xlane.xlu0 %1667
      %v1669 = vsel %vm701, %v1649, -inf
      %1670 = vmax.xlane.f32.xlu0 %v1669
      %v1671 = vpop.xlane.xlu0 %1670
      %v1672 = vsel %vm701, %v1650, -inf
      %1673 = vmax.xlane.f32.xlu0 %v1672
      %v1674 = vpop.xlane.xlu0 %1673
      %v1675 = vsub.f32 %v1643, %v1653
      %v1676 = vsub.f32 %v1644, %v1656
      %v1677 = vsub.f32 %v1645, %v1659
      %v1678 = vsub.f32 %v1646, %v1662
      %v1679 = vsub.f32 %v1647, %v1665
      %v1680 = vsub.f32 %v1648, %v1668
      %v1681 = vsub.f32 %v1649, %v1671
      %v1682 = vsub.f32 %v1650, %v1674
      %v1683 = vmul.f32 %v1675, 1.442695
      %v1684 = vpow.pop %v1683
      %v1685 = vmul.f32 %v1676, 1.442695
      %v1686 = vpow.pop %v1685
      %v1687 = vmul.f32 %v1677, 1.442695
      %v1688 = vpow.pop %v1687
      %v1689 = vmul.f32 %v1678, 1.442695
      %v1690 = vpow.pop %v1689
      %v1691 = vmul.f32 %v1679, 1.442695
      %v1692 = vpow.pop %v1691
      %v1693 = vmul.f32 %v1680, 1.442695
      %v1694 = vpow.pop %v1693
      %v1695 = vmul.f32 %v1681, 1.442695
      %v1696 = vpow.pop %v1695
      %v1697 = vmul.f32 %v1682, 1.442695
      %v1698 = vpow.pop %v1697
      %v1699 = vsel %vm701, %v1684, 0.0
      %1700 = vadd.xlane.f32.xlu0 %v1699
      %v1701 = vpop.xlane.xlu0 %1700
      %v1702 = vsel %vm701, %v1686, 0.0
      %1703 = vadd.xlane.f32.xlu0 %v1702
      %v1704 = vpop.xlane.xlu0 %1703
      %v1705 = vsel %vm701, %v1688, 0.0
      %1706 = vadd.xlane.f32.xlu0 %v1705
      %v1707 = vpop.xlane.xlu0 %1706
      %v1708 = vsel %vm701, %v1690, 0.0
      %1709 = vadd.xlane.f32.xlu0 %v1708
      %v1710 = vpop.xlane.xlu0 %1709
      %v1711 = vsel %vm701, %v1692, 0.0
      %1712 = vadd.xlane.f32.xlu0 %v1711
      %v1713 = vpop.xlane.xlu0 %1712
      %v1714 = vsel %vm701, %v1694, 0.0
      %1715 = vadd.xlane.f32.xlu0 %v1714
      %v1716 = vpop.xlane.xlu0 %1715
      %v1717 = vsel %vm701, %v1696, 0.0
      %1718 = vadd.xlane.f32.xlu0 %v1717
      %v1719 = vpop.xlane.xlu0 %1718
      %v1720 = vsel %vm701, %v1698, 0.0
      %1721 = vadd.xlane.f32.xlu0 %v1720
      %v1722 = vpop.xlane.xlu0 %1721
      %v1723 = vrcp.pop %v1701
      %v1724 = vrcp.pop %v1704
      %v1725 = vrcp.pop %v1707
      %v1726 = vrcp.pop %v1710
      %v1727 = vrcp.pop %v1713
      %v1728 = vrcp.pop %v1716
      %v1729 = vrcp.pop %v1719
      %v1730 = vrcp.pop %v1722
      %v1731 = vmul.f32 %v1684, %v1723
      %v1732 = vmul.f32 %v1686, %v1724
      %v1733 = vmul.f32 %v1688, %v1725
      %v1734 = vmul.f32 %v1690, %v1726
      %v1735 = vmul.f32 %v1692, %v1727
      %v1736 = vmul.f32 %v1694, %v1728
      %v1737 = vmul.f32 %v1696, %v1729
      %v1738 = vmul.f32 %v1698, %v1730
      %v1739 = vpack.c.bf16 %v1732, %v1731
      %v1740 = vpack.c.bf16 %v1734, %v1733
      %v1741 = vpack.c.bf16 %v1736, %v1735
      %v1742 = vpack.c.bf16 %v1738, %v1737
      %1743 = vrot.lane.b32.xlu0 %v995, 80
      %v1744 = vpop.permute.xlu0 %1743
      %1745 = vrot.lane.b32.xlu0 %v996, 80
      %v1746 = vpop.permute.xlu0 %1745
      %v1750 = vsel %vm701, %v1739, 0
      %v1753 = vsel %vm701, %v1740, 0
      %v1756 = vsel %vm701, %v1741, 0
      %v1759 = vsel %vm701, %v1742, 0
      %1761 = vmatprep.subr.bf16.mxu0 0
      %1762 = vmatpush1.bf16.msra.mxu0 %v1744
      %1763 = vmatprep.subr.bf16.mxu0 0
      %1764 = vmatpush1.bf16.msra.mxu0 %v1746
      %1765 = vmatprep.subr.bf16.mxu0 0
      %1766 = vmatpush1.bf16.msra.mxu0 0
      %1767 = vmatprep.subr.bf16.mxu0 0
      %1768 = vmatpush1.bf16.msra.mxu0 0
      %1769 = vmatprep.subr.bf16.mxu0 0
      %1770 = vmatpush1.bf16.msra.mxu0 0
      %1771 = vmatprep.subr.bf16.mxu0 0
      %1772 = vmatpush1.bf16.msra.mxu0 0
      %1773 = vmatprep.subr.bf16.mxu0 0
      %1774 = vmatpush1.bf16.msra.mxu0 0
      %1775 = vmatprep.subr.bf16.mxu0 0
      %1776 = vmatpush1.bf16.msra.mxu0 0
      %1777 = vmatprep.subr.bf16.mxu0 0
      %1778 = vmatpush1.bf16.msra.mxu0 0
      %1779 = vmatprep.subr.bf16.mxu0 0
      %1780 = vmatpush1.bf16.msra.mxu0 0
      %1781 = vmatprep.subr.bf16.mxu0 0
      %1782 = vmatpush1.bf16.msra.mxu0 0
      %1783 = vmatprep.subr.bf16.mxu0 0
      %1784 = vmatpush1.bf16.msra.mxu0 0
      %1785 = vmatprep.subr.bf16.mxu0 0
      %1786 = vmatpush1.bf16.msra.mxu0 0
      %1787 = vmatprep.subr.bf16.mxu0 0
      %1788 = vmatpush1.bf16.msra.mxu0 0
      %1789 = vmatprep.subr.bf16.mxu0 0
      %1790 = vmatpush1.bf16.msra.mxu0 0
      %1791 = vmatprep.subr.bf16.mxu0 0
      %1792 = vmatpush1.bf16.msra.mxu0 0
      %1793 = vmatprep.mubr.bf16.mxu0 0
      %1794 = vmatmul.mubr.bf16.gmra.mrb[0].mxu0 %v1750
      %v1795 = vpop.f32.mrb[0].mxu0
      %v1796 = vadd.f32 0.0, %v1795
      %v1797 = vpop.f32.mrb[0].mxu0
      %v1798 = vpop.f32.mrb[0].mxu0
      %v1799 = vadd.f32 0.0, %v1798
      %v1800 = vpop.f32.mrb[0].mxu0
      %1801 = vmatprep.mubr.bf16.mxu0 0
      %1802 = vmatmul.mubr.bf16.gmra.mrb[0].mxu0 %v1753
      %v1803 = vpop.f32.mrb[0].mxu0
      %v1804 = vadd.f32 0.0, %v1803
      %v1805 = vpop.f32.mrb[0].mxu0
      %v1806 = vpop.f32.mrb[0].mxu0
      %v1807 = vadd.f32 0.0, %v1806
      %v1808 = vpop.f32.mrb[0].mxu0
      %1809 = vmatprep.mubr.bf16.mxu0 0
      %1810 = vmatmul.mubr.bf16.gmra.mrb[0].mxu0 %v1756
      %v1811 = vpop.f32.mrb[0].mxu0
      %v1812 = vadd.f32 0.0, %v1811
      %v1813 = vpop.f32.mrb[0].mxu0
      %v1814 = vpop.f32.mrb[0].mxu0
      %v1815 = vadd.f32 0.0, %v1814
      %v1816 = vpop.f32.mrb[0].mxu0
      %1817 = vmatprep.mubr.bf16.mxu0 0
      %1818 = vmatmul.mubr.bf16.gmra.mrb[0].mxu0 %v1759
      %v1819 = vpop.f32.mrb[0].mxu0
      %v1820 = vadd.f32 0.0, %v1819
      %v1821 = vpop.f32.mrb[0].mxu0
      %v1822 = vpop.f32.mrb[0].mxu0
      %v1823 = vadd.f32 0.0, %v1822
      %v1824 = vpop.f32.mrb[0].mxu0
      %1825 = vdwg.mxu0
      %1826 = vrot.lane.b32.xlu0 %v991, 104
      %v1827 = vpop.permute.xlu0 %1826
      %1828 = vrot.lane.b32.xlu0 %v992, 104
      %v1829 = vpop.permute.xlu0 %1828
      %1830 = vrot.lane.b32.xlu0 %v993, 104
      %v1831 = vpop.permute.xlu0 %1830
      %1832 = vrot.lane.b32.xlu0 %v994, 104
      %v1833 = vpop.permute.xlu0 %1832
      %1834 = vrot.lane.b32.xlu0 %v995, 104
      %v1835 = vpop.permute.xlu0 %1834
      %1836 = vrot.lane.b32.xlu0 %v996, 104
      %v1837 = vpop.permute.xlu0 %1836
      %v1839 = vsel %vm997, %v1827, 0
      %v1842 = vsel %vm997, %v1829, 0
      %v1845 = vsel %vm997, %v1831, 0
      %v1848 = vsel %vm997, %v1833, 0
      %v1851 = vsel %vm997, %v1835, 0
      %v1854 = vsel %vm997, %v1837, 0
      %1856 = vmatprep.subr.bf16.mxu0 0
      %1857 = vmatpush1.bf16.xpose.msra.mxu0 %v1851
      %1858 = vmatprep.subr.bf16.mxu0 0
      %1859 = vmatpush1.bf16.xpose.msra.mxu0 %v1854
      %1860 = vmatprep.subr.bf16.mxu0 0
      %1861 = vmatpush1.bf16.xpose.msra.mxu0 0
      %1862 = vmatprep.subr.bf16.mxu0 0
      %1863 = vmatpush1.bf16.xpose.msra.mxu0 0
      %1864 = vmatprep.subr.bf16.mxu0 0
      %1865 = vmatpush1.bf16.xpose.msra.mxu0 0
      %1866 = vmatprep.subr.bf16.mxu0 0
      %1867 = vmatpush1.bf16.xpose.msra.mxu0 0
      %1868 = vmatprep.subr.bf16.mxu0 0
      %1869 = vmatpush1.bf16.xpose.msra.mxu0 0
      %1870 = vmatprep.subr.bf16.mxu0 0
      %1871 = vmatpush1.bf16.xpose.msra.mxu0 0
      %1872 = vmatprep.subr.bf16.mxu0 0
      %1873 = vmatpush1.bf16.xpose.msra.mxu0 0
      %1874 = vmatprep.subr.bf16.mxu0 0
      %1875 = vmatpush1.bf16.xpose.msra.mxu0 0
      %1876 = vmatprep.subr.bf16.mxu0 0
      %1877 = vmatpush1.bf16.xpose.msra.mxu0 0
      %1878 = vmatprep.subr.bf16.mxu0 0
      %1879 = vmatpush1.bf16.xpose.msra.mxu0 0
      %1880 = vmatprep.subr.bf16.mxu0 0
      %1881 = vmatpush1.bf16.xpose.msra.mxu0 0
      %1882 = vmatprep.subr.bf16.mxu0 0
      %1883 = vmatpush1.bf16.xpose.msra.mxu0 0
      %1884 = vmatprep.subr.bf16.mxu0 0
      %1885 = vmatpush1.bf16.xpose.msra.mxu0 0
      %1886 = vmatprep.subr.bf16.mxu0 0
      %1887 = vmatpush1.bf16.xpose.msra.mxu0 0
      %1888 = vmatprep.mubr.bf16.mxu0 0
      %1889 = vmatmul.mubr.bf16.gmra.mrb[0].mxu0 %v1839
      %v1890 = vpop.f32.mrb[0].mxu0
      %v1891 = vadd.f32 0.0, %v1890
      %v1892 = vpop.f32.mrb[0].mxu0
      %v1893 = vpop.f32.mrb[0].mxu0
      %v1894 = vadd.f32 0.0, %v1893
      %v1895 = vpop.f32.mrb[0].mxu0
      %1896 = vmatprep.mubr.bf16.mxu0 0
      %1897 = vmatmul.mubr.bf16.gmra.mrb[0].mxu0 %v1842
      %v1898 = vpop.f32.mrb[0].mxu0
      %v1899 = vadd.f32 0.0, %v1898
      %v1900 = vpop.f32.mrb[0].mxu0
      %v1901 = vpop.f32.mrb[0].mxu0
      %v1902 = vadd.f32 0.0, %v1901
      %v1903 = vpop.f32.mrb[0].mxu0
      %1904 = vmatprep.mubr.bf16.mxu0 0
      %1905 = vmatmul.mubr.bf16.gmra.mrb[0].mxu0 %v1845
      %v1906 = vpop.f32.mrb[0].mxu0
      %v1907 = vadd.f32 0.0, %v1906
      %v1908 = vpop.f32.mrb[0].mxu0
      %v1909 = vpop.f32.mrb[0].mxu0
      %v1910 = vadd.f32 0.0, %v1909
      %v1911 = vpop.f32.mrb[0].mxu0
      %1912 = vmatprep.mubr.bf16.mxu0 0
      %1913 = vmatmul.mubr.bf16.gmra.mrb[0].mxu0 %v1848
      %v1914 = vpop.f32.mrb[0].mxu0
      %v1915 = vadd.f32 0.0, %v1914
      %v1916 = vpop.f32.mrb[0].mxu0
      %v1917 = vpop.f32.mrb[0].mxu0
      %v1918 = vadd.f32 0.0, %v1917
      %v1919 = vpop.f32.mrb[0].mxu0
      %1920 = vdwg.mxu0
      %v1921 = vmul.f32 %v1891, 0.35355338
      %v1922 = vmul.f32 %v1894, 0.35355338
      %v1923 = vmul.f32 %v1899, 0.35355338
      %v1924 = vmul.f32 %v1902, 0.35355338
      %v1925 = vmul.f32 %v1907, 0.35355338
      %v1926 = vmul.f32 %v1910, 0.35355338
      %v1927 = vmul.f32 %v1915, 0.35355338
      %v1928 = vmul.f32 %v1918, 0.35355338
      %v1929 = vsel %vm701, %v1921, -inf
      %1930 = vmax.xlane.f32.xlu0 %v1929
      %v1931 = vpop.xlane.xlu0 %1930
      %v1932 = vsel %vm701, %v1922, -inf
      %1933 = vmax.xlane.f32.xlu0 %v1932
      %v1934 = vpop.xlane.xlu0 %1933
      %v1935 = vsel %vm701, %v1923, -inf
      %1936 = vmax.xlane.f32.xlu0 %v1935
      %v1937 = vpop.xlane.xlu0 %1936
      %v1938 = vsel %vm701, %v1924, -inf
      %1939 = vmax.xlane.f32.xlu0 %v1938
      %v1940 = vpop.xlane.xlu0 %1939
      %v1941 = vsel %vm701, %v1925, -inf
      %1942 = vmax.xlane.f32.xlu0 %v1941
      %v1943 = vpop.xlane.xlu0 %1942
      %v1944 = vsel %vm701, %v1926, -inf
      %1945 = vmax.xlane.f32.xlu0 %v1944
      %v1946 = vpop.xlane.xlu0 %1945
      %v1947 = vsel %vm701, %v1927, -inf
      %1948 = vmax.xlane.f32.xlu0 %v1947
      %v1949 = vpop.xlane.xlu0 %1948
      %v1950 = vsel %vm701, %v1928, -inf
      %1951 = vmax.xlane.f32.xlu0 %v1950
      %v1952 = vpop.xlane.xlu0 %1951
      %v1953 = vsub.f32 %v1921, %v1931
      %v1954 = vsub.f32 %v1922, %v1934
      %v1955 = vsub.f32 %v1923, %v1937
      %v1956 = vsub.f32 %v1924, %v1940
      %v1957 = vsub.f32 %v1925, %v1943
      %v1958 = vsub.f32 %v1926, %v1946
      %v1959 = vsub.f32 %v1927, %v1949
      %v1960 = vsub.f32 %v1928, %v1952
      %v1961 = vmul.f32 %v1953, 1.442695
      %v1962 = vpow.pop %v1961
      %v1963 = vmul.f32 %v1954, 1.442695
      %v1964 = vpow.pop %v1963
      %v1965 = vmul.f32 %v1955, 1.442695
      %v1966 = vpow.pop %v1965
      %v1967 = vmul.f32 %v1956, 1.442695
      %v1968 = vpow.pop %v1967
      %v1969 = vmul.f32 %v1957, 1.442695
      %v1970 = vpow.pop %v1969
      %v1971 = vmul.f32 %v1958, 1.442695
      %v1972 = vpow.pop %v1971
      %v1973 = vmul.f32 %v1959, 1.442695
      %v1974 = vpow.pop %v1973
      %v1975 = vmul.f32 %v1960, 1.442695
      %v1976 = vpow.pop %v1975
      %v1977 = vsel %vm701, %v1962, 0.0
      %1978 = vadd.xlane.f32.xlu0 %v1977
      %v1979 = vpop.xlane.xlu0 %1978
      %v1980 = vsel %vm701, %v1964, 0.0
      %1981 = vadd.xlane.f32.xlu0 %v1980
      %v1982 = vpop.xlane.xlu0 %1981
      %v1983 = vsel %vm701, %v1966, 0.0
      %1984 = vadd.xlane.f32.xlu0 %v1983
      %v1985 = vpop.xlane.xlu0 %1984
      %v1986 = vsel %vm701, %v1968, 0.0
      %1987 = vadd.xlane.f32.xlu0 %v1986
      %v1988 = vpop.xlane.xlu0 %1987
      %v1989 = vsel %vm701, %v1970, 0.0
      %1990 = vadd.xlane.f32.xlu0 %v1989
      %v1991 = vpop.xlane.xlu0 %1990
      %v1992 = vsel %vm701, %v1972, 0.0
      %1993 = vadd.xlane.f32.xlu0 %v1992
      %v1994 = vpop.xlane.xlu0 %1993
      %v1995 = vsel %vm701, %v1974, 0.0
      %1996 = vadd.xlane.f32.xlu0 %v1995
      %v1997 = vpop.xlane.xlu0 %1996
      %v1998 = vsel %vm701, %v1976, 0.0
      %1999 = vadd.xlane.f32.xlu0 %v1998
      %v2000 = vpop.xlane.xlu0 %1999
      %v2001 = vrcp.pop %v1979
      %v2002 = vrcp.pop %v1982
      %v2003 = vrcp.pop %v1985
      %v2004 = vrcp.pop %v1988
      %v2005 = vrcp.pop %v1991
      %v2006 = vrcp.pop %v1994
      %v2007 = vrcp.pop %v1997
      %v2008 = vrcp.pop %v2000
      %v2009 = vmul.f32 %v1962, %v2001
      %v2010 = vmul.f32 %v1964, %v2002
      %v2011 = vmul.f32 %v1966, %v2003
      %v2012 = vmul.f32 %v1968, %v2004
      %v2013 = vmul.f32 %v1970, %v2005
      %v2014 = vmul.f32 %v1972, %v2006
      %v2015 = vmul.f32 %v1974, %v2007
      %v2016 = vmul.f32 %v1976, %v2008
      %v2017 = vpack.c.bf16 %v2010, %v2009
      %v2018 = vpack.c.bf16 %v2012, %v2011
      %v2019 = vpack.c.bf16 %v2014, %v2013
      %v2020 = vpack.c.bf16 %v2016, %v2015
      %2021 = vrot.lane.b32.xlu0 %v995, 72
      %v2022 = vpop.permute.xlu0 %2021
      %2023 = vrot.lane.b32.xlu0 %v996, 72
      %v2024 = vpop.permute.xlu0 %2023
      %v2028 = vsel %vm701, %v2017, 0
      %v2031 = vsel %vm701, %v2018, 0
      %v2034 = vsel %vm701, %v2019, 0
      %v2037 = vsel %vm701, %v2020, 0
      %2039 = vmatprep.subr.bf16.mxu0 0
      %2040 = vmatpush1.bf16.msra.mxu0 %v2022
      %2041 = vmatprep.subr.bf16.mxu0 0
      %2042 = vmatpush1.bf16.msra.mxu0 %v2024
      %2043 = vmatprep.subr.bf16.mxu0 0
      %2044 = vmatpush1.bf16.msra.mxu0 0
      %2045 = vmatprep.subr.bf16.mxu0 0
      %2046 = vmatpush1.bf16.msra.mxu0 0
      %2047 = vmatprep.subr.bf16.mxu0 0
      %2048 = vmatpush1.bf16.msra.mxu0 0
      %2049 = vmatprep.subr.bf16.mxu0 0
      %2050 = vmatpush1.bf16.msra.mxu0 0
      %2051 = vmatprep.subr.bf16.mxu0 0
      %2052 = vmatpush1.bf16.msra.mxu0 0
      %2053 = vmatprep.subr.bf16.mxu0 0
      %2054 = vmatpush1.bf16.msra.mxu0 0
      %2055 = vmatprep.subr.bf16.mxu0 0
      %2056 = vmatpush1.bf16.msra.mxu0 0
      %2057 = vmatprep.subr.bf16.mxu0 0
      %2058 = vmatpush1.bf16.msra.mxu0 0
      %2059 = vmatprep.subr.bf16.mxu0 0
      %2060 = vmatpush1.bf16.msra.mxu0 0
      %2061 = vmatprep.subr.bf16.mxu0 0
      %2062 = vmatpush1.bf16.msra.mxu0 0
      %2063 = vmatprep.subr.bf16.mxu0 0
      %2064 = vmatpush1.bf16.msra.mxu0 0
      %2065 = vmatprep.subr.bf16.mxu0 0
      %2066 = vmatpush1.bf16.msra.mxu0 0
      %2067 = vmatprep.subr.bf16.mxu0 0
      %2068 = vmatpush1.bf16.msra.mxu0 0
      %2069 = vmatprep.subr.bf16.mxu0 0
      %2070 = vmatpush1.bf16.msra.mxu0 0
      %2071 = vmatprep.mubr.bf16.mxu0 0
      %2072 = vmatmul.mubr.bf16.gmra.mrb[0].mxu0 %v2028
      %v2073 = vpop.f32.mrb[0].mxu0
      %v2074 = vadd.f32 0.0, %v2073
      %v2075 = vpop.f32.mrb[0].mxu0
      %v2076 = vpop.f32.mrb[0].mxu0
      %v2077 = vadd.f32 0.0, %v2076
      %v2078 = vpop.f32.mrb[0].mxu0
      %2079 = vmatprep.mubr.bf16.mxu0 0
      %2080 = vmatmul.mubr.bf16.gmra.mrb[0].mxu0 %v2031
      %v2081 = vpop.f32.mrb[0].mxu0
      %v2082 = vadd.f32 0.0, %v2081
      %v2083 = vpop.f32.mrb[0].mxu0
      %v2084 = vpop.f32.mrb[0].mxu0
      %v2085 = vadd.f32 0.0, %v2084
      %v2086 = vpop.f32.mrb[0].mxu0
      %2087 = vmatprep.mubr.bf16.mxu0 0
      %2088 = vmatmul.mubr.bf16.gmra.mrb[0].mxu0 %v2034
      %v2089 = vpop.f32.mrb[0].mxu0
      %v2090 = vadd.f32 0.0, %v2089
      %v2091 = vpop.f32.mrb[0].mxu0
      %v2092 = vpop.f32.mrb[0].mxu0
      %v2093 = vadd.f32 0.0, %v2092
      %v2094 = vpop.f32.mrb[0].mxu0
      %2095 = vmatprep.mubr.bf16.mxu0 0
      %2096 = vmatmul.mubr.bf16.gmra.mrb[0].mxu0 %v2037
      %v2097 = vpop.f32.mrb[0].mxu0
      %v2098 = vadd.f32 0.0, %v2097
      %v2099 = vpop.f32.mrb[0].mxu0
      %v2100 = vpop.f32.mrb[0].mxu0
      %v2101 = vadd.f32 0.0, %v2100
      %v2102 = vpop.f32.mrb[0].mxu0
      %2103 = vdwg.mxu0
      %2112 = vrot.lane.b32.xlu0 %v1518, 8
      %v2113 = vpop.permute.xlu0 %2112
      %2114 = vrot.lane.b32.xlu0 %v1521, 8
      %v2115 = vpop.permute.xlu0 %2114
      %2116 = vrot.lane.b32.xlu0 %v1526, 8
      %v2117 = vpop.permute.xlu0 %2116
      %2118 = vrot.lane.b32.xlu0 %v1529, 8
      %v2119 = vpop.permute.xlu0 %2118
      %2120 = vrot.lane.b32.xlu0 %v1534, 8
      %v2121 = vpop.permute.xlu0 %2120
      %2122 = vrot.lane.b32.xlu0 %v1537, 8
      %v2123 = vpop.permute.xlu0 %2122
      %2124 = vrot.lane.b32.xlu0 %v1542, 8
      %v2125 = vpop.permute.xlu0 %2124
      %2126 = vrot.lane.b32.xlu0 %v1545, 8
      %v2127 = vpop.permute.xlu0 %2126
      %2144 = vrot.lane.b32.xlu0 %v1796, 16
      %v2145 = vpop.permute.xlu0 %2144
      %2146 = vrot.lane.b32.xlu0 %v1799, 16
      %v2147 = vpop.permute.xlu0 %2146
      %2148 = vrot.lane.b32.xlu0 %v1804, 16
      %v2149 = vpop.permute.xlu0 %2148
      %2150 = vrot.lane.b32.xlu0 %v1807, 16
      %v2151 = vpop.permute.xlu0 %2150
      %2152 = vrot.lane.b32.xlu0 %v1812, 16
      %v2153 = vpop.permute.xlu0 %2152
      %2154 = vrot.lane.b32.xlu0 %v1815, 16
      %v2155 = vpop.permute.xlu0 %2154
      %2156 = vrot.lane.b32.xlu0 %v1820, 16
      %v2157 = vpop.permute.xlu0 %2156
      %2158 = vrot.lane.b32.xlu0 %v1823, 16
      %v2159 = vpop.permute.xlu0 %2158
      %2176 = vrot.lane.b32.xlu0 %v2074, 24
      %v2177 = vpop.permute.xlu0 %2176
      %2178 = vrot.lane.b32.xlu0 %v2077, 24
      %v2179 = vpop.permute.xlu0 %2178
      %2180 = vrot.lane.b32.xlu0 %v2082, 24
      %v2181 = vpop.permute.xlu0 %2180
      %2182 = vrot.lane.b32.xlu0 %v2085, 24
      %v2183 = vpop.permute.xlu0 %2182
      %2184 = vrot.lane.b32.xlu0 %v2090, 24
      %v2185 = vpop.permute.xlu0 %2184
      %2186 = vrot.lane.b32.xlu0 %v2093, 24
      %v2187 = vpop.permute.xlu0 %2186
      %2188 = vrot.lane.b32.xlu0 %v2098, 24
      %v2189 = vpop.permute.xlu0 %2188
      %2190 = vrot.lane.b32.xlu0 %v2101, 24
      %v2191 = vpop.permute.xlu0 %2190
      %v2200 = vsel %vm997, %v1236, %v2113
      %v2201 = vsel %vm997, %v1239, %v2115
      %v2202 = vsel %vm997, %v1244, %v2117
      %v2203 = vsel %vm997, %v1247, %v2119
      %v2204 = vsel %vm997, %v1252, %v2121
      %v2205 = vsel %vm997, %v1255, %v2123
      %v2206 = vsel %vm997, %v1260, %v2125
      %v2207 = vsel %vm997, %v1263, %v2127
      %vm2208 = vcmask 130048
      %v2209 = vsel %vm2208, %v2200, %v2145
      %v2210 = vsel %vm2208, %v2201, %v2147
      %v2211 = vsel %vm2208, %v2202, %v2149
      %v2212 = vsel %vm2208, %v2203, %v2151
      %v2213 = vsel %vm2208, %v2204, %v2153
      %v2214 = vsel %vm2208, %v2205, %v2155
      %v2215 = vsel %vm2208, %v2206, %v2157
      %v2216 = vsel %vm2208, %v2207, %v2159
      %vm2217 = vcmask 195584
      %v2218 = vsel %vm2217, %v2209, %v2177
      %v2219 = vsel %vm2217, %v2210, %v2179
      %v2220 = vsel %vm2217, %v2211, %v2181
      %v2221 = vsel %vm2217, %v2212, %v2183
      %v2222 = vsel %vm2217, %v2213, %v2185
      %v2223 = vsel %vm2217, %v2214, %v2187
      %v2224 = vsel %vm2217, %v2215, %v2189
      %v2225 = vsel %vm2217, %v2216, %v2191
      %v2226 = vpack.c.bf16 %v2219, %v2218
      %v2227 = vpack.c.bf16 %v2221, %v2220
      %v2228 = vpack.c.bf16 %v2223, %v2222
      %v2229 = vpack.c.bf16 %v2225, %v2224
      %v2230 = vld [vmem:[%s4] sm:$0xf]
      %v2231 = vld [vmem:[%s4 + $0x4] sm:$0xf]
      %v2232 = vld [vmem:[%s4 + $0x8] sm:$0xf]
      %v2233 = vld [vmem:[%s4 + $0xc] sm:$0xf]
      %v2234 = vlaneseq
      %v2235 = vshrl.u32 %v2234, 7
      %v2236 = vsub.s32 0, %v2235
      %v2237 = vrot.slane %v699, %v2236
      %v2242 = vunpack.c.l.b16 %v2230
      %v2243 = vunpack.c.l.b16 %v2231
      %v2244 = vunpack.c.l.b16 %v2232
      %v2245 = vunpack.c.l.b16 %v2233
      %v2246 = vpack.c.b16 %v2243, %v2242
      %v2247 = vpack.c.b16 %v2245, %v2244
      %v2251 = vsel %vm701, %v2226, 0
      %v2254 = vsel %vm701, %v2227, 0
      %v2257 = vsel %vm701, %v2228, 0
      %v2260 = vsel %vm701, %v2229, 0
      %2262 = vmatprep.subr.bf16.mxu0 0
      %2263 = vmatpush1.bf16.msra.mxu0 %v2246
      %2264 = vmatprep.subr.bf16.mxu0 0
      %2265 = vmatpush1.bf16.msra.mxu0 %v2247
      %2266 = vmatprep.subr.bf16.mxu0 0
      %2267 = vmatpush1.bf16.msra.mxu0 0
      %2268 = vmatprep.subr.bf16.mxu0 0
      %2269 = vmatpush1.bf16.msra.mxu0 0
      %2270 = vmatprep.subr.bf16.mxu0 0
      %2271 = vmatpush1.bf16.msra.mxu0 0
      %2272 = vmatprep.subr.bf16.mxu0 0
      %2273 = vmatpush1.bf16.msra.mxu0 0
      %2274 = vmatprep.subr.bf16.mxu0 0
      %2275 = vmatpush1.bf16.msra.mxu0 0
      %2276 = vmatprep.subr.bf16.mxu0 0
      %2277 = vmatpush1.bf16.msra.mxu0 0
      %2278 = vmatprep.subr.bf16.mxu0 0
      %2279 = vmatpush1.bf16.msra.mxu0 0
      %2280 = vmatprep.subr.bf16.mxu0 0
      %2281 = vmatpush1.bf16.msra.mxu0 0
      %2282 = vmatprep.subr.bf16.mxu0 0
      %2283 = vmatpush1.bf16.msra.mxu0 0
      %2284 = vmatprep.subr.bf16.mxu0 0
      %2285 = vmatpush1.bf16.msra.mxu0 0
      %2286 = vmatprep.subr.bf16.mxu0 0
      %2287 = vmatpush1.bf16.msra.mxu0 0
      %2288 = vmatprep.subr.bf16.mxu0 0
      %2289 = vmatpush1.bf16.msra.mxu0 0
      %2290 = vmatprep.subr.bf16.mxu0 0
      %2291 = vmatpush1.bf16.msra.mxu0 0
      %2292 = vmatprep.subr.bf16.mxu0 0
      %2293 = vmatpush1.bf16.msra.mxu0 0
      %2294 = vmatprep.mubr.bf16.mxu0 0
      %2295 = vmatmul.mubr.bf16.gmra.mrb[0].mxu0 %v2251
      %v2296 = vpop.f32.mrb[0].mxu0
      %v2297 = vadd.f32 %v2237, %v2296
      %v2298 = vpop.f32.mrb[0].mxu0
      %v2299 = vpop.f32.mrb[0].mxu0
      %v2300 = vadd.f32 %v2237, %v2299
      %v2301 = vpop.f32.mrb[0].mxu0
      %2302 = vmatprep.mubr.bf16.mxu0 0
      %2303 = vmatmul.mubr.bf16.gmra.mrb[0].mxu0 %v2254
      %v2304 = vpop.f32.mrb[0].mxu0
      %v2305 = vadd.f32 %v2237, %v2304
      %v2306 = vpop.f32.mrb[0].mxu0
      %v2307 = vpop.f32.mrb[0].mxu0
      %v2308 = vadd.f32 %v2237, %v2307
      %v2309 = vpop.f32.mrb[0].mxu0
      %2310 = vmatprep.mubr.bf16.mxu0 0
      %2311 = vmatmul.mubr.bf16.gmra.mrb[0].mxu0 %v2257
      %v2312 = vpop.f32.mrb[0].mxu0
      %v2313 = vadd.f32 %v2237, %v2312
      %v2314 = vpop.f32.mrb[0].mxu0
      %v2315 = vpop.f32.mrb[0].mxu0
      %v2316 = vadd.f32 %v2237, %v2315
      %v2317 = vpop.f32.mrb[0].mxu0
      %2318 = vmatprep.mubr.bf16.mxu0 0
      %2319 = vmatmul.mubr.bf16.gmra.mrb[0].mxu0 %v2260
      %v2320 = vpop.f32.mrb[0].mxu0
      %v2321 = vadd.f32 %v2237, %v2320
      %v2322 = vpop.f32.mrb[0].mxu0
      %v2323 = vpop.f32.mrb[0].mxu0
      %v2324 = vadd.f32 %v2237, %v2323
      %v2325 = vpop.f32.mrb[0].mxu0
      %2326 = vdwg.mxu0
      %v2327 = vadd.f32 %v572, %v2297
      %v2328 = vadd.f32 %v577, %v2300
      %v2329 = vadd.f32 %v582, %v2305
      %v2330 = vadd.f32 %v587, %v2308
      %v2331 = vadd.f32 %v592, %v2313
      %v2332 = vadd.f32 %v597, %v2316
      %v2333 = vadd.f32 %v602, %v2321
      %v2334 = vadd.f32 %v607, %v2324
      %v2335 = vsel %vm701, %v2327, 0.0
      %2336 = vadd.xlane.f32.xlu0 %v2335
      %v2337 = vpop.xlane.xlu0 %2336
      %v2338 = vsel %vm701, %v2328, 0.0
      %2339 = vadd.xlane.f32.xlu0 %v2338
      %v2340 = vpop.xlane.xlu0 %2339
      %v2341 = vsel %vm701, %v2329, 0.0
      %2342 = vadd.xlane.f32.xlu0 %v2341
      %v2343 = vpop.xlane.xlu0 %2342
      %v2344 = vsel %vm701, %v2330, 0.0
      %2345 = vadd.xlane.f32.xlu0 %v2344
      %v2346 = vpop.xlane.xlu0 %2345
      %v2347 = vsel %vm701, %v2331, 0.0
      %2348 = vadd.xlane.f32.xlu0 %v2347
      %v2349 = vpop.xlane.xlu0 %2348
      %v2350 = vsel %vm701, %v2332, 0.0
      %2351 = vadd.xlane.f32.xlu0 %v2350
      %v2352 = vpop.xlane.xlu0 %2351
      %v2353 = vsel %vm701, %v2333, 0.0
      %2354 = vadd.xlane.f32.xlu0 %v2353
      %v2355 = vpop.xlane.xlu0 %2354
      %v2356 = vsel %vm701, %v2334, 0.0
      %2357 = vadd.xlane.f32.xlu0 %v2356
      %v2358 = vpop.xlane.xlu0 %2357
      %v2359 = vmul.f32 %v2337, %v726
      %v2360 = vmul.f32 %v2340, %v726
      %v2361 = vmul.f32 %v2343, %v726
      %v2362 = vmul.f32 %v2346, %v726
      %v2363 = vmul.f32 %v2349, %v726
      %v2364 = vmul.f32 %v2352, %v726
      %v2365 = vmul.f32 %v2355, %v726
      %v2366 = vmul.f32 %v2358, %v726
      %v2367 = vsub.f32 %v2327, %v2359
      %v2368 = vsub.f32 %v2328, %v2360
      %v2369 = vsub.f32 %v2329, %v2361
      %v2370 = vsub.f32 %v2330, %v2362
      %v2371 = vsub.f32 %v2331, %v2363
      %v2372 = vsub.f32 %v2332, %v2364
      %v2373 = vsub.f32 %v2333, %v2365
      %v2374 = vsub.f32 %v2334, %v2366
      %v2375 = vmul.f32 %v2367, %v2367
      %v2376 = vmul.f32 %v2368, %v2368
      %v2377 = vmul.f32 %v2369, %v2369
      %v2378 = vmul.f32 %v2370, %v2370
      %v2379 = vmul.f32 %v2371, %v2371
      %v2380 = vmul.f32 %v2372, %v2372
      %v2381 = vmul.f32 %v2373, %v2373
      %v2382 = vmul.f32 %v2374, %v2374
      %v2383 = vsel %vm701, %v2375, 0.0
      %2384 = vadd.xlane.f32.xlu0 %v2383
      %v2385 = vpop.xlane.xlu0 %2384
      %v2386 = vsel %vm701, %v2376, 0.0
      %2387 = vadd.xlane.f32.xlu0 %v2386
      %v2388 = vpop.xlane.xlu0 %2387
      %v2389 = vsel %vm701, %v2377, 0.0
      %2390 = vadd.xlane.f32.xlu0 %v2389
      %v2391 = vpop.xlane.xlu0 %2390
      %v2392 = vsel %vm701, %v2378, 0.0
      %2393 = vadd.xlane.f32.xlu0 %v2392
      %v2394 = vpop.xlane.xlu0 %2393
      %v2395 = vsel %vm701, %v2379, 0.0
      %2396 = vadd.xlane.f32.xlu0 %v2395
      %v2397 = vpop.xlane.xlu0 %2396
      %v2398 = vsel %vm701, %v2380, 0.0
      %2399 = vadd.xlane.f32.xlu0 %v2398
      %v2400 = vpop.xlane.xlu0 %2399
      %v2401 = vsel %vm701, %v2381, 0.0
      %2402 = vadd.xlane.f32.xlu0 %v2401
      %v2403 = vpop.xlane.xlu0 %2402
      %v2404 = vsel %vm701, %v2382, 0.0
      %2405 = vadd.xlane.f32.xlu0 %v2404
      %v2406 = vpop.xlane.xlu0 %2405
      %v2407 = vmul.f32 %v2385, %v726
      %v2408 = vmul.f32 %v2388, %v726
      %v2409 = vmul.f32 %v2391, %v726
      %v2410 = vmul.f32 %v2394, %v726
      %v2411 = vmul.f32 %v2397, %v726
      %v2412 = vmul.f32 %v2400, %v726
      %v2413 = vmul.f32 %v2403, %v726
      %v2414 = vmul.f32 %v2406, %v726
      %v2415 = vadd.f32 %v2407, 1e-05
      %v2416 = vadd.f32 %v2408, 1e-05
      %v2417 = vadd.f32 %v2409, 1e-05
      %v2418 = vadd.f32 %v2410, 1e-05
      %v2419 = vadd.f32 %v2411, 1e-05
      %v2420 = vadd.f32 %v2412, 1e-05
      %v2421 = vadd.f32 %v2413, 1e-05
      %v2422 = vadd.f32 %v2414, 1e-05
      %v2423 = vrsqrt.pop %v2415
      %v2424 = vrsqrt.pop %v2416
      %v2425 = vrsqrt.pop %v2417
      %v2426 = vrsqrt.pop %v2418
      %v2427 = vrsqrt.pop %v2419
      %v2428 = vrsqrt.pop %v2420
      %v2429 = vrsqrt.pop %v2421
      %v2430 = vrsqrt.pop %v2422
      %v2431 = vmul.f32 %v2367, %v2423
      %v2432 = vmul.f32 %v2368, %v2424
      %v2433 = vmul.f32 %v2369, %v2425
      %v2434 = vmul.f32 %v2370, %v2426
      %v2435 = vmul.f32 %v2371, %v2427
      %v2436 = vmul.f32 %v2372, %v2428
      %v2437 = vmul.f32 %v2373, %v2429
      %v2438 = vmul.f32 %v2374, %v2430
      %v2439 = vlaneseq
      %v2440 = vshrl.u32 %v2439, 7
      %v2441 = vsub.s32 0, %v2440
      %v2442 = vrot.slane %v697, %v2441
      %v2443 = vmul.f32 %v2431, %v2442
      %v2444 = vmul.f32 %v2432, %v2442
      %v2445 = vmul.f32 %v2433, %v2442
      %v2446 = vmul.f32 %v2434, %v2442
      %v2447 = vmul.f32 %v2435, %v2442
      %v2448 = vmul.f32 %v2436, %v2442
      %v2449 = vmul.f32 %v2437, %v2442
      %v2450 = vmul.f32 %v2438, %v2442
      %v2451 = vlaneseq
      %v2452 = vshrl.u32 %v2451, 7
      %v2453 = vsub.s32 0, %v2452
      %v2454 = vrot.slane %v698, %v2453
      %v2455 = vadd.f32 %v2443, %v2454
      %v2456 = vadd.f32 %v2444, %v2454
      %v2457 = vadd.f32 %v2445, %v2454
      %v2458 = vadd.f32 %v2446, %v2454
      %v2459 = vadd.f32 %v2447, %v2454
      %v2460 = vadd.f32 %v2448, %v2454
      %v2461 = vadd.f32 %v2449, %v2454
      %v2462 = vadd.f32 %v2450, %v2454
      %v2463 = vpack.c.bf16 %v2456, %v2455
      %v2464 = vpack.c.bf16 %v2458, %v2457
      %v2465 = vpack.c.bf16 %v2460, %v2459
      %v2466 = vpack.c.bf16 %v2462, %v2461
      %v2467 = vld [vmem:[%s5] sm:$0xf]
      %v2468 = vld [vmem:[%s5 + $0x4] sm:$0xf]
      %v2469 = vld [vmem:[%s5 + $0x8] sm:$0xf]
      %v2470 = vld [vmem:[%s5 + $0xc] sm:$0xf]
      %v2471 = vld [vmem:[%s8] sm:$0x1]
      %v2473 = vlaneseq
      %v2474 = vshrl.u32 %v2473, 7
      %v2475 = vsub.s32 0, %v2474
      %v2476 = vrot.slane %v2471, %v2475
      %v2482 = vunpack.c.l.b16 %v2467
      %v2483 = vunpack.c.l.b16 %v2468
      %v2484 = vunpack.c.l.b16 %v2469
      %v2485 = vunpack.c.l.b16 %v2470
      %v2486 = vpack.c.b16 %v2483, %v2482
      %v2487 = vpack.c.b16 %v2485, %v2484
      %v2491 = vsel %vm701, %v2463, 0
      %v2494 = vsel %vm701, %v2464, 0
      %v2497 = vsel %vm701, %v2465, 0
      %v2500 = vsel %vm701, %v2466, 0
      %2502 = vmatprep.subr.bf16.mxu0 0
      %2503 = vmatpush1.bf16.msra.mxu0 %v2486
      %2504 = vmatprep.subr.bf16.mxu0 0
      %2505 = vmatpush1.bf16.msra.mxu0 %v2487
      %2506 = vmatprep.subr.bf16.mxu0 0
      %2507 = vmatpush1.bf16.msra.mxu0 0
      %2508 = vmatprep.subr.bf16.mxu0 0
      %2509 = vmatpush1.bf16.msra.mxu0 0
      %2510 = vmatprep.subr.bf16.mxu0 0
      %2511 = vmatpush1.bf16.msra.mxu0 0
      %2512 = vmatprep.subr.bf16.mxu0 0
      %2513 = vmatpush1.bf16.msra.mxu0 0
      %2514 = vmatprep.subr.bf16.mxu0 0
      %2515 = vmatpush1.bf16.msra.mxu0 0
      %2516 = vmatprep.subr.bf16.mxu0 0
      %2517 = vmatpush1.bf16.msra.mxu0 0
      %2518 = vmatprep.subr.bf16.mxu0 0
      %2519 = vmatpush1.bf16.msra.mxu0 0
      %2520 = vmatprep.subr.bf16.mxu0 0
      %2521 = vmatpush1.bf16.msra.mxu0 0
      %2522 = vmatprep.subr.bf16.mxu0 0
      %2523 = vmatpush1.bf16.msra.mxu0 0
      %2524 = vmatprep.subr.bf16.mxu0 0
      %2525 = vmatpush1.bf16.msra.mxu0 0
      %2526 = vmatprep.subr.bf16.mxu0 0
      %2527 = vmatpush1.bf16.msra.mxu0 0
      %2528 = vmatprep.subr.bf16.mxu0 0
      %2529 = vmatpush1.bf16.msra.mxu0 0
      %2530 = vmatprep.subr.bf16.mxu0 0
      %2531 = vmatpush1.bf16.msra.mxu0 0
      %2532 = vmatprep.subr.bf16.mxu0 0
      %2533 = vmatpush1.bf16.msra.mxu0 0
      %2534 = vmatprep.mubr.bf16.mxu0 0
      %2535 = vmatmul.mubr.bf16.gmra.mrb[0].mxu0 %v2491
      %v2536 = vpop.f32.mrb[0].mxu0
      %v2537 = vadd.f32 %v2476, %v2536
      %v2538 = vpop.f32.mrb[0].mxu0
      %v2539 = vpop.f32.mrb[0].mxu0
      %v2540 = vadd.f32 %v2476, %v2539
      %v2541 = vpop.f32.mrb[0].mxu0
      %2542 = vmatprep.mubr.bf16.mxu0 0
      %2543 = vmatmul.mubr.bf16.gmra.mrb[0].mxu0 %v2494
      %v2544 = vpop.f32.mrb[0].mxu0
      %v2545 = vadd.f32 %v2476, %v2544
      %v2546 = vpop.f32.mrb[0].mxu0
      %v2547 = vpop.f32.mrb[0].mxu0
      %v2548 = vadd.f32 %v2476, %v2547
      %v2549 = vpop.f32.mrb[0].mxu0
      %2550 = vmatprep.mubr.bf16.mxu0 0
      %2551 = vmatmul.mubr.bf16.gmra.mrb[0].mxu0 %v2497
      %v2552 = vpop.f32.mrb[0].mxu0
      %v2553 = vadd.f32 %v2476, %v2552
      %v2554 = vpop.f32.mrb[0].mxu0
      %v2555 = vpop.f32.mrb[0].mxu0
      %v2556 = vadd.f32 %v2476, %v2555
      %v2557 = vpop.f32.mrb[0].mxu0
      %2558 = vmatprep.mubr.bf16.mxu0 0
      %2559 = vmatmul.mubr.bf16.gmra.mrb[0].mxu0 %v2500
      %v2560 = vpop.f32.mrb[0].mxu0
      %v2561 = vadd.f32 %v2476, %v2560
      %v2562 = vpop.f32.mrb[0].mxu0
      %v2563 = vpop.f32.mrb[0].mxu0
      %v2564 = vadd.f32 %v2476, %v2563
      %v2565 = vpop.f32.mrb[0].mxu0
      %2566 = vdwg.mxu0
      %v2567 = vmul.f32 %v2537, %v2537
      %v2568 = vmul.f32 %v2540, %v2540
      %v2569 = vmul.f32 %v2545, %v2545
      %v2570 = vmul.f32 %v2548, %v2548
      %v2571 = vmul.f32 %v2553, %v2553
      %v2572 = vmul.f32 %v2556, %v2556
      %v2573 = vmul.f32 %v2561, %v2561
      %v2574 = vmul.f32 %v2564, %v2564
      %v2575 = vmul.f32 %v2537, %v2567
      %v2576 = vmul.f32 %v2540, %v2568
      %v2577 = vmul.f32 %v2545, %v2569
      %v2578 = vmul.f32 %v2548, %v2570
      %v2579 = vmul.f32 %v2553, %v2571
      %v2580 = vmul.f32 %v2556, %v2572
      %v2581 = vmul.f32 %v2561, %v2573
      %v2582 = vmul.f32 %v2564, %v2574
      %v2583 = vmul.f32 %v2575, 0.044715
      %v2584 = vmul.f32 %v2576, 0.044715
      %v2585 = vmul.f32 %v2577, 0.044715
      %v2586 = vmul.f32 %v2578, 0.044715
      %v2587 = vmul.f32 %v2579, 0.044715
      %v2588 = vmul.f32 %v2580, 0.044715
      %v2589 = vmul.f32 %v2581, 0.044715
      %v2590 = vmul.f32 %v2582, 0.044715
      %v2591 = vadd.f32 %v2537, %v2583
      %v2592 = vadd.f32 %v2540, %v2584
      %v2593 = vadd.f32 %v2545, %v2585
      %v2594 = vadd.f32 %v2548, %v2586
      %v2595 = vadd.f32 %v2553, %v2587
      %v2596 = vadd.f32 %v2556, %v2588
      %v2597 = vadd.f32 %v2561, %v2589
      %v2598 = vadd.f32 %v2564, %v2590
      %v2599 = vmul.f32 %v2591, 0.7978846
      %v2600 = vmul.f32 %v2592, 0.7978846
      %v2601 = vmul.f32 %v2593, 0.7978846
      %v2602 = vmul.f32 %v2594, 0.7978846
      %v2603 = vmul.f32 %v2595, 0.7978846
      %v2604 = vmul.f32 %v2596, 0.7978846
      %v2605 = vmul.f32 %v2597, 0.7978846
      %v2606 = vmul.f32 %v2598, 0.7978846
      %v2607 = vtanh.pop %v2599
      %v2608 = vtanh.pop %v2600
      %v2609 = vtanh.pop %v2601
      %v2610 = vtanh.pop %v2602
      %v2611 = vtanh.pop %v2603
      %v2612 = vtanh.pop %v2604
      %v2613 = vtanh.pop %v2605
      %v2614 = vtanh.pop %v2606
      %v2615 = vadd.f32 %v2607, 1.0
      %v2616 = vadd.f32 %v2608, 1.0
      %v2617 = vadd.f32 %v2609, 1.0
      %v2618 = vadd.f32 %v2610, 1.0
      %v2619 = vadd.f32 %v2611, 1.0
      %v2620 = vadd.f32 %v2612, 1.0
      %v2621 = vadd.f32 %v2613, 1.0
      %v2622 = vadd.f32 %v2614, 1.0
      %v2623 = vmul.f32 %v2615, 0.5
      %v2624 = vmul.f32 %v2616, 0.5
      %v2625 = vmul.f32 %v2617, 0.5
      %v2626 = vmul.f32 %v2618, 0.5
      %v2627 = vmul.f32 %v2619, 0.5
      %v2628 = vmul.f32 %v2620, 0.5
      %v2629 = vmul.f32 %v2621, 0.5
      %v2630 = vmul.f32 %v2622, 0.5
      %v2631 = vmul.f32 %v2537, %v2623
      %v2632 = vmul.f32 %v2540, %v2624
      %v2633 = vmul.f32 %v2545, %v2625
      %v2634 = vmul.f32 %v2548, %v2626
      %v2635 = vmul.f32 %v2553, %v2627
      %v2636 = vmul.f32 %v2556, %v2628
      %v2637 = vmul.f32 %v2561, %v2629
      %v2638 = vmul.f32 %v2564, %v2630
      %v2639 = vpack.c.bf16 %v2632, %v2631
      %v2640 = vpack.c.bf16 %v2634, %v2633
      %v2641 = vpack.c.bf16 %v2636, %v2635
      %v2642 = vpack.c.bf16 %v2638, %v2637
      %v2643 = vld [vmem:[%s6] sm:$0xf]
      %v2644 = vld [vmem:[%s6 + $0x4] sm:$0xf]
      %v2645 = vld [vmem:[%s6 + $0x8] sm:$0xf]
      %v2646 = vld [vmem:[%s6 + $0xc] sm:$0xf]
      %v2647 = vld [vmem:[%s6 + $0x10] sm:$0xf]
      %v2648 = vld [vmem:[%s6 + $0x14] sm:$0xf]
      %v2649 = vld [vmem:[%s6 + $0x18] sm:$0xf]
      %v2650 = vld [vmem:[%s6 + $0x1c] sm:$0xf]
      %v2651 = vlaneseq
      %v2652 = vshrl.u32 %v2651, 7
      %v2653 = vsub.s32 0, %v2652
      %v2654 = vrot.slane %v700, %v2653
      %v2663 = vunpack.c.l.b16 %v2643
      %v2664 = vunpack.c.l.b16 %v2644
      %v2665 = vunpack.c.l.b16 %v2645
      %v2666 = vunpack.c.l.b16 %v2646
      %v2667 = vunpack.c.l.b16 %v2647
      %v2668 = vunpack.c.l.b16 %v2648
      %v2669 = vunpack.c.l.b16 %v2649
      %v2670 = vunpack.c.l.b16 %v2650
      %v2671 = vpack.c.b16 %v2664, %v2663
      %v2672 = vpack.c.b16 %v2666, %v2665
      %v2673 = vpack.c.b16 %v2668, %v2667
      %v2674 = vpack.c.b16 %v2670, %v2669
      %vm2679 = vcmask 523264
      %v2681 = vsel %vm2679, %v2639, 0
      %v2684 = vsel %vm2679, %v2640, 0
      %v2687 = vsel %vm2679, %v2641, 0
      %v2690 = vsel %vm2679, %v2642, 0
      %2692 = vmatprep.subr.bf16.mxu0 0
      %2693 = vmatpush1.bf16.msra.mxu0 %v2671
      %2694 = vmatprep.subr.bf16.mxu0 0
      %2695 = vmatpush1.bf16.msra.mxu0 %v2672
      %2696 = vmatprep.subr.bf16.mxu0 0
      %2697 = vmatpush1.bf16.msra.mxu0 %v2673
      %2698 = vmatprep.subr.bf16.mxu0 0
      %2699 = vmatpush1.bf16.msra.mxu0 %v2674
      %2700 = vmatprep.subr.bf16.mxu0 0
      %2701 = vmatpush1.bf16.msra.mxu0 0
      %2702 = vmatprep.subr.bf16.mxu0 0
      %2703 = vmatpush1.bf16.msra.mxu0 0
      %2704 = vmatprep.subr.bf16.mxu0 0
      %2705 = vmatpush1.bf16.msra.mxu0 0
      %2706 = vmatprep.subr.bf16.mxu0 0
      %2707 = vmatpush1.bf16.msra.mxu0 0
      %2708 = vmatprep.subr.bf16.mxu0 0
      %2709 = vmatpush1.bf16.msra.mxu0 0
      %2710 = vmatprep.subr.bf16.mxu0 0
      %2711 = vmatpush1.bf16.msra.mxu0 0
      %2712 = vmatprep.subr.bf16.mxu0 0
      %2713 = vmatpush1.bf16.msra.mxu0 0
      %2714 = vmatprep.subr.bf16.mxu0 0
      %2715 = vmatpush1.bf16.msra.mxu0 0
      %2716 = vmatprep.subr.bf16.mxu0 0
      %2717 = vmatpush1.bf16.msra.mxu0 0
      %2718 = vmatprep.subr.bf16.mxu0 0
      %2719 = vmatpush1.bf16.msra.mxu0 0
      %2720 = vmatprep.subr.bf16.mxu0 0
      %2721 = vmatpush1.bf16.msra.mxu0 0
      %2722 = vmatprep.subr.bf16.mxu0 0
      %2723 = vmatpush1.bf16.msra.mxu0 0
      %2724 = vmatprep.mubr.bf16.mxu0 0
      %2725 = vmatmul.mubr.bf16.gmra.mrb[0].mxu0 %v2681
      %v2726 = vpop.f32.mrb[0].mxu0
      %v2727 = vadd.f32 %v2654, %v2726
      %v2728 = vpop.f32.mrb[0].mxu0
      %v2729 = vpop.f32.mrb[0].mxu0
      %v2730 = vadd.f32 %v2654, %v2729
      %v2731 = vpop.f32.mrb[0].mxu0
      %2732 = vmatprep.mubr.bf16.mxu0 0
      %2733 = vmatmul.mubr.bf16.gmra.mrb[0].mxu0 %v2684
      %v2734 = vpop.f32.mrb[0].mxu0
      %v2735 = vadd.f32 %v2654, %v2734
      %v2736 = vpop.f32.mrb[0].mxu0
      %v2737 = vpop.f32.mrb[0].mxu0
      %v2738 = vadd.f32 %v2654, %v2737
      %v2739 = vpop.f32.mrb[0].mxu0
      %2740 = vmatprep.mubr.bf16.mxu0 0
      %2741 = vmatmul.mubr.bf16.gmra.mrb[0].mxu0 %v2687
      %v2742 = vpop.f32.mrb[0].mxu0
      %v2743 = vadd.f32 %v2654, %v2742
      %v2744 = vpop.f32.mrb[0].mxu0
      %v2745 = vpop.f32.mrb[0].mxu0
      %v2746 = vadd.f32 %v2654, %v2745
      %v2747 = vpop.f32.mrb[0].mxu0
      %2748 = vmatprep.mubr.bf16.mxu0 0
      %2749 = vmatmul.mubr.bf16.gmra.mrb[0].mxu0 %v2690
      %v2750 = vpop.f32.mrb[0].mxu0
      %v2751 = vadd.f32 %v2654, %v2750
      %v2752 = vpop.f32.mrb[0].mxu0
      %v2753 = vpop.f32.mrb[0].mxu0
      %v2754 = vadd.f32 %v2654, %v2753
      %v2755 = vpop.f32.mrb[0].mxu0
      %2756 = vdwg.mxu0
      %v2757 = vadd.f32 %v2327, %v2727
      %v2758 = vadd.f32 %v2328, %v2730
      %v2759 = vadd.f32 %v2329, %v2735
      %v2760 = vadd.f32 %v2330, %v2738
      %v2761 = vadd.f32 %v2331, %v2743
      %v2762 = vadd.f32 %v2332, %v2746
      %v2763 = vadd.f32 %v2333, %v2751
      %v2764 = vadd.f32 %v2334, %v2754
      %v2765 = vadd.f32 %v453, %v455
      %v2766 = vadd.f32 %v2765, %v457
      %v2767 = vadd.f32 %v2766, %v459
      %v2768 = vadd.f32 %v2767, %v461
      %v2769 = vadd.f32 %v2768, %v463
      %v2770 = vadd.f32 %v2769, %v465
      %v2771 = vadd.f32 %v2770, %v467
      %v2772 = vrot.slane %v2771, 4
      %v2773 = vadd.f32 %v2771, %v2772
      %v2774 = vrot.slane %v2773, 2
      %v2775 = vadd.f32 %v2773, %v2774
      %v2776 = vrot.slane %v2775, 1
      %v2777 = vadd.f32 %v2775, %v2776
      %v2778 = vadd.f32 %v454, %v456
      %v2779 = vadd.f32 %v2778, %v458
      %v2780 = vadd.f32 %v2779, %v460
      %v2781 = vadd.f32 %v2780, %v462
      %v2782 = vadd.f32 %v2781, %v464
      %v2783 = vadd.f32 %v2782, %v466
      %v2784 = vadd.f32 %v2783, %v468
      %v2785 = vrot.slane %v2784, 4
      %v2786 = vadd.f32 %v2784, %v2785
      %v2787 = vrot.slane %v2786, 2
      %v2788 = vadd.f32 %v2786, %v2787
      %v2789 = vrot.slane %v2788, 1
      %v2790 = vadd.f32 %v2788, %v2789
      %2791 = vxpose.xlu0.b32.start [1/16] %v2757, 128
      %2792 = vxpose.xlu0.b32.cont [2/16] %v2758, 128
      %2793 = vxpose.xlu0.b32.cont [3/16] %v2759, 128
      %2794 = vxpose.xlu0.b32.cont [4/16] %v2760, 128
      %2795 = vxpose.xlu0.b32.cont [5/16] %v2761, 128
      %2796 = vxpose.xlu0.b32.cont [6/16] %v2762, 128
      %2797 = vxpose.xlu0.b32.cont [7/16] %v2763, 128
      %2798 = vxpose.xlu0.b32.cont [8/16] %v2764, 128
      %2799 = vxpose.xlu0.b32.cont [9/16] 0.0, 128
      %2800 = vxpose.xlu0.b32.cont [10/16] 0.0, 128
      %2801 = vxpose.xlu0.b32.cont [11/16] 0.0, 128
      %2802 = vxpose.xlu0.b32.cont [12/16] 0.0, 128
      %2803 = vxpose.xlu0.b32.cont [13/16] 0.0, 128
      %2804 = vxpose.xlu0.b32.cont [14/16] 0.0, 128
      %2805 = vxpose.xlu0.b32.cont [15/16] 0.0, 128
      %2806 = vxpose.xlu0.b32.end [16/16] 0.0, 128
      %v2807 = vpop.trf.xlu0
      %v2808 = vpop.trf.xlu0
      %v2809 = vpop.trf.xlu0
      %v2810 = vpop.trf.xlu0
      %v2811 = vpop.trf.xlu0
      %v2812 = vpop.trf.xlu0
      %v2813 = vpop.trf.xlu0
      %v2814 = vpop.trf.xlu0
      %v2815 = vpop.trf.xlu0
      %v2816 = vpop.trf.xlu0
      %v2817 = vpop.trf.xlu0
      %v2818 = vpop.trf.xlu0
      %v2819 = vpop.trf.xlu0
      %v2820 = vpop.trf.xlu0
      %v2821 = vpop.trf.xlu0
      %v2822 = vpop.trf.xlu0
      %v2824 = vsel %vm2679, %v2807, 0
      %v2827 = vsel %vm2679, %v2808, 0
      %v2830 = vsel %vm2679, %v2809, 0
      %v2833 = vsel %vm2679, %v2810, 0
      %2835 = vmatprep.subr.mxu0 %v454
      %2836 = vmatpush1.msra.mxu0 %v453
      %2837 = vmatprep.subr.mxu0 %v456
      %2838 = vmatpush1.msra.mxu0 %v455
      %2839 = vmatprep.subr.mxu0 %v458
      %2840 = vmatpush1.msra.mxu0 %v457
      %2841 = vmatprep.subr.mxu0 %v460
      %2842 = vmatpush1.msra.mxu0 %v459
      %2843 = vmatprep.subr.mxu0 %v462
      %2844 = vmatpush1.msra.mxu0 %v461
      %2845 = vmatprep.subr.mxu0 %v464
      %2846 = vmatpush1.msra.mxu0 %v463
      %2847 = vmatprep.subr.mxu0 %v466
      %2848 = vmatpush1.msra.mxu0 %v465
      %2849 = vmatprep.subr.mxu0 %v468
      %2850 = vmatpush1.msra.mxu0 %v467
      %2851 = vmatprep.subr.mxu0 0.0
      %2852 = vmatpush1.msra.mxu0 0.0
      %2853 = vmatprep.subr.mxu0 0.0
      %2854 = vmatpush1.msra.mxu0 0.0
      %2855 = vmatprep.subr.mxu0 0.0
      %2856 = vmatpush1.msra.mxu0 0.0
      %2857 = vmatprep.subr.mxu0 0.0
      %2858 = vmatpush1.msra.mxu0 0.0
      %2859 = vmatprep.subr.mxu0 0.0
      %2860 = vmatpush1.msra.mxu0 0.0
      %2861 = vmatprep.subr.mxu0 0.0
      %2862 = vmatpush1.msra.mxu0 0.0
      %2863 = vmatprep.subr.mxu0 0.0
      %2864 = vmatpush1.msra.mxu0 0.0
      %2865 = vmatprep.subr.mxu0 0.0
      %2866 = vmatpush1.msra.mxu0 0.0
      %2867 = vmatprep.subr.mxu0 0.0
      %2868 = vmatpush1.msra.mxu0 0.0
      %2869 = vmatprep.subr.mxu0 0.0
      %2870 = vmatpush1.msra.mxu0 0.0
      %2871 = vmatprep.subr.mxu0 0.0
      %2872 = vmatpush1.msra.mxu0 0.0
      %2873 = vmatprep.subr.mxu0 0.0
      %2874 = vmatpush1.msra.mxu0 0.0
      %2875 = vmatprep.subr.mxu0 0.0
      %2876 = vmatpush1.msra.mxu0 0.0
      %2877 = vmatprep.subr.mxu0 0.0
      %2878 = vmatpush1.msra.mxu0 0.0
      %2879 = vmatprep.subr.mxu0 0.0
      %2880 = vmatpush1.msra.mxu0 0.0
      %2881 = vmatprep.subr.mxu0 0.0
      %2882 = vmatpush1.msra.mxu0 0.0
      %2883 = vmatprep.subr.mxu0 0.0
      %2884 = vmatpush1.msra.mxu0 0.0
      %2885 = vmatprep.subr.mxu0 0.0
      %2886 = vmatpush1.msra.mxu0 0.0
      %2887 = vmatprep.subr.mxu0 0.0
      %2888 = vmatpush1.msra.mxu0 0.0
      %2889 = vmatprep.subr.mxu0 0.0
      %2890 = vmatpush1.msra.mxu0 0.0
      %2891 = vmatprep.subr.mxu0 0.0
      %2892 = vmatpush1.msra.mxu0 0.0
      %2893 = vmatprep.subr.mxu0 0.0
      %2894 = vmatpush1.msra.mxu0 0.0
      %2895 = vmatprep.subr.mxu0 0.0
      %2896 = vmatpush1.msra.mxu0 0.0
      %2897 = vmatprep.subr.mxu0 0.0
      %2898 = vmatpush1.msra.mxu0 0.0
      %2899 = vmatprep.mubr.f32.mxu0 0.0
      %2900 = vmatmul.mubr.f32.gmra.mrb[0].mxu0 %v2824
      %v2901 = vpop.f32.mrb[0].mxu0
      %v2902 = vadd.f32 0.0, %v2901
      %v2903 = vpop.f32.mrb[0].mxu0
      %v2904 = vadd.f32 0.0, %v2903
      %2905 = vmatprep.mubr.f32.mxu0 0.0
      %2906 = vmatmul.mubr.f32.gmra.mrb[0].mxu0 %v2827
      %v2907 = vpop.f32.mrb[0].mxu0
      %v2908 = vadd.f32 0.0, %v2907
      %v2909 = vpop.f32.mrb[0].mxu0
      %v2910 = vadd.f32 0.0, %v2909
      %2911 = vmatprep.mubr.f32.mxu0 0.0
      %2912 = vmatmul.mubr.f32.gmra.mrb[0].mxu0 %v2830
      %v2913 = vpop.f32.mrb[0].mxu0
      %v2914 = vadd.f32 0.0, %v2913
      %v2915 = vpop.f32.mrb[0].mxu0
      %v2916 = vadd.f32 0.0, %v2915
      %2917 = vmatprep.mubr.f32.mxu0 0.0
      %2918 = vmatmul.mubr.f32.gmra.mrb[0].mxu0 %v2833
      %v2919 = vpop.f32.mrb[0].mxu0
      %v2920 = vadd.f32 0.0, %v2919
      %v2921 = vpop.f32.mrb[0].mxu0
      %v2922 = vadd.f32 0.0, %v2921
      %2923 = vdwg.mxu0
      %v2924 = vsub.f32 1.0, %v2777
      %v2925 = vsub.f32 1.0, %v2790
      %v2926 = vmul.f32 %v374, %v2924
      %v2927 = vmul.f32 %v375, %v2925
      %v2928 = vmul.f32 %v376, %v2924
      %v2929 = vmul.f32 %v377, %v2925
      %v2930 = vmul.f32 %v378, %v2924
      %v2931 = vmul.f32 %v379, %v2925
      %v2932 = vmul.f32 %v380, %v2924
      %v2933 = vmul.f32 %v381, %v2925
      %v2934 = vadd.f32 %v2926, %v2902
      %v2935 = vadd.f32 %v2927, %v2904
      %v2936 = vadd.f32 %v2928, %v2908
      %v2937 = vadd.f32 %v2929, %v2910
      %v2938 = vadd.f32 %v2930, %v2914
      %v2939 = vadd.f32 %v2931, %v2916
      %v2940 = vadd.f32 %v2932, %v2920
      %v2941 = vadd.f32 %v2933, %v2922
      %2942 = vst [vmem:[%s372] sm:$0xff] %v2934
      %2943 = vst [vmem:[%s372 + $0x8] sm:$0xff] %v2935
      %2944 = vst [vmem:[%s372 + $0x10] sm:$0xff] %v2936
      %2945 = vst [vmem:[%s372 + $0x18] sm:$0xff] %v2937
      %2946 = vst [vmem:[%s372 + $0x20] sm:$0xff] %v2938
      %2947 = vst [vmem:[%s372 + $0x28] sm:$0xff] %v2939
      %2948 = vst [vmem:[%s372 + $0x30] sm:$0xff] %v2940
      %2949 = vst [vmem:[%s372 + $0x38] sm:$0xff] %v2941
      %p2950 = scmp.lt.s32.totalorder %s20, 1
      %s2951 = scalar_select %p2950, %s20, 1
      %s2952 = smul.addr %s2951, 8
      %s2953 = smul.addr %s2952, 8
      %s2954 = scalar_lea.vmem %s9, %s2953
      // Predicated region
      $region57: #{region_point_process.3} parent=55 // pred_check
        %p2955 = pneg %p242
      $region58: #{region_point_process.3} parent=55 // pred_check_branch
        %2957 = sbr.rel (%p2955) target = $region60
      $region59: #{region_point_process.3} parent=55 // pred_region
        _
      $region60: #{region_point_process.3} parent=55 // pred_fallthru
        _
    $region56: #{region_point_process.3} parent=5 // pred_fallthru
      _
    %p2958 = scmp.le.s32.totalorder 2, %s15
    // Predicated region
    $region61: #{region_point_process.3} parent=5 // pred_check
      %p2959 = pneg %p2958
    $region62: #{region_point_process.3} parent=5 // pred_check_branch
      %2961 = sbr.rel (%p2959) target = $region64
    $region63: #{region_point_process.3} parent=5 // pred_region
      %s2962 = ssub.s32 %s15, 2
      // Predicated region
      $region65: #{region_point_process.3} parent=63 // pred_check
        %p2963 = pneg %p248
      $region66: #{region_point_process.3} parent=63 // pred_check_branch
        %2965 = sbr.rel (%p2963) target = $region68
      $region67: #{region_point_process.3} parent=63 // pred_region
        %p2966 = scmp.lt.s32.totalorder %s21, 1
        %s2967 = scalar_select %p2966, %s21, 1
        %s2968 = smul.addr %s2967, 8
        %s2969 = smul.addr %s2968, 8
        %s2970 = scalar_lea.vmem %s9, %s2969
      $region68: #{region_point_process.3} parent=63 // pred_fallthru
        _
    $region64: #{region_point_process.3} parent=5 // pred_fallthru
      _
  $region6: #{region_point_process.3} parent=0 // loop_footer
    %s19 = sadd.s32 1, %s15
  $region7: #{region_point_process.3} parent=0 // loop_footer_branch
    %14 = sbr.rel target = $region3
  $region8: #{region_point_process.3} parent=0 // loop_exit
    _

</llo_original>
